<compile_context>
chip_gen: v6e
topology: v6e:2x2x1
jax: 0.10.0
libtpu: 0.0.40
codegen_flags: <defaults>
</compile_context>

<pallas_src>
import jax
import jax.numpy as jnp
import numpy as np
from jax.experimental import pallas as pl
from jax.experimental.pallas import tpu as pltpu


def prefrgcn_kernel(node_emb_ref, rel_mats_ref, tgt_ref, slab_ref,
                    w3_ref, gate_ref, adjcat_ref, wcat_ref, wre_ref,
                    out_ref, yw_ref, ycat_ref):
    f32, bf16 = jnp.float32, jnp.bfloat16
    A, B, E = node_emb_ref.shape          # attributes, batch, emb_dim
    L, H, RH = wcat_ref.shape             # layers, hidden, (R+1)*hidden
    M, H3 = gate_ref.shape                # bs*node_num, 3*hidden
    N = M // B
    R1 = RH // H                          # num_relations + 1 (root block first)
    o = 2 * A                             # first parameter row in the packed slab

    # --- rel_proj (Linear(E,1), gq_dec_type=='bilinear') applied to each relation matrix ---
    w_rel = slab_ref[o:o + 1, 0:E]                          # [1, E]
    b_rel = slab_ref[o + 1:o + 2, 0:E]                      # [1, E]  (scalar replicated)
    rel_vec = jnp.sum(rel_mats_ref[...] * w_rel[None, :, :], axis=-1) + b_rel      # [A, E]

    # --- mix relation / node embeddings per node (row m = b*N + n) ---
    rel_pos = slab_ref[0:A, 0:N]                            # formula.rel_pos
    pn_pos = slab_ref[A:2 * A, 0:N]                         # vec_p_pos + vec_n_pos
    node_emb = node_emb_ref[...]                            # [A, B, E]
    emb_rel = jnp.zeros((N, E), f32)
    emb_node = jnp.zeros((B, N, E), f32)
    for a in range(A):                                      # A is tiny & static
        emb_rel = emb_rel + rel_pos[a][:, None] * rel_vec[a][None, :]
        emb_node = emb_node + node_emb[a][:, None, :] * pn_pos[a][None, :, None]
    emb_flat = (emb_node + emb_rel[None, :, :]).reshape(M, E)                      # [M, E]

    # --- fused positive/negative/other projections: one [E,3H] bf16 matmul + gating ---
    b3 = slab_ref[o + 2:o + 3, 0:H3]                        # [1, 3H]
    p = jnp.dot(emb_flat.astype(bf16), w3_ref[...], preferred_element_type=f32)    # [M, 3H]
    yw_ref[:, 0:H3] = (p + b3) * gate_ref[...]
    x = yw_ref[:, 0:H] + yw_ref[:, H:2 * H] + yw_ref[:, 2 * H:3 * H]               # [M, H]

    # --- conv1 -> relu -> conv2 -> relu -> conv3 : 2 wide bf16 MXU matmuls per layer ---
    adj_cat = adjcat_ref[...]                               # [M, (R+1)*M]  [I | A_1 | ... ]
    for layer in range(L):
        yw_ref[:, 0:RH] = jnp.dot(x.astype(bf16), wcat_ref[layer],
                                  preferred_element_type=f32)                      # [M,(R+1)H]
        for r in range(R1):   # repack [M,(R+1)H] -> [(R+1)M, H] via static VMEM slices
            ycat_ref[r * M:(r + 1) * M, :] = yw_ref[:, r * H:(r + 1) * H].astype(bf16)
        h = jnp.dot(adj_cat, ycat_ref[...], preferred_element_type=f32)            # [M, H]
        h = h + slab_ref[o + 4 + layer:o + 5 + layer, 0:H]
        x = h if layer == L - 1 else jnp.maximum(h, 0.0)

    # --- global_add_pool as a sublane reduction + reproj + dot-product score ---
    pooled = jnp.sum(x.reshape(B, N, H), axis=1)                                    # [B, H]
    z = jnp.dot(pooled.astype(bf16), wre_ref[...], preferred_element_type=f32) \
        + slab_ref[o + 3:o + 4, 0:E]                                                # [B, E]
    out_ref[...] = jnp.sum(z * tgt_ref[...], axis=-1, keepdims=True)                # [B, 1]


@jax.jit
def pref_rgcn_forward(node_emb, rel_mats, targets_emb, rel_pos, pn_pos, pos3,
                      w_rel, b_rel, w_proj, b_proj, adj,
                      w_conv, w_root, b_conv, w_re, b_re):
    f32, bf16 = jnp.float32, jnp.bfloat16
    A, B, E = node_emb.shape
    N = rel_pos.shape[1]
    L, R, H, _ = w_conv.shape
    M = B * N

    # ---- plain-JAX glue: pack / fuse operands for the kernel (layout only, no module math) ----
    w3 = jnp.concatenate([w_proj[0], w_proj[1], w_proj[2]], axis=1)              # [E, 3H]
    gate = jnp.tile(jnp.repeat(pos3.T, H, axis=1), (B, 1))                       # [M, 3H]
    wcat = jnp.concatenate([w_root[:, None], w_conv], axis=1)                    # [L, R+1, H, H]
    wcat = wcat.transpose(0, 2, 1, 3).reshape(L, H, (R + 1) * H)                 # root block first
    adj_cat = jnp.concatenate([jnp.eye(M, dtype=f32)[None], adj], axis=0)        # [R+1, M, M]
    adj_cat = adj_cat.transpose(1, 0, 2).reshape(M, (R + 1) * M)                 # [M, (R+1)M]

    o = 2 * A                      # slab layout: rel_pos | pn_pos | w_rel | b_rel | b3 | b_re | b_conv
    slab = jnp.zeros((16, 128), f32)
    slab = slab.at[0:A, 0:N].set(rel_pos)
    slab = slab.at[A:2 * A, 0:N].set(pn_pos)
    slab = slab.at[o, 0:E].set(w_rel[0])
    slab = slab.at[o + 1, 0:E].set(jnp.full((E,), b_rel[0, 0], f32))
    slab = slab.at[o + 2, 0:3 * H].set(b_proj.reshape(-1))
    slab = slab.at[o + 3, 0:E].set(b_re[0])
    slab = slab.at[o + 4:o + 4 + L, 0:H].set(b_conv)

    vmem = lambda: pl.BlockSpec(memory_space=pltpu.MemorySpace.VMEM)
    out = pl.pallas_call(
        prefrgcn_kernel,
        out_shape=jax.ShapeDtypeStruct((B, 1), f32),
        in_specs=[vmem() for _ in range(9)],
        out_specs=vmem(),
        scratch_shapes=[
            pltpu.VMEM((M, max(3, R + 1) * H), f32),     # wide matmul outputs (reused)
            pltpu.VMEM(((R + 1) * M, H), bf16),          # repacked per-relation features
        ],
    )(node_emb, rel_mats, targets_emb, slab,
      w3.astype(bf16), gate, adj_cat.astype(bf16),
      wcat.astype(bf16), w_re.astype(bf16))
    return out[:, 0]


def reference_forward(node_emb, rel_mats, targets_emb, rel_pos, pn_pos, pos3,
                      w_rel, b_rel, w_proj, b_proj, adj,
                      w_conv, w_root, b_conv, w_re, b_re):
    A, B, E = node_emb.shape
    N = rel_pos.shape[1]
    H = w_proj.shape[2]
    R, M, _ = adj.shape
    rel_vec = jnp.einsum('aij,j->ai', rel_mats, w_rel[0]) + b_rel[0, 0]
    emb = (jnp.einsum('an,ae->ne', rel_pos, rel_vec)[None]
           + jnp.einsum('an,abe->bne', pn_pos, node_emb))                 # [B, N, E]
    x = jnp.zeros((B, N, H), jnp.float32)
    for k in range(3):
        p = jnp.einsum('bne,eh->bnh', emb, w_proj[k]) + b_proj[k]
        x = x + p * pos3[k][None, :, None]
    x = x.reshape(M, H)
    for layer in range(3):
        h = x @ w_root[layer] + b_conv[layer]
        for r in range(R):
            h = h + adj[r] @ (x @ w_conv[layer, r])
        x = h if layer == 2 else jnp.maximum(h, 0.0)
    pooled = x.reshape(B, N, H).sum(axis=1)                               # global_add_pool
    z = pooled @ w_re + b_re
    return jnp.sum(z * targets_emb, axis=-1)


if __name__ == "__main__":
    key = jax.random.PRNGKey(0)
    A, N, B, E, H = 2, 8, 8, 32, 32      # attributes, node_num, batch, emb_dim, hidden
    R, NB = 5, 4                          # num_relations, num_bases
    M = N * B
    ks = jax.random.split(key, 20)

    # --- graph structure (edge_index / edge_type), batch-major node ids b*N + n ---
    src, dst, etype = [], [], []
    for b in range(B):
        base = b * N
        for n in range(N - 1):
            src += [base + n, base + n + 1]
            dst += [base + n + 1, base + n]
            etype += [n % R, (n + 2) % R]
    edge_index = jnp.array([src, dst], dtype=jnp.int32)
    edge_type = jnp.array(etype, dtype=jnp.int32)

    # dense normalised adjacency per relation (RGCNConv aggr='mean'), glue only
    cnt = jnp.zeros((R, M, M), jnp.float32).at[edge_type, edge_index[1], edge_index[0]].add(1.0)
    deg = cnt.sum(axis=-1, keepdims=True)
    adj = jnp.where(deg > 0, cnt / jnp.maximum(deg, 1.0), 0.0)

    # --- formula position masks ---
    rel_pos = jax.random.bernoulli(ks[0], 0.5, (A, N)).astype(jnp.float32)
    vec_p_pos = jax.random.bernoulli(ks[1], 0.5, (A, N)).astype(jnp.float32)
    vec_n_pos = jax.random.bernoulli(ks[2], 0.5, (A, N)).astype(jnp.float32)
    pn_pos = vec_p_pos + vec_n_pos
    p_pos = jax.random.bernoulli(ks[3], 0.5, (N,)).astype(jnp.float32)
    n_pos = jax.random.bernoulli(ks[4], 0.5, (N,)).astype(jnp.float32)
    vec_e_pos = jax.random.bernoulli(ks[5], 0.5, (N,)).astype(jnp.float32)
    pos3 = jnp.stack([p_pos, n_pos, vec_e_pos], axis=0)

    # --- synthetic encoder outputs (gq_model.enc / path_dec.mats) ---
    node_emb = 0.5 * jax.random.normal(ks[6], (A, B, E), jnp.float32)
    targets_emb = 0.5 * jax.random.normal(ks[7], (B, E), jnp.float32)
    rel_mats = 0.5 * jax.random.normal(ks[8], (A, E, E), jnp.float32)

    # --- deterministic parameter init ---
    def lin(k, out_dim, in_dim):
        kw, kb = jax.random.split(k)
        w = jax.random.normal(kw, (out_dim, in_dim), jnp.float32) / np.sqrt(in_dim)
        b = 0.01 * jax.random.normal(kb, (out_dim,), jnp.float32)
        return w, b

    w_rel_, b_rel_ = lin(ks[9], 1, E)                             # rel_proj = Linear(E, 1)
    w_rel, b_rel = w_rel_, b_rel_.reshape(1, 1)
    wp, bp = lin(ks[10], H, E)
    wn, bn = lin(ks[11], H, E)
    wo, bo = lin(ks[12], H, E)
    w_proj = jnp.stack([wp.T, wn.T, wo.T])                        # [3, E, H] (pre-transposed)
    b_proj = jnp.stack([bp, bn, bo])                              # [3, H]

    w_conv_l, w_root_l, b_conv_l = [], [], []
    for li in range(3):                                           # conv1 / conv2 / conv3
        kb_, kc_, kr_, kbi_ = jax.random.split(ks[13 + li], 4)
        basis = jax.random.normal(kb_, (NB, H, H), jnp.float32) / np.sqrt(H)
        comp = jax.random.normal(kc_, (R, NB), jnp.float32) / np.sqrt(NB)
        w_conv_l.append(jnp.einsum('rb,bio->rio', comp, basis))   # basis decomposition
        w_root_l.append(jax.random.normal(kr_, (H, H), jnp.float32) / np.sqrt(H))
        b_conv_l.append(0.01 * jax.random.normal(kbi_, (H,), jnp.float32))
    w_conv = jnp.stack(w_conv_l)                                  # [3, R, H, H]
    w_root = jnp.stack(w_root_l)                                  # [3, H, H]
    b_conv = jnp.stack(b_conv_l)                                  # [3, H]

    w_re_, b_re_ = lin(ks[16], E, H)                              # reproj = Linear(H, E)
    w_re, b_re = w_re_.T, b_re_.reshape(1, E)                     # [H, E] (pre-transposed)

    args = (node_emb, rel_mats, targets_emb, rel_pos, pn_pos, pos3,
            w_rel, b_rel, w_proj, b_proj, adj,
            w_conv, w_root, b_conv, w_re, b_re)

    out = jax.block_until_ready(pref_rgcn_forward(*args))         # [B] scores
    ref = reference_forward(*args)

    err = float(jnp.max(jnp.abs(out - ref)))
    scale = float(jnp.max(jnp.abs(ref))) + 1e-6
    assert np.isfinite(np.asarray(out)).all(), "non-finite output"
    assert err <= 0.05 * scale, f"kernel/reference mismatch: err={err}, scale={scale}"
    print("KERNEL_OK")
</pallas_src>

<mosaic_0001>
module attributes {stable_mosaic.version = 11 : i64} {
  func.func @prefrgcn_kernel(%arg0: memref<2x8x32xf32, #tpu.memory_space<vmem>>, %arg1: memref<2x32x32xf32, #tpu.memory_space<vmem>>, %arg2: memref<8x32xf32, #tpu.memory_space<vmem>>, %arg3: memref<16x128xf32, #tpu.memory_space<vmem>>, %arg4: memref<32x96xbf16, #tpu.memory_space<vmem>>, %arg5: memref<64x96xf32, #tpu.memory_space<vmem>>, %arg6: memref<64x384xbf16, #tpu.memory_space<vmem>>, %arg7: memref<3x32x192xbf16, #tpu.memory_space<vmem>>, %arg8: memref<32x32xbf16, #tpu.memory_space<vmem>>, %arg9: memref<8x1xf32, #tpu.memory_space<vmem>>, %arg10: memref<64x192xf32, #tpu.memory_space<vmem>>, %arg11: memref<384x32xbf16, #tpu.memory_space<vmem>>) attributes {dimension_semantics = [], scalar_prefetch = 0 : i64, scratch_operands = 2 : i64, tpu.core_type = #tpu.core_type<tc>} {
    %c4 = arith.constant 4 : index
    %c0 = arith.constant 0 : index
    %0 = vector.load %arg3[%c4, %c0] : memref<16x128xf32, #tpu.memory_space<vmem>>, vector<1x32xf32>
    %c5 = arith.constant 5 : index
    %c0_0 = arith.constant 0 : index
    %1 = vector.load %arg3[%c5, %c0_0] : memref<16x128xf32, #tpu.memory_space<vmem>>, vector<1x32xf32>
    %c0_1 = arith.constant 0 : index
    %c0_2 = arith.constant 0 : index
    %c0_3 = arith.constant 0 : index
    %2 = vector.load %arg1[%c0_1, %c0_2, %c0_3] : memref<2x32x32xf32, #tpu.memory_space<vmem>>, vector<2x32x32xf32>
    %3 = vector.shape_cast %0 : vector<1x32xf32> to vector<1x1x32xf32>
    %4 = vector.broadcast %3 : vector<1x1x32xf32> to vector<2x32x32xf32>
    %5 = arith.mulf %2, %4 : vector<2x32x32xf32>
    %cst = arith.constant dense<0.000000e+00> : vector<2x32xf32>
    %6 = vector.multi_reduction <add>, %5, %cst [2] : vector<2x32x32xf32> to vector<2x32xf32>
    %7 = vector.broadcast %1 : vector<1x32xf32> to vector<2x32xf32>
    %8 = arith.addf %6, %7 : vector<2x32xf32>
    %c0_4 = arith.constant 0 : index
    %c0_5 = arith.constant 0 : index
    %9 = vector.load %arg3[%c0_4, %c0_5] : memref<16x128xf32, #tpu.memory_space<vmem>>, vector<2x8xf32>
    %c2 = arith.constant 2 : index
    %c0_6 = arith.constant 0 : index
    %10 = vector.load %arg3[%c2, %c0_6] : memref<16x128xf32, #tpu.memory_space<vmem>>, vector<2x8xf32>
    %c0_7 = arith.constant 0 : index
    %c0_8 = arith.constant 0 : index
    %c0_9 = arith.constant 0 : index
    %11 = vector.load %arg0[%c0_7, %c0_8, %c0_9] : memref<2x8x32xf32, #tpu.memory_space<vmem>>, vector<2x8x32xf32>
    %cst_10 = arith.constant 0.000000e+00 : f32
    %12 = vector.broadcast %cst_10 : f32 to vector<8x32xf32>
    %cst_11 = arith.constant 0.000000e+00 : f32
    %13 = vector.broadcast %cst_11 : f32 to vector<8x8x32xf32>
    %14 = vector.extract_strided_slice %9 {offsets = [0, 0], sizes = [1, 8], strides = [1, 1]} : vector<2x8xf32> to vector<1x8xf32>
    %15 = vector.shape_cast %14 : vector<1x8xf32> to vector<8xf32>
    %16 = vector.shape_cast %15 : vector<8xf32> to vector<8x1xf32>
    %17 = vector.extract_strided_slice %8 {offsets = [0, 0], sizes = [1, 32], strides = [1, 1]} : vector<2x32xf32> to vector<1x32xf32>
    %18 = vector.shape_cast %17 : vector<1x32xf32> to vector<32xf32>
    %19 = vector.shape_cast %18 : vector<32xf32> to vector<1x32xf32>
    %20 = vector.broadcast %16 : vector<8x1xf32> to vector<8x32xf32>
    %21 = vector.broadcast %19 : vector<1x32xf32> to vector<8x32xf32>
    %22 = arith.mulf %20, %21 : vector<8x32xf32>
    %23 = arith.addf %12, %22 : vector<8x32xf32>
    %24 = vector.extract_strided_slice %11 {offsets = [0, 0, 0], sizes = [1, 8, 32], strides = [1, 1, 1]} : vector<2x8x32xf32> to vector<1x8x32xf32>
    %25 = vector.shape_cast %24 : vector<1x8x32xf32> to vector<8x32xf32>
    %26 = vector.shape_cast %25 : vector<8x32xf32> to vector<8x1x32xf32>
    %27 = vector.extract_strided_slice %10 {offsets = [0, 0], sizes = [1, 8], strides = [1, 1]} : vector<2x8xf32> to vector<1x8xf32>
    %28 = vector.shape_cast %27 : vector<1x8xf32> to vector<8xf32>
    %29 = vector.shape_cast %28 : vector<8xf32> to vector<1x8x1xf32>
    %30 = vector.broadcast %26 : vector<8x1x32xf32> to vector<8x8x32xf32>
    %31 = vector.broadcast %29 : vector<1x8x1xf32> to vector<8x8x32xf32>
    %32 = arith.mulf %30, %31 : vector<8x8x32xf32>
    %33 = arith.addf %13, %32 : vector<8x8x32xf32>
    %34 = vector.extract_strided_slice %9 {offsets = [1, 0], sizes = [1, 8], strides = [1, 1]} : vector<2x8xf32> to vector<1x8xf32>
    %35 = vector.shape_cast %34 : vector<1x8xf32> to vector<8xf32>
    %36 = vector.shape_cast %35 : vector<8xf32> to vector<8x1xf32>
    %37 = vector.extract_strided_slice %8 {offsets = [1, 0], sizes = [1, 32], strides = [1, 1]} : vector<2x32xf32> to vector<1x32xf32>
    %38 = vector.shape_cast %37 : vector<1x32xf32> to vector<32xf32>
    %39 = vector.shape_cast %38 : vector<32xf32> to vector<1x32xf32>
    %40 = vector.broadcast %36 : vector<8x1xf32> to vector<8x32xf32>
    %41 = vector.broadcast %39 : vector<1x32xf32> to vector<8x32xf32>
    %42 = arith.mulf %40, %41 : vector<8x32xf32>
    %43 = arith.addf %23, %42 : vector<8x32xf32>
    %44 = vector.extract_strided_slice %11 {offsets = [1, 0, 0], sizes = [1, 8, 32], strides = [1, 1, 1]} : vector<2x8x32xf32> to vector<1x8x32xf32>
    %45 = vector.shape_cast %44 : vector<1x8x32xf32> to vector<8x32xf32>
    %46 = vector.shape_cast %45 : vector<8x32xf32> to vector<8x1x32xf32>
    %47 = vector.extract_strided_slice %10 {offsets = [1, 0], sizes = [1, 8], strides = [1, 1]} : vector<2x8xf32> to vector<1x8xf32>
    %48 = vector.shape_cast %47 : vector<1x8xf32> to vector<8xf32>
    %49 = vector.shape_cast %48 : vector<8xf32> to vector<1x8x1xf32>
    %50 = vector.broadcast %46 : vector<8x1x32xf32> to vector<8x8x32xf32>
    %51 = vector.broadcast %49 : vector<1x8x1xf32> to vector<8x8x32xf32>
    %52 = arith.mulf %50, %51 : vector<8x8x32xf32>
    %53 = arith.addf %33, %52 : vector<8x8x32xf32>
    %54 = vector.shape_cast %43 : vector<8x32xf32> to vector<1x8x32xf32>
    %55 = vector.broadcast %54 : vector<1x8x32xf32> to vector<8x8x32xf32>
    %56 = arith.addf %53, %55 : vector<8x8x32xf32>
    %57 = vector.shape_cast %56 : vector<8x8x32xf32> to vector<64x32xf32>
    %c6 = arith.constant 6 : index
    %c0_12 = arith.constant 0 : index
    %58 = vector.load %arg3[%c6, %c0_12] : memref<16x128xf32, #tpu.memory_space<vmem>>, vector<1x96xf32>
    %59 = arith.truncf %57 : vector<64x32xf32> to vector<64x32xbf16>
    %c0_13 = arith.constant 0 : index
    %c0_14 = arith.constant 0 : index
    %60 = vector.load %arg4[%c0_13, %c0_14] : memref<32x96xbf16, #tpu.memory_space<vmem>>, vector<32x96xbf16>
    %cst_15 = arith.constant dense<0.000000e+00> : vector<64x96xf32>
    %61 = tpu.matmul %59, %60, %cst_15 {dimension_numbers = #tpu.dot_dimension_numbers<[1], [0], [0], [1], [0, 0, 1, 1], [], []>} : vector<64x32xbf16>, vector<32x96xbf16>, vector<64x96xf32> -> vector<64x96xf32>
    %62 = vector.broadcast %58 : vector<1x96xf32> to vector<64x96xf32>
    %63 = arith.addf %61, %62 : vector<64x96xf32>
    %c0_16 = arith.constant 0 : index
    %c0_17 = arith.constant 0 : index
    %64 = vector.load %arg5[%c0_16, %c0_17] : memref<64x96xf32, #tpu.memory_space<vmem>>, vector<64x96xf32>
    %65 = arith.mulf %63, %64 : vector<64x96xf32>
    %c0_18 = arith.constant 0 : index
    %c0_19 = arith.constant 0 : index
    %66 = vector.load %arg10[%c0_18, %c0_19] : memref<64x192xf32, #tpu.memory_space<vmem>>, vector<64x96xf32>
    tpu.vector_store %arg10[%c0_18, %c0_19], %65 {strides = array<i32>} : memref<64x192xf32, #tpu.memory_space<vmem>>, vector<64x96xf32>,
    %c0_20 = arith.constant 0 : index
    %c0_21 = arith.constant 0 : index
    %67 = vector.load %arg10[%c0_20, %c0_21] : memref<64x192xf32, #tpu.memory_space<vmem>>, vector<64x32xf32>
    %c0_22 = arith.constant 0 : index
    %c32 = arith.constant 32 : index
    %68 = vector.load %arg10[%c0_22, %c32] : memref<64x192xf32, #tpu.memory_space<vmem>>, vector<64x32xf32>
    %69 = arith.addf %67, %68 : vector<64x32xf32>
    %c0_23 = arith.constant 0 : index
    %c64 = arith.constant 64 : index
    %70 = vector.load %arg10[%c0_23, %c64] : memref<64x192xf32, #tpu.memory_space<vmem>>, vector<64x32xf32>
    %71 = arith.addf %69, %70 : vector<64x32xf32>
    %c0_24 = arith.constant 0 : index
    %c0_25 = arith.constant 0 : index
    %72 = vector.load %arg6[%c0_24, %c0_25] : memref<64x384xbf16, #tpu.memory_space<vmem>>, vector<64x384xbf16>
    %73 = arith.truncf %71 : vector<64x32xf32> to vector<64x32xbf16>
    %c0_26 = arith.constant 0 : index
    %c0_27 = arith.constant 0 : index
    %c0_28 = arith.constant 0 : index
    %74 = vector.load %arg7[%c0_26, %c0_27, %c0_28] : memref<3x32x192xbf16, #tpu.memory_space<vmem>>, vector<1x32x192xbf16>
    %75 = vector.shape_cast %74 : vector<1x32x192xbf16> to vector<32x192xbf16>
    %cst_29 = arith.constant dense<0.000000e+00> : vector<64x192xf32>
    %76 = tpu.matmul %73, %75, %cst_29 {dimension_numbers = #tpu.dot_dimension_numbers<[1], [0], [0], [1], [0, 0, 1, 1], [], []>} : vector<64x32xbf16>, vector<32x192xbf16>, vector<64x192xf32> -> vector<64x192xf32>
    %c0_30 = arith.constant 0 : index
    %c0_31 = arith.constant 0 : index
    %77 = vector.load %arg10[%c0_30, %c0_31] : memref<64x192xf32, #tpu.memory_space<vmem>>, vector<64x192xf32>
    tpu.vector_store %arg10[%c0_30, %c0_31], %76 {strides = array<i32>} : memref<64x192xf32, #tpu.memory_space<vmem>>, vector<64x192xf32>,
    %c0_32 = arith.constant 0 : index
    %c0_33 = arith.constant 0 : index
    %78 = vector.load %arg10[%c0_32, %c0_33] : memref<64x192xf32, #tpu.memory_space<vmem>>, vector<64x32xf32>
    %79 = arith.truncf %78 : vector<64x32xf32> to vector<64x32xbf16>
    %c0_34 = arith.constant 0 : index
    %c0_35 = arith.constant 0 : index
    %80 = vector.load %arg11[%c0_34, %c0_35] : memref<384x32xbf16, #tpu.memory_space<vmem>>, vector<64x32xbf16>
    tpu.vector_store %arg11[%c0_34, %c0_35], %79 {strides = array<i32>} : memref<384x32xbf16, #tpu.memory_space<vmem>>, vector<64x32xbf16>,
    %c0_36 = arith.constant 0 : index
    %c32_37 = arith.constant 32 : index
    %81 = vector.load %arg10[%c0_36, %c32_37] : memref<64x192xf32, #tpu.memory_space<vmem>>, vector<64x32xf32>
    %82 = arith.truncf %81 : vector<64x32xf32> to vector<64x32xbf16>
    %c64_38 = arith.constant 64 : index
    %c0_39 = arith.constant 0 : index
    %83 = vector.load %arg11[%c64_38, %c0_39] : memref<384x32xbf16, #tpu.memory_space<vmem>>, vector<64x32xbf16>
    tpu.vector_store %arg11[%c64_38, %c0_39], %82 {strides = array<i32>} : memref<384x32xbf16, #tpu.memory_space<vmem>>, vector<64x32xbf16>,
    %c0_40 = arith.constant 0 : index
    %c64_41 = arith.constant 64 : index
    %84 = vector.load %arg10[%c0_40, %c64_41] : memref<64x192xf32, #tpu.memory_space<vmem>>, vector<64x32xf32>
    %85 = arith.truncf %84 : vector<64x32xf32> to vector<64x32xbf16>
    %c128 = arith.constant 128 : index
    %c0_42 = arith.constant 0 : index
    %86 = vector.load %arg11[%c128, %c0_42] : memref<384x32xbf16, #tpu.memory_space<vmem>>, vector<64x32xbf16>
    tpu.vector_store %arg11[%c128, %c0_42], %85 {strides = array<i32>} : memref<384x32xbf16, #tpu.memory_space<vmem>>, vector<64x32xbf16>,
    %c0_43 = arith.constant 0 : index
    %c96 = arith.constant 96 : index
    %87 = vector.load %arg10[%c0_43, %c96] : memref<64x192xf32, #tpu.memory_space<vmem>>, vector<64x32xf32>
    %88 = arith.truncf %87 : vector<64x32xf32> to vector<64x32xbf16>
    %c192 = arith.constant 192 : index
    %c0_44 = arith.constant 0 : index
    %89 = vector.load %arg11[%c192, %c0_44] : memref<384x32xbf16, #tpu.memory_space<vmem>>, vector<64x32xbf16>
    tpu.vector_store %arg11[%c192, %c0_44], %88 {strides = array<i32>} : memref<384x32xbf16, #tpu.memory_space<vmem>>, vector<64x32xbf16>,
    %c0_45 = arith.constant 0 : index
    %c128_46 = arith.constant 128 : index
    %90 = vector.load %arg10[%c0_45, %c128_46] : memref<64x192xf32, #tpu.memory_space<vmem>>, vector<64x32xf32>
    %91 = arith.truncf %90 : vector<64x32xf32> to vector<64x32xbf16>
    %c256 = arith.constant 256 : index
    %c0_47 = arith.constant 0 : index
    %92 = vector.load %arg11[%c256, %c0_47] : memref<384x32xbf16, #tpu.memory_space<vmem>>, vector<64x32xbf16>
    tpu.vector_store %arg11[%c256, %c0_47], %91 {strides = array<i32>} : memref<384x32xbf16, #tpu.memory_space<vmem>>, vector<64x32xbf16>,
    %c0_48 = arith.constant 0 : index
    %c160 = arith.constant 160 : index
    %93 = vector.load %arg10[%c0_48, %c160] : memref<64x192xf32, #tpu.memory_space<vmem>>, vector<64x32xf32>
    %94 = arith.truncf %93 : vector<64x32xf32> to vector<64x32xbf16>
    %c320 = arith.constant 320 : index
    %c0_49 = arith.constant 0 : index
    %95 = vector.load %arg11[%c320, %c0_49] : memref<384x32xbf16, #tpu.memory_space<vmem>>, vector<64x32xbf16>
    tpu.vector_store %arg11[%c320, %c0_49], %94 {strides = array<i32>} : memref<384x32xbf16, #tpu.memory_space<vmem>>, vector<64x32xbf16>,
    %c0_50 = arith.constant 0 : index
    %c0_51 = arith.constant 0 : index
    %96 = vector.load %arg11[%c0_50, %c0_51] : memref<384x32xbf16, #tpu.memory_space<vmem>>, vector<384x32xbf16>
    %cst_52 = arith.constant dense<0.000000e+00> : vector<64x32xf32>
    %97 = tpu.matmul %72, %96, %cst_52 {dimension_numbers = #tpu.dot_dimension_numbers<[1], [0], [0], [1], [0, 0, 1, 1], [], []>} : vector<64x384xbf16>, vector<384x32xbf16>, vector<64x32xf32> -> vector<64x32xf32>
    %c8 = arith.constant 8 : index
    %c0_53 = arith.constant 0 : index
    %98 = vector.load %arg3[%c8, %c0_53] : memref<16x128xf32, #tpu.memory_space<vmem>>, vector<1x32xf32>
    %99 = vector.broadcast %98 : vector<1x32xf32> to vector<64x32xf32>
    %100 = arith.addf %97, %99 : vector<64x32xf32>
    %cst_54 = arith.constant 0.000000e+00 : f32
    %101 = vector.broadcast %cst_54 : f32 to vector<64x32xf32>
    %102 = arith.maximumf %100, %101 : vector<64x32xf32>
    %103 = arith.truncf %102 : vector<64x32xf32> to vector<64x32xbf16>
    %c1 = arith.constant 1 : index
    %c0_55 = arith.constant 0 : index
    %c0_56 = arith.constant 0 : index
    %104 = vector.load %arg7[%c1, %c0_55, %c0_56] : memref<3x32x192xbf16, #tpu.memory_space<vmem>>, vector<1x32x192xbf16>
    %105 = vector.shape_cast %104 : vector<1x32x192xbf16> to vector<32x192xbf16>
    %cst_57 = arith.constant dense<0.000000e+00> : vector<64x192xf32>
    %106 = tpu.matmul %103, %105, %cst_57 {dimension_numbers = #tpu.dot_dimension_numbers<[1], [0], [0], [1], [0, 0, 1, 1], [], []>} : vector<64x32xbf16>, vector<32x192xbf16>, vector<64x192xf32> -> vector<64x192xf32>
    %c0_58 = arith.constant 0 : index
    %c0_59 = arith.constant 0 : index
    %107 = vector.load %arg10[%c0_58, %c0_59] : memref<64x192xf32, #tpu.memory_space<vmem>>, vector<64x192xf32>
    tpu.vector_store %arg10[%c0_58, %c0_59], %106 {strides = array<i32>} : memref<64x192xf32, #tpu.memory_space<vmem>>, vector<64x192xf32>,
    %c0_60 = arith.constant 0 : index
    %c0_61 = arith.constant 0 : index
    %108 = vector.load %arg10[%c0_60, %c0_61] : memref<64x192xf32, #tpu.memory_space<vmem>>, vector<64x32xf32>
    %109 = arith.truncf %108 : vector<64x32xf32> to vector<64x32xbf16>
    %c0_62 = arith.constant 0 : index
    %c0_63 = arith.constant 0 : index
    %110 = vector.load %arg11[%c0_62, %c0_63] : memref<384x32xbf16, #tpu.memory_space<vmem>>, vector<64x32xbf16>
    tpu.vector_store %arg11[%c0_62, %c0_63], %109 {strides = array<i32>} : memref<384x32xbf16, #tpu.memory_space<vmem>>, vector<64x32xbf16>,
    %c0_64 = arith.constant 0 : index
    %c32_65 = arith.constant 32 : index
    %111 = vector.load %arg10[%c0_64, %c32_65] : memref<64x192xf32, #tpu.memory_space<vmem>>, vector<64x32xf32>
    %112 = arith.truncf %111 : vector<64x32xf32> to vector<64x32xbf16>
    %c64_66 = arith.constant 64 : index
    %c0_67 = arith.constant 0 : index
    %113 = vector.load %arg11[%c64_66, %c0_67] : memref<384x32xbf16, #tpu.memory_space<vmem>>, vector<64x32xbf16>
    tpu.vector_store %arg11[%c64_66, %c0_67], %112 {strides = array<i32>} : memref<384x32xbf16, #tpu.memory_space<vmem>>, vector<64x32xbf16>,
    %c0_68 = arith.constant 0 : index
    %c64_69 = arith.constant 64 : index
    %114 = vector.load %arg10[%c0_68, %c64_69] : memref<64x192xf32, #tpu.memory_space<vmem>>, vector<64x32xf32>
    %115 = arith.truncf %114 : vector<64x32xf32> to vector<64x32xbf16>
    %c128_70 = arith.constant 128 : index
    %c0_71 = arith.constant 0 : index
    %116 = vector.load %arg11[%c128_70, %c0_71] : memref<384x32xbf16, #tpu.memory_space<vmem>>, vector<64x32xbf16>
    tpu.vector_store %arg11[%c128_70, %c0_71], %115 {strides = array<i32>} : memref<384x32xbf16, #tpu.memory_space<vmem>>, vector<64x32xbf16>,
    %c0_72 = arith.constant 0 : index
    %c96_73 = arith.constant 96 : index
    %117 = vector.load %arg10[%c0_72, %c96_73] : memref<64x192xf32, #tpu.memory_space<vmem>>, vector<64x32xf32>
    %118 = arith.truncf %117 : vector<64x32xf32> to vector<64x32xbf16>
    %c192_74 = arith.constant 192 : index
    %c0_75 = arith.constant 0 : index
    %119 = vector.load %arg11[%c192_74, %c0_75] : memref<384x32xbf16, #tpu.memory_space<vmem>>, vector<64x32xbf16>
    tpu.vector_store %arg11[%c192_74, %c0_75], %118 {strides = array<i32>} : memref<384x32xbf16, #tpu.memory_space<vmem>>, vector<64x32xbf16>,
    %c0_76 = arith.constant 0 : index
    %c128_77 = arith.constant 128 : index
    %120 = vector.load %arg10[%c0_76, %c128_77] : memref<64x192xf32, #tpu.memory_space<vmem>>, vector<64x32xf32>
    %121 = arith.truncf %120 : vector<64x32xf32> to vector<64x32xbf16>
    %c256_78 = arith.constant 256 : index
    %c0_79 = arith.constant 0 : index
    %122 = vector.load %arg11[%c256_78, %c0_79] : memref<384x32xbf16, #tpu.memory_space<vmem>>, vector<64x32xbf16>
    tpu.vector_store %arg11[%c256_78, %c0_79], %121 {strides = array<i32>} : memref<384x32xbf16, #tpu.memory_space<vmem>>, vector<64x32xbf16>,
    %c0_80 = arith.constant 0 : index
    %c160_81 = arith.constant 160 : index
    %123 = vector.load %arg10[%c0_80, %c160_81] : memref<64x192xf32, #tpu.memory_space<vmem>>, vector<64x32xf32>
    %124 = arith.truncf %123 : vector<64x32xf32> to vector<64x32xbf16>
    %c320_82 = arith.constant 320 : index
    %c0_83 = arith.constant 0 : index
    %125 = vector.load %arg11[%c320_82, %c0_83] : memref<384x32xbf16, #tpu.memory_space<vmem>>, vector<64x32xbf16>
    tpu.vector_store %arg11[%c320_82, %c0_83], %124 {strides = array<i32>} : memref<384x32xbf16, #tpu.memory_space<vmem>>, vector<64x32xbf16>,
    %c0_84 = arith.constant 0 : index
    %c0_85 = arith.constant 0 : index
    %126 = vector.load %arg11[%c0_84, %c0_85] : memref<384x32xbf16, #tpu.memory_space<vmem>>, vector<384x32xbf16>
    %cst_86 = arith.constant dense<0.000000e+00> : vector<64x32xf32>
    %127 = tpu.matmul %72, %126, %cst_86 {dimension_numbers = #tpu.dot_dimension_numbers<[1], [0], [0], [1], [0, 0, 1, 1], [], []>} : vector<64x384xbf16>, vector<384x32xbf16>, vector<64x32xf32> -> vector<64x32xf32>
    %c9 = arith.constant 9 : index
    %c0_87 = arith.constant 0 : index
    %128 = vector.load %arg3[%c9, %c0_87] : memref<16x128xf32, #tpu.memory_space<vmem>>, vector<1x32xf32>
    %129 = vector.broadcast %128 : vector<1x32xf32> to vector<64x32xf32>
    %130 = arith.addf %127, %129 : vector<64x32xf32>
    %cst_88 = arith.constant 0.000000e+00 : f32
    %131 = vector.broadcast %cst_88 : f32 to vector<64x32xf32>
    %132 = arith.maximumf %130, %131 : vector<64x32xf32>
    %133 = arith.truncf %132 : vector<64x32xf32> to vector<64x32xbf16>
    %c2_89 = arith.constant 2 : index
    %c0_90 = arith.constant 0 : index
    %c0_91 = arith.constant 0 : index
    %134 = vector.load %arg7[%c2_89, %c0_90, %c0_91] : memref<3x32x192xbf16, #tpu.memory_space<vmem>>, vector<1x32x192xbf16>
    %135 = vector.shape_cast %134 : vector<1x32x192xbf16> to vector<32x192xbf16>
    %cst_92 = arith.constant dense<0.000000e+00> : vector<64x192xf32>
    %136 = tpu.matmul %133, %135, %cst_92 {dimension_numbers = #tpu.dot_dimension_numbers<[1], [0], [0], [1], [0, 0, 1, 1], [], []>} : vector<64x32xbf16>, vector<32x192xbf16>, vector<64x192xf32> -> vector<64x192xf32>
    %c0_93 = arith.constant 0 : index
    %c0_94 = arith.constant 0 : index
    %137 = vector.load %arg10[%c0_93, %c0_94] : memref<64x192xf32, #tpu.memory_space<vmem>>, vector<64x192xf32>
    tpu.vector_store %arg10[%c0_93, %c0_94], %136 {strides = array<i32>} : memref<64x192xf32, #tpu.memory_space<vmem>>, vector<64x192xf32>,
    %c0_95 = arith.constant 0 : index
    %c0_96 = arith.constant 0 : index
    %138 = vector.load %arg10[%c0_95, %c0_96] : memref<64x192xf32, #tpu.memory_space<vmem>>, vector<64x32xf32>
    %139 = arith.truncf %138 : vector<64x32xf32> to vector<64x32xbf16>
    %c0_97 = arith.constant 0 : index
    %c0_98 = arith.constant 0 : index
    %140 = vector.load %arg11[%c0_97, %c0_98] : memref<384x32xbf16, #tpu.memory_space<vmem>>, vector<64x32xbf16>
    tpu.vector_store %arg11[%c0_97, %c0_98], %139 {strides = array<i32>} : memref<384x32xbf16, #tpu.memory_space<vmem>>, vector<64x32xbf16>,
    %c0_99 = arith.constant 0 : index
    %c32_100 = arith.constant 32 : index
    %141 = vector.load %arg10[%c0_99, %c32_100] : memref<64x192xf32, #tpu.memory_space<vmem>>, vector<64x32xf32>
    %142 = arith.truncf %141 : vector<64x32xf32> to vector<64x32xbf16>
    %c64_101 = arith.constant 64 : index
    %c0_102 = arith.constant 0 : index
    %143 = vector.load %arg11[%c64_101, %c0_102] : memref<384x32xbf16, #tpu.memory_space<vmem>>, vector<64x32xbf16>
    tpu.vector_store %arg11[%c64_101, %c0_102], %142 {strides = array<i32>} : memref<384x32xbf16, #tpu.memory_space<vmem>>, vector<64x32xbf16>,
    %c0_103 = arith.constant 0 : index
    %c64_104 = arith.constant 64 : index
    %144 = vector.load %arg10[%c0_103, %c64_104] : memref<64x192xf32, #tpu.memory_space<vmem>>, vector<64x32xf32>
    %145 = arith.truncf %144 : vector<64x32xf32> to vector<64x32xbf16>
    %c128_105 = arith.constant 128 : index
    %c0_106 = arith.constant 0 : index
    %146 = vector.load %arg11[%c128_105, %c0_106] : memref<384x32xbf16, #tpu.memory_space<vmem>>, vector<64x32xbf16>
    tpu.vector_store %arg11[%c128_105, %c0_106], %145 {strides = array<i32>} : memref<384x32xbf16, #tpu.memory_space<vmem>>, vector<64x32xbf16>,
    %c0_107 = arith.constant 0 : index
    %c96_108 = arith.constant 96 : index
    %147 = vector.load %arg10[%c0_107, %c96_108] : memref<64x192xf32, #tpu.memory_space<vmem>>, vector<64x32xf32>
    %148 = arith.truncf %147 : vector<64x32xf32> to vector<64x32xbf16>
    %c192_109 = arith.constant 192 : index
    %c0_110 = arith.constant 0 : index
    %149 = vector.load %arg11[%c192_109, %c0_110] : memref<384x32xbf16, #tpu.memory_space<vmem>>, vector<64x32xbf16>
    tpu.vector_store %arg11[%c192_109, %c0_110], %148 {strides = array<i32>} : memref<384x32xbf16, #tpu.memory_space<vmem>>, vector<64x32xbf16>,
    %c0_111 = arith.constant 0 : index
    %c128_112 = arith.constant 128 : index
    %150 = vector.load %arg10[%c0_111, %c128_112] : memref<64x192xf32, #tpu.memory_space<vmem>>, vector<64x32xf32>
    %151 = arith.truncf %150 : vector<64x32xf32> to vector<64x32xbf16>
    %c256_113 = arith.constant 256 : index
    %c0_114 = arith.constant 0 : index
    %152 = vector.load %arg11[%c256_113, %c0_114] : memref<384x32xbf16, #tpu.memory_space<vmem>>, vector<64x32xbf16>
    tpu.vector_store %arg11[%c256_113, %c0_114], %151 {strides = array<i32>} : memref<384x32xbf16, #tpu.memory_space<vmem>>, vector<64x32xbf16>,
    %c0_115 = arith.constant 0 : index
    %c160_116 = arith.constant 160 : index
    %153 = vector.load %arg10[%c0_115, %c160_116] : memref<64x192xf32, #tpu.memory_space<vmem>>, vector<64x32xf32>
    %154 = arith.truncf %153 : vector<64x32xf32> to vector<64x32xbf16>
    %c320_117 = arith.constant 320 : index
    %c0_118 = arith.constant 0 : index
    %155 = vector.load %arg11[%c320_117, %c0_118] : memref<384x32xbf16, #tpu.memory_space<vmem>>, vector<64x32xbf16>
    tpu.vector_store %arg11[%c320_117, %c0_118], %154 {strides = array<i32>} : memref<384x32xbf16, #tpu.memory_space<vmem>>, vector<64x32xbf16>,
    %c0_119 = arith.constant 0 : index
    %c0_120 = arith.constant 0 : index
    %156 = vector.load %arg11[%c0_119, %c0_120] : memref<384x32xbf16, #tpu.memory_space<vmem>>, vector<384x32xbf16>
    %cst_121 = arith.constant dense<0.000000e+00> : vector<64x32xf32>
    %157 = tpu.matmul %72, %156, %cst_121 {dimension_numbers = #tpu.dot_dimension_numbers<[1], [0], [0], [1], [0, 0, 1, 1], [], []>} : vector<64x384xbf16>, vector<384x32xbf16>, vector<64x32xf32> -> vector<64x32xf32>
    %c10 = arith.constant 10 : index
    %c0_122 = arith.constant 0 : index
    %158 = vector.load %arg3[%c10, %c0_122] : memref<16x128xf32, #tpu.memory_space<vmem>>, vector<1x32xf32>
    %159 = vector.broadcast %158 : vector<1x32xf32> to vector<64x32xf32>
    %160 = arith.addf %157, %159 : vector<64x32xf32>
    %161 = vector.shape_cast %160 : vector<64x32xf32> to vector<8x8x32xf32>
    %cst_123 = arith.constant dense<0.000000e+00> : vector<8x32xf32>
    %162 = vector.multi_reduction <add>, %161, %cst_123 [1] : vector<8x8x32xf32> to vector<8x32xf32>
    %163 = arith.truncf %162 : vector<8x32xf32> to vector<8x32xbf16>
    %c0_124 = arith.constant 0 : index
    %c0_125 = arith.constant 0 : index
    %164 = vector.load %arg8[%c0_124, %c0_125] : memref<32x32xbf16, #tpu.memory_space<vmem>>, vector<32x32xbf16>
    %cst_126 = arith.constant dense<0.000000e+00> : vector<8x32xf32>
    %165 = tpu.matmul %163, %164, %cst_126 {dimension_numbers = #tpu.dot_dimension_numbers<[1], [0], [0], [1], [0, 0, 1, 1], [], []>} : vector<8x32xbf16>, vector<32x32xbf16>, vector<8x32xf32> -> vector<8x32xf32>
    %c7 = arith.constant 7 : index
    %c0_127 = arith.constant 0 : index
    %166 = vector.load %arg3[%c7, %c0_127] : memref<16x128xf32, #tpu.memory_space<vmem>>, vector<1x32xf32>
    %167 = vector.broadcast %166 : vector<1x32xf32> to vector<8x32xf32>
    %168 = arith.addf %165, %167 : vector<8x32xf32>
    %c0_128 = arith.constant 0 : index
    %c0_129 = arith.constant 0 : index
    %169 = vector.load %arg2[%c0_128, %c0_129] : memref<8x32xf32, #tpu.memory_space<vmem>>, vector<8x32xf32>
    %170 = arith.mulf %168, %169 : vector<8x32xf32>
    %cst_130 = arith.constant dense<0.000000e+00> : vector<8xf32>
    %171 = vector.multi_reduction <add>, %170, %cst_130 [1] : vector<8x32xf32> to vector<8xf32>
    %172 = vector.shape_cast %171 : vector<8xf32> to vector<8x1xf32>
    %c0_131 = arith.constant 0 : index
    %c0_132 = arith.constant 0 : index
    %173 = vector.load %arg9[%c0_131, %c0_132] : memref<8x1xf32, #tpu.memory_space<vmem>>, vector<8x1xf32>
    tpu.vector_store %arg9[%c0_131, %c0_132], %172 {strides = array<i32>} : memref<8x1xf32, #tpu.memory_space<vmem>>, vector<8x1xf32>,
    return
  }
}

</mosaic_0001>

<llo_original>
// kernel: pref_rgcn_forward.1
$region0: #{pref_rgcn_forward.1}
  #allocation0 [shape = 'u32[]', space=smem, size = 0x4, offset = 0x4, fixed_abs, tag = 'smem constant byte address 0x4 - core index']
  #allocation1 [shape = 'u32[144,128]{1,0:T(1,128)}', space=vmem, size = 0x12000, scoped, tag = 'internal scratch']
  #allocation2 [shape = 'f32[64,192]{1,0:T(8,128)}', space=vmem, size = 0x10000, scoped, tag = 'scratch operand']
  #allocation3 [shape = 'bf16[384,32]{1,0:T(8,128)(2,1)}', space=vmem, size = 0x18000, scoped, tag = 'scratch operand']
  %s0 = inlined_call_operand.vmem [shape: f32[2,8,32], index: 0, kind: input, shape index: {}]
  %s1 = inlined_call_operand.vmem [shape: f32[2,32,32], index: 1, kind: input, shape index: {}]
  %s2 = inlined_call_operand.vmem [shape: f32[8,32], index: 2, kind: input, shape index: {}]
  %s3 = inlined_call_operand.vmem [shape: f32[16,128], index: 3, kind: input, shape index: {}]
  %s4 = inlined_call_operand.vmem [shape: bf16[32,96], index: 4, kind: input, shape index: {}]
  %s5 = inlined_call_operand.vmem [shape: f32[64,96], index: 5, kind: input, shape index: {}]
  %s6 = inlined_call_operand.vmem [shape: bf16[64,384], index: 6, kind: input, shape index: {}]
  %s7 = inlined_call_operand.vmem [shape: bf16[3,32,192], index: 7, kind: input, shape index: {}]
  %s8 = inlined_call_operand.vmem [shape: bf16[32,32], index: 8, kind: input, shape index: {}]
  %s9 = inlined_call_operand.vmem [shape: f32[8,1], index: 9, kind: output, shape index: {}]
  %s10 = sld [smem:[#allocation0]]
  $region46: #{pref_rgcn_forward.1} parent=0
    _
  %s12 = ssub.s32 1, %s10
  %s13 = scalar_select 0, %s12, %s10
  // Predicated region
  $region2: #{pref_rgcn_forward.1} parent=0 // pred_check
    _
  $region3: #{pref_rgcn_forward.1} parent=0 // pred_check_branch
    %15 = sbr.rel (0) target = $region5
  $region4: #{pref_rgcn_forward.1} parent=0 // pred_region
    _
  $region5: #{pref_rgcn_forward.1} parent=0 // pred_fallthru
    _
  // Predicated region
  $region6: #{pref_rgcn_forward.1} parent=0 // pred_check
    _
  $region7: #{pref_rgcn_forward.1} parent=0 // pred_check_branch
    %17 = sbr.rel (0) target = $region9
  $region8: #{pref_rgcn_forward.1} parent=0 // pred_region
    _
  $region9: #{pref_rgcn_forward.1} parent=0 // pred_fallthru
    _
  // Predicated region
  $region10: #{pref_rgcn_forward.1} parent=0 // pred_check
    _
  $region11: #{pref_rgcn_forward.1} parent=0 // pred_check_branch
    %19 = sbr.rel (0) target = $region13
  $region12: #{pref_rgcn_forward.1} parent=0 // pred_region
    _
  $region13: #{pref_rgcn_forward.1} parent=0 // pred_fallthru
    _
  // Predicated region
  $region14: #{pref_rgcn_forward.1} parent=0 // pred_check
    _
  $region15: #{pref_rgcn_forward.1} parent=0 // pred_check_branch
    %21 = sbr.rel (0) target = $region17
  $region16: #{pref_rgcn_forward.1} parent=0 // pred_region
    _
  $region17: #{pref_rgcn_forward.1} parent=0 // pred_fallthru
    _
  // Predicated region
  $region18: #{pref_rgcn_forward.1} parent=0 // pred_check
    _
  $region19: #{pref_rgcn_forward.1} parent=0 // pred_check_branch
    %23 = sbr.rel (0) target = $region21
  $region20: #{pref_rgcn_forward.1} parent=0 // pred_region
    _
  $region21: #{pref_rgcn_forward.1} parent=0 // pred_fallthru
    _
  // Predicated region
  $region22: #{pref_rgcn_forward.1} parent=0 // pred_check
    _
  $region23: #{pref_rgcn_forward.1} parent=0 // pred_check_branch
    %25 = sbr.rel (0) target = $region25
  $region24: #{pref_rgcn_forward.1} parent=0 // pred_region
    _
  $region25: #{pref_rgcn_forward.1} parent=0 // pred_fallthru
    _
  // Predicated region
  $region26: #{pref_rgcn_forward.1} parent=0 // pred_check
    _
  $region27: #{pref_rgcn_forward.1} parent=0 // pred_check_branch
    %27 = sbr.rel (0) target = $region29
  $region28: #{pref_rgcn_forward.1} parent=0 // pred_region
    _
  $region29: #{pref_rgcn_forward.1} parent=0 // pred_fallthru
    _
  // Predicated region
  $region30: #{pref_rgcn_forward.1} parent=0 // pred_check
    _
  $region31: #{pref_rgcn_forward.1} parent=0 // pred_check_branch
    %29 = sbr.rel (0) target = $region33
  $region32: #{pref_rgcn_forward.1} parent=0 // pred_region
    _
  $region33: #{pref_rgcn_forward.1} parent=0 // pred_fallthru
    _
  // Predicated region
  $region34: #{pref_rgcn_forward.1} parent=0 // pred_check
    _
  $region35: #{pref_rgcn_forward.1} parent=0 // pred_check_branch
    %31 = sbr.rel (0) target = $region37
  $region36: #{pref_rgcn_forward.1} parent=0 // pred_region
    _
  $region37: #{pref_rgcn_forward.1} parent=0 // pred_fallthru
    _
  %v33 = vld [vmem:[%s3 + $0x4] sm:$0x1]
  %v34 = vld [vmem:[%s3 + $0x5] sm:$0x1]
  %v35 = vld [vmem:[%s1] sm:$0xff]
  %v36 = vld [vmem:[%s1 + $0x8] sm:$0xff]
  %v37 = vld [vmem:[%s1 + $0x10] sm:$0xff]
  %v38 = vld [vmem:[%s1 + $0x18] sm:$0xff]
  %v39 = vld [vmem:[%s1 + $0x20] sm:$0xff]
  %v40 = vld [vmem:[%s1 + $0x28] sm:$0xff]
  %v41 = vld [vmem:[%s1 + $0x30] sm:$0xff]
  %v42 = vld [vmem:[%s1 + $0x38] sm:$0xff]
  %v43 = vlaneseq
  %v44 = vshrl.u32 %v43, 7
  %v45 = vsub.s32 0, %v44
  %v46 = vrot.slane %v33, %v45
  %v47 = vmul.f32 %v35, %v46
  %v48 = vmul.f32 %v36, %v46
  %v49 = vmul.f32 %v37, %v46
  %v50 = vmul.f32 %v38, %v46
  %v51 = vmul.f32 %v39, %v46
  %v52 = vmul.f32 %v40, %v46
  %v53 = vmul.f32 %v41, %v46
  %v54 = vmul.f32 %v42, %v46
  %vm55 = vcmask 261120
  %v56 = vsel %vm55, %v47, 0.0
  %57 = vadd.xlane.f32.xlu0 %v56
  %v58 = vpop.xlane.xlu0 %57
  %v59 = vsel %vm55, %v48, 0.0
  %60 = vadd.xlane.f32.xlu0 %v59
  %v61 = vpop.xlane.xlu0 %60
  %v62 = vsel %vm55, %v49, 0.0
  %63 = vadd.xlane.f32.xlu0 %v62
  %v64 = vpop.xlane.xlu0 %63
  %v65 = vsel %vm55, %v50, 0.0
  %66 = vadd.xlane.f32.xlu0 %v65
  %v67 = vpop.xlane.xlu0 %66
  %v68 = vsel %vm55, %v51, 0.0
  %69 = vadd.xlane.f32.xlu0 %v68
  %v70 = vpop.xlane.xlu0 %69
  %v71 = vsel %vm55, %v52, 0.0
  %72 = vadd.xlane.f32.xlu0 %v71
  %v73 = vpop.xlane.xlu0 %72
  %v74 = vsel %vm55, %v53, 0.0
  %75 = vadd.xlane.f32.xlu0 %v74
  %v76 = vpop.xlane.xlu0 %75
  %v77 = vsel %vm55, %v54, 0.0
  %78 = vadd.xlane.f32.xlu0 %v77
  %v79 = vpop.xlane.xlu0 %78
  %v80 = vlaneseq
  %v81 = vshrl.u32 %v80, 7
  %v82 = vsub.s32 0, %v81
  %v83 = vrot.slane %v34, %v82
  %86 = vbcast.lane.b32.xlu0 %v83, 256
  %v87 = vpop.permute.xlu0 %86
  %s89 = sor.u32 256, 8
  %90 = vbcast.lane.b32.xlu0 %v83, %s89
  %v91 = vpop.permute.xlu0 %90
  %s93 = sor.u32 256, 16
  %94 = vbcast.lane.b32.xlu0 %v83, %s93
  %v95 = vpop.permute.xlu0 %94
  %s97 = sor.u32 256, 24
  %98 = vbcast.lane.b32.xlu0 %v83, %s97
  %v99 = vpop.permute.xlu0 %98
  %v104 = vadd.f32 %v58, %v87
  %v105 = vadd.f32 %v61, %v91
  %v106 = vadd.f32 %v64, %v95
  %v107 = vadd.f32 %v67, %v99
  %v108 = vadd.f32 %v70, %v87
  %v109 = vadd.f32 %v73, %v91
  %v110 = vadd.f32 %v76, %v95
  %v111 = vadd.f32 %v79, %v99
  %v112 = vld [vmem:[%s3] sm:$0x3]
  %v113 = vld [vmem:[%s3 + $0x2] sm:$0x3]
  %v114 = vld [vmem:[%s0] sm:$0xff]
  %v115 = vld [vmem:[%s0 + $0x8] sm:$0xff]
  %v116 = vlaneseq
  %v117 = vshrl.u32 %v116, 7
  %v118 = vsub.s32 0, %v117
  %v119 = vrot.slane %v112, %v118
  %121 = vbcast.lane.b32.xlu0 %v119, 256
  %v122 = vpop.permute.xlu0 %121
  %127 = vset.pattern.permute.xlu0 0
  %128 = vperm.xlu0 %127, %v104
  %v129 = vpop.permute.xlu0 %128
  %130 = vset.pattern.permute.xlu0 0
  %131 = vperm.xlu0 %130, %v105
  %v132 = vpop.permute.xlu0 %131
  %133 = vset.pattern.permute.xlu0 0
  %134 = vperm.xlu0 %133, %v106
  %v135 = vpop.permute.xlu0 %134
  %136 = vset.pattern.permute.xlu0 0
  %137 = vperm.xlu0 %136, %v107
  %v138 = vpop.permute.xlu0 %137
  %v139 = vlaneseq
  %v140 = vand.u32 %v139, 127
  %v141 = vlaneseq
  %v142 = vshrl.u32 %v141, 7
  %v143 = vsub.s32 %v140, %v142
  %v144 = vrot.slane %v129, %v143
  %v145 = vadd.s32 %v140, 4294967288
  %v146 = vlaneseq
  %v147 = vshrl.u32 %v146, 7
  %v148 = vsub.s32 %v145, %v147
  %v149 = vrot.slane %v132, %v148
  %vm150 = vcmask 130112
  %v151 = vsel %vm150, %v149, %v144
  %v152 = vadd.s32 %v140, 4294967280
  %v153 = vlaneseq
  %v154 = vshrl.u32 %v153, 7
  %v155 = vsub.s32 %v152, %v154
  %v156 = vrot.slane %v135, %v155
  %vm157 = vcmask 195712
  %v158 = vsel %vm157, %v156, %v151
  %v159 = vadd.s32 %v140, 4294967272
  %v160 = vlaneseq
  %v161 = vshrl.u32 %v160, 7
  %v162 = vsub.s32 %v159, %v161
  %v163 = vrot.slane %v138, %v162
  %vm164 = vcmask 261312
  %v165 = vsel %vm164, %v163, %v158
  %vm166 = vcmask 1041409
  %vm167 = vcmask 1042434
  %v168 = vsel %vm167, %v165, %v165
  %vm169 = vcmask 1043459
  %v170 = vsel %vm169, %v165, %v168
  %vm171 = vcmask 1044484
  %v172 = vsel %vm171, %v165, %v170
  %vm173 = vcmask 1045509
  %v174 = vsel %vm173, %v165, %v172
  %vm175 = vcmask 1046534
  %v176 = vsel %vm175, %v165, %v174
  %vm177 = vcmask 1047559
  %v178 = vsel %vm177, %v165, %v176
  %v180 = vmul.f32 %v122, %v178
  %v181 = vadd.f32 %v180, 0.0
  %v183 = vcombine.high %v114, %v114
  %v185 = vunpack.c.l.s4 1966171168
  %v186 = vunpack.c.0.s8 %v185
  %v187 = vlaneseq
  %v188 = vshrl.u32 %v187, 7
  %v189 = vsub.s32 %v186, %v188
  %v190 = vrot.slane %v114, %v189
  %v192 = vunpack.c.l.s4 1966171168
  %v193 = vunpack.c.0.s8 %v192
  %v194 = vlaneseq
  %v195 = vshrl.u32 %v194, 7
  %v196 = vsub.s32 %v193, %v195
  %v197 = vrot.slane %v183, %v196
  %v198 = vcombine.high %v190, %v190
  %v199 = vcombine.high %v197, %v197
  %v201 = vunpack.c.l.s4 1966171168
  %v202 = vunpack.c.0.s8 %v201
  %v203 = vlaneseq
  %v204 = vshrl.u32 %v203, 7
  %v205 = vsub.s32 %v202, %v204
  %v206 = vrot.slane %v190, %v205
  %v208 = vunpack.c.l.s4 1966171168
  %v209 = vunpack.c.0.s8 %v208
  %v210 = vlaneseq
  %v211 = vshrl.u32 %v210, 7
  %v212 = vsub.s32 %v209, %v211
  %v213 = vrot.slane %v197, %v212
  %v215 = vunpack.c.l.s4 1966171168
  %v216 = vunpack.c.0.s8 %v215
  %v217 = vlaneseq
  %v218 = vshrl.u32 %v217, 7
  %v219 = vsub.s32 %v216, %v218
  %v220 = vrot.slane %v198, %v219
  %v222 = vunpack.c.l.s4 1966171168
  %v223 = vunpack.c.0.s8 %v222
  %v224 = vlaneseq
  %v225 = vshrl.u32 %v224, 7
  %v226 = vsub.s32 %v223, %v225
  %v227 = vrot.slane %v199, %v226
  %v228 = vcombine.high %v206, %v206
  %v229 = vcombine.high %v213, %v213
  %v230 = vcombine.high %v220, %v220
  %v231 = vcombine.high %v227, %v227
  %v232 = vlaneseq
  %v233 = vshrl.u32 %v232, 7
  %v234 = vsub.s32 0, %v233
  %v235 = vrot.slane %v113, %v234
  %237 = vbcast.lane.b32.xlu0 %v235, 256
  %v238 = vpop.permute.xlu0 %237
  %v239 = vlaneseq
  %v240 = vshrl.u32 %v239, 7
  %v241 = vsub.s32 0, %v240
  %v242 = vrot.slane %v206, %v241
  %v243 = vlaneseq
  %v244 = vshrl.u32 %v243, 7
  %v245 = vsub.s32 0, %v244
  %v246 = vrot.slane %v220, %v245
  %v247 = vlaneseq
  %v248 = vshrl.u32 %v247, 7
  %v249 = vsub.s32 0, %v248
  %v250 = vrot.slane %v228, %v249
  %v251 = vlaneseq
  %v252 = vshrl.u32 %v251, 7
  %v253 = vsub.s32 0, %v252
  %v254 = vrot.slane %v230, %v253
  %v255 = vlaneseq
  %v256 = vshrl.u32 %v255, 7
  %v257 = vsub.s32 0, %v256
  %v258 = vrot.slane %v213, %v257
  %v259 = vlaneseq
  %v260 = vshrl.u32 %v259, 7
  %v261 = vsub.s32 0, %v260
  %v262 = vrot.slane %v227, %v261
  %v263 = vlaneseq
  %v264 = vshrl.u32 %v263, 7
  %v265 = vsub.s32 0, %v264
  %v266 = vrot.slane %v229, %v265
  %v267 = vlaneseq
  %v268 = vshrl.u32 %v267, 7
  %v269 = vsub.s32 0, %v268
  %v270 = vrot.slane %v231, %v269
  %v279 = vmul.f32 %v242, %v238
  %v280 = vmul.f32 %v246, %v238
  %v281 = vmul.f32 %v250, %v238
  %v282 = vmul.f32 %v254, %v238
  %v283 = vmul.f32 %v258, %v238
  %v284 = vmul.f32 %v262, %v238
  %v285 = vmul.f32 %v266, %v238
  %v286 = vmul.f32 %v270, %v238
  %v287 = vadd.f32 %v279, 0.0
  %v288 = vadd.f32 %v280, 0.0
  %v289 = vadd.f32 %v281, 0.0
  %v290 = vadd.f32 %v282, 0.0
  %v291 = vadd.f32 %v283, 0.0
  %v292 = vadd.f32 %v284, 0.0
  %v293 = vadd.f32 %v285, 0.0
  %v294 = vadd.f32 %v286, 0.0
  %v295 = vlaneseq
  %v296 = vshrl.u32 %v295, 7
  %v297 = vsub.s32 1, %v296
  %v298 = vrot.slane %v112, %v297
  %300 = vbcast.lane.b32.xlu0 %v298, 256
  %v301 = vpop.permute.xlu0 %300
  %306 = vset.pattern.permute.xlu0 0
  %307 = vperm.xlu0 %306, %v108
  %v308 = vpop.permute.xlu0 %307
  %309 = vset.pattern.permute.xlu0 0
  %310 = vperm.xlu0 %309, %v109
  %v311 = vpop.permute.xlu0 %310
  %312 = vset.pattern.permute.xlu0 0
  %313 = vperm.xlu0 %312, %v110
  %v314 = vpop.permute.xlu0 %313
  %315 = vset.pattern.permute.xlu0 0
  %316 = vperm.xlu0 %315, %v111
  %v317 = vpop.permute.xlu0 %316
  %v318 = vlaneseq
  %v319 = vshrl.u32 %v318, 7
  %v320 = vsub.s32 %v140, %v319
  %v321 = vrot.slane %v308, %v320
  %v322 = vlaneseq
  %v323 = vshrl.u32 %v322, 7
  %v324 = vsub.s32 %v145, %v323
  %v325 = vrot.slane %v311, %v324
  %v326 = vsel %vm150, %v325, %v321
  %v327 = vlaneseq
  %v328 = vshrl.u32 %v327, 7
  %v329 = vsub.s32 %v152, %v328
  %v330 = vrot.slane %v314, %v329
  %v331 = vsel %vm157, %v330, %v326
  %v332 = vlaneseq
  %v333 = vshrl.u32 %v332, 7
  %v334 = vsub.s32 %v159, %v333
  %v335 = vrot.slane %v317, %v334
  %v336 = vsel %vm164, %v335, %v331
  %v337 = vsel %vm167, %v336, %v336
  %v338 = vsel %vm169, %v336, %v337
  %v339 = vsel %vm171, %v336, %v338
  %v340 = vsel %vm173, %v336, %v339
  %v341 = vsel %vm175, %v336, %v340
  %v342 = vsel %vm177, %v336, %v341
  %v344 = vmul.f32 %v301, %v342
  %v345 = vadd.f32 %v181, %v344
  %v347 = vcombine.high %v115, %v115
  %v349 = vunpack.c.l.s4 1966171168
  %v350 = vunpack.c.0.s8 %v349
  %v351 = vlaneseq
  %v352 = vshrl.u32 %v351, 7
  %v353 = vsub.s32 %v350, %v352
  %v354 = vrot.slane %v115, %v353
  %v356 = vunpack.c.l.s4 1966171168
  %v357 = vunpack.c.0.s8 %v356
  %v358 = vlaneseq
  %v359 = vshrl.u32 %v358, 7
  %v360 = vsub.s32 %v357, %v359
  %v361 = vrot.slane %v347, %v360
  %v362 = vcombine.high %v354, %v354
  %v363 = vcombine.high %v361, %v361
  %v365 = vunpack.c.l.s4 1966171168
  %v366 = vunpack.c.0.s8 %v365
  %v367 = vlaneseq
  %v368 = vshrl.u32 %v367, 7
  %v369 = vsub.s32 %v366, %v368
  %v370 = vrot.slane %v354, %v369
  %v372 = vunpack.c.l.s4 1966171168
  %v373 = vunpack.c.0.s8 %v372
  %v374 = vlaneseq
  %v375 = vshrl.u32 %v374, 7
  %v376 = vsub.s32 %v373, %v375
  %v377 = vrot.slane %v361, %v376
  %v379 = vunpack.c.l.s4 1966171168
  %v380 = vunpack.c.0.s8 %v379
  %v381 = vlaneseq
  %v382 = vshrl.u32 %v381, 7
  %v383 = vsub.s32 %v380, %v382
  %v384 = vrot.slane %v362, %v383
  %v386 = vunpack.c.l.s4 1966171168
  %v387 = vunpack.c.0.s8 %v386
  %v388 = vlaneseq
  %v389 = vshrl.u32 %v388, 7
  %v390 = vsub.s32 %v387, %v389
  %v391 = vrot.slane %v363, %v390
  %v392 = vcombine.high %v370, %v370
  %v393 = vcombine.high %v377, %v377
  %v394 = vcombine.high %v384, %v384
  %v395 = vcombine.high %v391, %v391
  %v396 = vlaneseq
  %v397 = vshrl.u32 %v396, 7
  %v398 = vsub.s32 1, %v397
  %v399 = vrot.slane %v113, %v398
  %401 = vbcast.lane.b32.xlu0 %v399, 256
  %v402 = vpop.permute.xlu0 %401
  %v403 = vlaneseq
  %v404 = vshrl.u32 %v403, 7
  %v405 = vsub.s32 0, %v404
  %v406 = vrot.slane %v370, %v405
  %v407 = vlaneseq
  %v408 = vshrl.u32 %v407, 7
  %v409 = vsub.s32 0, %v408
  %v410 = vrot.slane %v384, %v409
  %v411 = vlaneseq
  %v412 = vshrl.u32 %v411, 7
  %v413 = vsub.s32 0, %v412
  %v414 = vrot.slane %v392, %v413
  %v415 = vlaneseq
  %v416 = vshrl.u32 %v415, 7
  %v417 = vsub.s32 0, %v416
  %v418 = vrot.slane %v394, %v417
  %v419 = vlaneseq
  %v420 = vshrl.u32 %v419, 7
  %v421 = vsub.s32 0, %v420
  %v422 = vrot.slane %v377, %v421
  %v423 = vlaneseq
  %v424 = vshrl.u32 %v423, 7
  %v425 = vsub.s32 0, %v424
  %v426 = vrot.slane %v391, %v425
  %v427 = vlaneseq
  %v428 = vshrl.u32 %v427, 7
  %v429 = vsub.s32 0, %v428
  %v430 = vrot.slane %v393, %v429
  %v431 = vlaneseq
  %v432 = vshrl.u32 %v431, 7
  %v433 = vsub.s32 0, %v432
  %v434 = vrot.slane %v395, %v433
  %v443 = vmul.f32 %v406, %v402
  %v444 = vmul.f32 %v410, %v402
  %v445 = vmul.f32 %v414, %v402
  %v446 = vmul.f32 %v418, %v402
  %v447 = vmul.f32 %v422, %v402
  %v448 = vmul.f32 %v426, %v402
  %v449 = vmul.f32 %v430, %v402
  %v450 = vmul.f32 %v434, %v402
  %v451 = vadd.f32 %v287, %v443
  %v452 = vadd.f32 %v288, %v444
  %v453 = vadd.f32 %v289, %v445
  %v454 = vadd.f32 %v290, %v446
  %v455 = vadd.f32 %v291, %v447
  %v456 = vadd.f32 %v292, %v448
  %v457 = vadd.f32 %v293, %v449
  %v458 = vadd.f32 %v294, %v450
  %v459 = vadd.f32 %v451, %v345
  %v460 = vadd.f32 %v452, %v345
  %v461 = vadd.f32 %v453, %v345
  %v462 = vadd.f32 %v454, %v345
  %v463 = vadd.f32 %v455, %v345
  %v464 = vadd.f32 %v456, %v345
  %v465 = vadd.f32 %v457, %v345
  %v466 = vadd.f32 %v458, %v345
  %v467 = vld [vmem:[%s3 + $0x6] sm:$0x1]
  %v468 = vpack.c.bf16 %v460, %v459
  %v469 = vpack.c.bf16 %v462, %v461
  %v470 = vpack.c.bf16 %v464, %v463
  %v471 = vpack.c.bf16 %v466, %v465
  %v472 = vld [vmem:[%s4] sm:$0xf]
  %v473 = vld [vmem:[%s4 + $0x4] sm:$0xf]
  %v474 = vld [vmem:[%s4 + $0x8] sm:$0xf]
  %v475 = vld [vmem:[%s4 + $0xc] sm:$0xf]
  %v476 = vlaneseq
  %v477 = vshrl.u32 %v476, 7
  %v478 = vsub.s32 0, %v477
  %v479 = vrot.slane %v467, %v478
  %v484 = vunpack.c.l.b16 %v472
  %v485 = vunpack.c.l.b16 %v473
  %v486 = vunpack.c.l.b16 %v474
  %v487 = vunpack.c.l.b16 %v475
  %v488 = vpack.c.b16 %v485, %v484
  %v489 = vpack.c.b16 %v487, %v486
  %v493 = vsel %vm55, %v468, 0
  %v496 = vsel %vm55, %v469, 0
  %v499 = vsel %vm55, %v470, 0
  %v502 = vsel %vm55, %v471, 0
  %504 = vmatprep.subr.bf16.mxu0 0
  %505 = vmatpush1.bf16.msra.mxu0 0
  %506 = vmatprep.subr.bf16.mxu0 0
  %507 = vmatpush1.bf16.msra.mxu0 0
  %508 = vmatprep.subr.bf16.mxu0 0
  %509 = vmatpush1.bf16.msra.mxu0 0
  %510 = vmatprep.subr.bf16.mxu0 0
  %511 = vmatpush1.bf16.msra.mxu0 0
  %512 = vmatprep.subr.bf16.mxu0 0
  %513 = vmatpush1.bf16.msra.mxu0 0
  %514 = vmatprep.subr.bf16.mxu0 0
  %515 = vmatpush1.bf16.msra.mxu0 0
  %516 = vmatprep.subr.bf16.mxu0 0
  %517 = vmatpush1.bf16.msra.mxu0 %v489
  %518 = vmatprep.subr.bf16.mxu0 0
  %519 = vmatpush1.bf16.msra.mxu0 %v488
  %520 = vmatprep.subr.bf16.mxu0 0
  %521 = vmatpush2.bf16.msra.mxu0 0
  %522 = vmatprep.subr.bf16.mxu0 0
  %523 = vmatpush2.bf16.msra.mxu0 0
  %524 = vmatprep.subr.bf16.mxu0 0
  %525 = vmatpush2.bf16.msra.mxu0 0
  %526 = vmatprep.subr.bf16.mxu0 0
  %527 = vmatpush2.bf16.msra.mxu0 0
  %528 = vmatprep.subr.bf16.mxu0 0
  %529 = vmatpush2.bf16.msra.mxu0 0
  %530 = vmatprep.subr.bf16.mxu0 0
  %531 = vmatpush2.bf16.msra.mxu0 0
  %532 = vmatprep.subr.bf16.mxu0 0
  %533 = vmatpush2.bf16.msra.mxu0 0
  %534 = vmatprep.subr.bf16.mxu0 0
  %535 = vmatpush2.bf16.msra.mxu0 0
  %536 = vmatprep.mubr.bf16.mxu0 0
  %537 = vmatmul.mubr.bf16.gmra.mxu0 %v493
  %v538 = vpop.f32.mrf.mxu0
  %v539 = vadd.f32 %v479, %v538
  %v540 = vpop.f32.mrf.mxu0
  %v541 = vpop.f32.mrf.mxu0
  %v542 = vadd.f32 %v479, %v541
  %v543 = vpop.f32.mrf.mxu0
  %544 = vmatprep.mubr.bf16.mxu0 0
  %545 = vmatmul.mubr.bf16.gmra.mxu0 %v496
  %v546 = vpop.f32.mrf.mxu0
  %v547 = vadd.f32 %v479, %v546
  %v548 = vpop.f32.mrf.mxu0
  %v549 = vpop.f32.mrf.mxu0
  %v550 = vadd.f32 %v479, %v549
  %v551 = vpop.f32.mrf.mxu0
  %552 = vmatprep.mubr.bf16.mxu0 0
  %553 = vmatmul.mubr.bf16.gmra.mxu0 %v499
  %v554 = vpop.f32.mrf.mxu0
  %v555 = vadd.f32 %v479, %v554
  %v556 = vpop.f32.mrf.mxu0
  %v557 = vpop.f32.mrf.mxu0
  %v558 = vadd.f32 %v479, %v557
  %v559 = vpop.f32.mrf.mxu0
  %560 = vmatprep.mubr.bf16.mxu0 0
  %561 = vmatmul.mubr.bf16.gmra.mxu0 %v502
  %v562 = vpop.f32.mrf.mxu0
  %v563 = vadd.f32 %v479, %v562
  %v564 = vpop.f32.mrf.mxu0
  %v565 = vpop.f32.mrf.mxu0
  %v566 = vadd.f32 %v479, %v565
  %v567 = vpop.f32.mrf.mxu0
  %568 = vdwg.mxu0
  %v569 = vld [vmem:[%s5] sm:$0xff]
  %v570 = vld [vmem:[%s5 + $0x8] sm:$0xff]
  %v571 = vld [vmem:[%s5 + $0x10] sm:$0xff]
  %v572 = vld [vmem:[%s5 + $0x18] sm:$0xff]
  %v573 = vld [vmem:[%s5 + $0x20] sm:$0xff]
  %v574 = vld [vmem:[%s5 + $0x28] sm:$0xff]
  %v575 = vld [vmem:[%s5 + $0x30] sm:$0xff]
  %v576 = vld [vmem:[%s5 + $0x38] sm:$0xff]
  %v577 = vmul.f32 %v539, %v569
  %v578 = vmul.f32 %v542, %v570
  %v579 = vmul.f32 %v547, %v571
  %v580 = vmul.f32 %v550, %v572
  %v581 = vmul.f32 %v555, %v573
  %v582 = vmul.f32 %v558, %v574
  %v583 = vmul.f32 %v563, %v575
  %v584 = vmul.f32 %v566, %v576
  %vm585 = vcmask 785408
  %586 = vst.msk [vmem:[#allocation2] sm:$0xff] %vm585, %v577
  %587 = vst.msk [vmem:[#allocation2 + $0x10] sm:$0xff] %vm585, %v578
  %588 = vst.msk [vmem:[#allocation2 + $0x20] sm:$0xff] %vm585, %v579
  %589 = vst.msk [vmem:[#allocation2 + $0x30] sm:$0xff] %vm585, %v580
  %590 = vst.msk [vmem:[#allocation2 + $0x40] sm:$0xff] %vm585, %v581
  %591 = vst.msk [vmem:[#allocation2 + $0x50] sm:$0xff] %vm585, %v582
  %592 = vst.msk [vmem:[#allocation2 + $0x60] sm:$0xff] %vm585, %v583
  %593 = vst.msk [vmem:[#allocation2 + $0x70] sm:$0xff] %vm585, %v584
  %v594 = vld [vmem:[#allocation2] sm:$0xff]
  %v595 = vld [vmem:[#allocation2 + $0x10] sm:$0xff]
  %v596 = vld [vmem:[#allocation2 + $0x20] sm:$0xff]
  %v597 = vld [vmem:[#allocation2 + $0x30] sm:$0xff]
  %v598 = vld [vmem:[#allocation2 + $0x40] sm:$0xff]
  %v599 = vld [vmem:[#allocation2 + $0x50] sm:$0xff]
  %v600 = vld [vmem:[#allocation2 + $0x60] sm:$0xff]
  %v601 = vld [vmem:[#allocation2 + $0x70] sm:$0xff]
  %610 = vrot.lane.b32.xlu0 %v594, 96
  %v611 = vpop.permute.xlu0 %610
  %612 = vrot.lane.b32.xlu0 %v595, 96
  %v613 = vpop.permute.xlu0 %612
  %614 = vrot.lane.b32.xlu0 %v596, 96
  %v615 = vpop.permute.xlu0 %614
  %616 = vrot.lane.b32.xlu0 %v597, 96
  %v617 = vpop.permute.xlu0 %616
  %618 = vrot.lane.b32.xlu0 %v598, 96
  %v619 = vpop.permute.xlu0 %618
  %620 = vrot.lane.b32.xlu0 %v599, 96
  %v621 = vpop.permute.xlu0 %620
  %622 = vrot.lane.b32.xlu0 %v600, 96
  %v623 = vpop.permute.xlu0 %622
  %624 = vrot.lane.b32.xlu0 %v601, 96
  %v625 = vpop.permute.xlu0 %624
  %v634 = vadd.f32 %v594, %v611
  %v635 = vadd.f32 %v595, %v613
  %v636 = vadd.f32 %v596, %v615
  %v637 = vadd.f32 %v597, %v617
  %v638 = vadd.f32 %v598, %v619
  %v639 = vadd.f32 %v599, %v621
  %v640 = vadd.f32 %v600, %v623
  %v641 = vadd.f32 %v601, %v625
  %642 = vrot.lane.b32.xlu0 %v594, 64
  %v643 = vpop.permute.xlu0 %642
  %644 = vrot.lane.b32.xlu0 %v595, 64
  %v645 = vpop.permute.xlu0 %644
  %646 = vrot.lane.b32.xlu0 %v596, 64
  %v647 = vpop.permute.xlu0 %646
  %648 = vrot.lane.b32.xlu0 %v597, 64
  %v649 = vpop.permute.xlu0 %648
  %650 = vrot.lane.b32.xlu0 %v598, 64
  %v651 = vpop.permute.xlu0 %650
  %652 = vrot.lane.b32.xlu0 %v599, 64
  %v653 = vpop.permute.xlu0 %652
  %654 = vrot.lane.b32.xlu0 %v600, 64
  %v655 = vpop.permute.xlu0 %654
  %656 = vrot.lane.b32.xlu0 %v601, 64
  %v657 = vpop.permute.xlu0 %656
  %v666 = vadd.f32 %v634, %v643
  %v667 = vadd.f32 %v635, %v645
  %v668 = vadd.f32 %v636, %v647
  %v669 = vadd.f32 %v637, %v649
  %v670 = vadd.f32 %v638, %v651
  %v671 = vadd.f32 %v639, %v653
  %v672 = vadd.f32 %v640, %v655
  %v673 = vadd.f32 %v641, %v657
  %v674 = vld [vmem:[%s6] sm:$0xff]
  %v675 = vld [vmem:[%s6 + $0x8] sm:$0xf]
  %v676 = vld [vmem:[%s6 + $0xc] sm:$0xff]
  %v677 = vld [vmem:[%s6 + $0x14] sm:$0xf]
  %v678 = vld [vmem:[%s6 + $0x18] sm:$0xff]
  %v679 = vld [vmem:[%s6 + $0x20] sm:$0xf]
  %v680 = vld [vmem:[%s6 + $0x24] sm:$0xff]
  %v681 = vld [vmem:[%s6 + $0x2c] sm:$0xf]
  %v682 = vld [vmem:[%s6 + $0x30] sm:$0xff]
  %v683 = vld [vmem:[%s6 + $0x38] sm:$0xf]
  %v684 = vld [vmem:[%s6 + $0x3c] sm:$0xff]
  %v685 = vld [vmem:[%s6 + $0x44] sm:$0xf]
  %v686 = vld [vmem:[%s6 + $0x48] sm:$0xff]
  %v687 = vld [vmem:[%s6 + $0x50] sm:$0xf]
  %v688 = vld [vmem:[%s6 + $0x54] sm:$0xff]
  %v689 = vld [vmem:[%s6 + $0x5c] sm:$0xf]
  %v690 = vpack.c.bf16 %v667, %v666
  %v691 = vpack.c.bf16 %v669, %v668
  %v692 = vpack.c.bf16 %v671, %v670
  %v693 = vpack.c.bf16 %v673, %v672
  %v694 = vld [vmem:[%s7] sm:$0xff]
  %v695 = vld [vmem:[%s7 + $0x8] sm:$0xff]
  %v696 = vld [vmem:[%s7 + $0x10] sm:$0xff]
  %v697 = vld [vmem:[%s7 + $0x18] sm:$0xff]
  %v702 = vunpack.c.l.b16 %v694
  %v703 = vunpack.c.h.b16 %v694
  %v704 = vunpack.c.l.b16 %v695
  %v705 = vunpack.c.h.b16 %v695
  %v706 = vunpack.c.l.b16 %v696
  %v707 = vunpack.c.h.b16 %v696
  %v708 = vunpack.c.l.b16 %v697
  %v709 = vunpack.c.h.b16 %v697
  %v710 = vpack.c.b16 %v704, %v702
  %v711 = vpack.c.b16 %v705, %v703
  %v712 = vpack.c.b16 %v708, %v706
  %v713 = vpack.c.b16 %v709, %v707
  %v719 = vsel %vm55, %v690, 0
  %v722 = vsel %vm55, %v691, 0
  %v725 = vsel %vm55, %v692, 0
  %v728 = vsel %vm55, %v693, 0
  %730 = vmatprep.subr.bf16.mxu0 0
  %731 = vmatpush1.bf16.msra.mxu0 0
  %732 = vmatprep.subr.bf16.mxu0 0
  %733 = vmatpush1.bf16.msra.mxu0 0
  %734 = vmatprep.subr.bf16.mxu0 0
  %735 = vmatpush1.bf16.msra.mxu0 0
  %736 = vmatprep.subr.bf16.mxu0 0
  %737 = vmatpush1.bf16.msra.mxu0 0
  %738 = vmatprep.subr.bf16.mxu0 0
  %739 = vmatpush1.bf16.msra.mxu0 0
  %740 = vmatprep.subr.bf16.mxu0 0
  %741 = vmatpush1.bf16.msra.mxu0 0
  %742 = vmatprep.subr.bf16.mxu0 %v713
  %743 = vmatpush1.bf16.msra.mxu0 %v712
  %744 = vmatprep.subr.bf16.mxu0 %v711
  %745 = vmatpush1.bf16.msra.mxu0 %v710
  %746 = vmatprep.subr.bf16.mxu0 0
  %747 = vmatpush2.bf16.msra.mxu0 0
  %748 = vmatprep.subr.bf16.mxu0 0
  %749 = vmatpush2.bf16.msra.mxu0 0
  %750 = vmatprep.subr.bf16.mxu0 0
  %751 = vmatpush2.bf16.msra.mxu0 0
  %752 = vmatprep.subr.bf16.mxu0 0
  %753 = vmatpush2.bf16.msra.mxu0 0
  %754 = vmatprep.subr.bf16.mxu0 0
  %755 = vmatpush2.bf16.msra.mxu0 0
  %756 = vmatprep.subr.bf16.mxu0 0
  %757 = vmatpush2.bf16.msra.mxu0 0
  %758 = vmatprep.subr.bf16.mxu0 0
  %759 = vmatpush2.bf16.msra.mxu0 0
  %760 = vmatprep.subr.bf16.mxu0 0
  %761 = vmatpush2.bf16.msra.mxu0 0
  %762 = vmatprep.mubr.bf16.mxu0 0
  %763 = vmatmul.mubr.bf16.gmra.mxu0 %v719
  %v764 = vpop.f32.mrf.mxu0
  %v765 = vadd.f32 0.0, %v764
  %v766 = vpop.f32.mrf.mxu0
  %v767 = vadd.f32 0.0, %v766
  %v768 = vpop.f32.mrf.mxu0
  %v769 = vadd.f32 0.0, %v768
  %v770 = vpop.f32.mrf.mxu0
  %v771 = vadd.f32 0.0, %v770
  %772 = vmatprep.mubr.bf16.mxu0 0
  %773 = vmatmul.mubr.bf16.gmra.mxu0 %v722
  %v774 = vpop.f32.mrf.mxu0
  %v775 = vadd.f32 0.0, %v774
  %v776 = vpop.f32.mrf.mxu0
  %v777 = vadd.f32 0.0, %v776
  %v778 = vpop.f32.mrf.mxu0
  %v779 = vadd.f32 0.0, %v778
  %v780 = vpop.f32.mrf.mxu0
  %v781 = vadd.f32 0.0, %v780
  %782 = vmatprep.mubr.bf16.mxu0 0
  %783 = vmatmul.mubr.bf16.gmra.mxu0 %v725
  %v784 = vpop.f32.mrf.mxu0
  %v785 = vadd.f32 0.0, %v784
  %v786 = vpop.f32.mrf.mxu0
  %v787 = vadd.f32 0.0, %v786
  %v788 = vpop.f32.mrf.mxu0
  %v789 = vadd.f32 0.0, %v788
  %v790 = vpop.f32.mrf.mxu0
  %v791 = vadd.f32 0.0, %v790
  %792 = vmatprep.mubr.bf16.mxu0 0
  %793 = vmatmul.mubr.bf16.gmra.mxu0 %v728
  %v794 = vpop.f32.mrf.mxu0
  %v795 = vadd.f32 0.0, %v794
  %v796 = vpop.f32.mrf.mxu0
  %v797 = vadd.f32 0.0, %v796
  %v798 = vpop.f32.mrf.mxu0
  %v799 = vadd.f32 0.0, %v798
  %v800 = vpop.f32.mrf.mxu0
  %v801 = vadd.f32 0.0, %v800
  %802 = vdwg.mxu0
  %803 = vst [vmem:[#allocation2] sm:$0xff] %v765
  %vm804 = vcmask 523264
  %805 = vst.msk [vmem:[#allocation2 + $0x8] sm:$0xff] %vm804, %v767
  %806 = vst [vmem:[#allocation2 + $0x10] sm:$0xff] %v769
  %807 = vst.msk [vmem:[#allocation2 + $0x18] sm:$0xff] %vm804, %v771
  %808 = vst [vmem:[#allocation2 + $0x20] sm:$0xff] %v775
  %809 = vst.msk [vmem:[#allocation2 + $0x28] sm:$0xff] %vm804, %v777
  %810 = vst [vmem:[#allocation2 + $0x30] sm:$0xff] %v779
  %811 = vst.msk [vmem:[#allocation2 + $0x38] sm:$0xff] %vm804, %v781
  %812 = vst [vmem:[#allocation2 + $0x40] sm:$0xff] %v785
  %813 = vst.msk [vmem:[#allocation2 + $0x48] sm:$0xff] %vm804, %v787
  %814 = vst [vmem:[#allocation2 + $0x50] sm:$0xff] %v789
  %815 = vst.msk [vmem:[#allocation2 + $0x58] sm:$0xff] %vm804, %v791
  %816 = vst [vmem:[#allocation2 + $0x60] sm:$0xff] %v795
  %817 = vst.msk [vmem:[#allocation2 + $0x68] sm:$0xff] %vm804, %v797
  %818 = vst [vmem:[#allocation2 + $0x70] sm:$0xff] %v799
  %819 = vst.msk [vmem:[#allocation2 + $0x78] sm:$0xff] %vm804, %v801
  %v820 = vld [vmem:[#allocation2] sm:$0xff]
  %v821 = vld [vmem:[#allocation2 + $0x10] sm:$0xff]
  %v822 = vld [vmem:[#allocation2 + $0x20] sm:$0xff]
  %v823 = vld [vmem:[#allocation2 + $0x30] sm:$0xff]
  %v824 = vld [vmem:[#allocation2 + $0x40] sm:$0xff]
  %v825 = vld [vmem:[#allocation2 + $0x50] sm:$0xff]
  %v826 = vld [vmem:[#allocation2 + $0x60] sm:$0xff]
  %v827 = vld [vmem:[#allocation2 + $0x70] sm:$0xff]
  %v828 = vpack.c.bf16 %v821, %v820
  %v829 = vpack.c.bf16 %v823, %v822
  %v830 = vpack.c.bf16 %v825, %v824
  %v831 = vpack.c.bf16 %v827, %v826
  %v836 = vunpack.c.l.b16 %v828
  %v837 = vunpack.c.h.b16 %v828
  %v838 = vunpack.c.l.b16 %v829
  %v839 = vunpack.c.h.b16 %v829
  %v840 = vunpack.c.l.b16 %v830
  %v841 = vunpack.c.h.b16 %v830
  %v842 = vunpack.c.l.b16 %v831
  %v843 = vunpack.c.h.b16 %v831
  %v844 = vpack.c.b16 %v836, %v836
  %v845 = vpack.c.b16 %v837, %v837
  %v846 = vpack.c.b16 %v838, %v838
  %v847 = vpack.c.b16 %v839, %v839
  %v848 = vpack.c.b16 %v840, %v840
  %v849 = vpack.c.b16 %v841, %v841
  %v850 = vpack.c.b16 %v842, %v842
  %v851 = vpack.c.b16 %v843, %v843
  %vm860 = vcmask 257024
  %861 = vst.msk [vmem:[#allocation3] sm:$0xf] %vm860, %v844
  %862 = vst.msk [vmem:[#allocation3 + $0x4] sm:$0xf] %vm860, %v845
  %863 = vst.msk [vmem:[#allocation3 + $0x8] sm:$0xf] %vm860, %v846
  %864 = vst.msk [vmem:[#allocation3 + $0xc] sm:$0xf] %vm860, %v847
  %865 = vst.msk [vmem:[#allocation3 + $0x10] sm:$0xf] %vm860, %v848
  %866 = vst.msk [vmem:[#allocation3 + $0x14] sm:$0xf] %vm860, %v849
  %867 = vst.msk [vmem:[#allocation3 + $0x18] sm:$0xf] %vm860, %v850
  %868 = vst.msk [vmem:[#allocation3 + $0x1c] sm:$0xf] %vm860, %v851
  %v869 = vld [vmem:[#allocation2] sm:$0xff]
  %v870 = vld [vmem:[#allocation2 + $0x10] sm:$0xff]
  %v871 = vld [vmem:[#allocation2 + $0x20] sm:$0xff]
  %v872 = vld [vmem:[#allocation2 + $0x30] sm:$0xff]
  %v873 = vld [vmem:[#allocation2 + $0x40] sm:$0xff]
  %v874 = vld [vmem:[#allocation2 + $0x50] sm:$0xff]
  %v875 = vld [vmem:[#allocation2 + $0x60] sm:$0xff]
  %v876 = vld [vmem:[#allocation2 + $0x70] sm:$0xff]
  %v877 = vpack.c.bf16 %v870, %v869
  %v878 = vpack.c.bf16 %v872, %v871
  %v879 = vpack.c.bf16 %v874, %v873
  %v880 = vpack.c.bf16 %v876, %v875
  %v885 = vunpack.c.l.b16 %v877
  %v886 = vunpack.c.h.b16 %v877
  %v887 = vunpack.c.l.b16 %v878
  %v888 = vunpack.c.h.b16 %v878
  %v889 = vunpack.c.l.b16 %v879
  %v890 = vunpack.c.h.b16 %v879
  %v891 = vunpack.c.l.b16 %v880
  %v892 = vunpack.c.h.b16 %v880
  %v893 = vpack.c.b16 %v885, %v885
  %v894 = vpack.c.b16 %v886, %v886
  %v895 = vpack.c.b16 %v887, %v887
  %v896 = vpack.c.b16 %v888, %v888
  %v897 = vpack.c.b16 %v889, %v889
  %v898 = vpack.c.b16 %v890, %v890
  %v899 = vpack.c.b16 %v891, %v891
  %v900 = vpack.c.b16 %v892, %v892
  %901 = vrot.lane.b32.xlu0 %v893, 96
  %v902 = vpop.permute.xlu0 %901
  %903 = vrot.lane.b32.xlu0 %v894, 96
  %v904 = vpop.permute.xlu0 %903
  %905 = vrot.lane.b32.xlu0 %v895, 96
  %v906 = vpop.permute.xlu0 %905
  %907 = vrot.lane.b32.xlu0 %v896, 96
  %v908 = vpop.permute.xlu0 %907
  %909 = vrot.lane.b32.xlu0 %v897, 96
  %v910 = vpop.permute.xlu0 %909
  %911 = vrot.lane.b32.xlu0 %v898, 96
  %v912 = vpop.permute.xlu0 %911
  %913 = vrot.lane.b32.xlu0 %v899, 96
  %v914 = vpop.permute.xlu0 %913
  %915 = vrot.lane.b32.xlu0 %v900, 96
  %v916 = vpop.permute.xlu0 %915
  %925 = vst.msk [vmem:[#allocation3 + $0x20] sm:$0xf] %vm860, %v902
  %926 = vst.msk [vmem:[#allocation3 + $0x24] sm:$0xf] %vm860, %v904
  %927 = vst.msk [vmem:[#allocation3 + $0x28] sm:$0xf] %vm860, %v906
  %928 = vst.msk [vmem:[#allocation3 + $0x2c] sm:$0xf] %vm860, %v908
  %929 = vst.msk [vmem:[#allocation3 + $0x30] sm:$0xf] %vm860, %v910
  %930 = vst.msk [vmem:[#allocation3 + $0x34] sm:$0xf] %vm860, %v912
  %931 = vst.msk [vmem:[#allocation3 + $0x38] sm:$0xf] %vm860, %v914
  %932 = vst.msk [vmem:[#allocation3 + $0x3c] sm:$0xf] %vm860, %v916
  %v933 = vld [vmem:[#allocation2] sm:$0xff]
  %v934 = vld [vmem:[#allocation2 + $0x10] sm:$0xff]
  %v935 = vld [vmem:[#allocation2 + $0x20] sm:$0xff]
  %v936 = vld [vmem:[#allocation2 + $0x30] sm:$0xff]
  %v937 = vld [vmem:[#allocation2 + $0x40] sm:$0xff]
  %v938 = vld [vmem:[#allocation2 + $0x50] sm:$0xff]
  %v939 = vld [vmem:[#allocation2 + $0x60] sm:$0xff]
  %v940 = vld [vmem:[#allocation2 + $0x70] sm:$0xff]
  %v941 = vpack.c.bf16 %v934, %v933
  %v942 = vpack.c.bf16 %v936, %v935
  %v943 = vpack.c.bf16 %v938, %v937
  %v944 = vpack.c.bf16 %v940, %v939
  %v949 = vunpack.c.l.b16 %v941
  %v950 = vunpack.c.h.b16 %v941
  %v951 = vunpack.c.l.b16 %v942
  %v952 = vunpack.c.h.b16 %v942
  %v953 = vunpack.c.l.b16 %v943
  %v954 = vunpack.c.h.b16 %v943
  %v955 = vunpack.c.l.b16 %v944
  %v956 = vunpack.c.h.b16 %v944
  %v957 = vpack.c.b16 %v949, %v949
  %v958 = vpack.c.b16 %v950, %v950
  %v959 = vpack.c.b16 %v951, %v951
  %v960 = vpack.c.b16 %v952, %v952
  %v961 = vpack.c.b16 %v953, %v953
  %v962 = vpack.c.b16 %v954, %v954
  %v963 = vpack.c.b16 %v955, %v955
  %v964 = vpack.c.b16 %v956, %v956
  %965 = vrot.lane.b32.xlu0 %v957, 64
  %v966 = vpop.permute.xlu0 %965
  %967 = vrot.lane.b32.xlu0 %v958, 64
  %v968 = vpop.permute.xlu0 %967
  %969 = vrot.lane.b32.xlu0 %v959, 64
  %v970 = vpop.permute.xlu0 %969
  %971 = vrot.lane.b32.xlu0 %v960, 64
  %v972 = vpop.permute.xlu0 %971
  %973 = vrot.lane.b32.xlu0 %v961, 64
  %v974 = vpop.permute.xlu0 %973
  %975 = vrot.lane.b32.xlu0 %v962, 64
  %v976 = vpop.permute.xlu0 %975
  %977 = vrot.lane.b32.xlu0 %v963, 64
  %v978 = vpop.permute.xlu0 %977
  %979 = vrot.lane.b32.xlu0 %v964, 64
  %v980 = vpop.permute.xlu0 %979
  %989 = vst.msk [vmem:[#allocation3 + $0x40] sm:$0xf] %vm860, %v966
  %990 = vst.msk [vmem:[#allocation3 + $0x44] sm:$0xf] %vm860, %v968
  %991 = vst.msk [vmem:[#allocation3 + $0x48] sm:$0xf] %vm860, %v970
  %992 = vst.msk [vmem:[#allocation3 + $0x4c] sm:$0xf] %vm860, %v972
  %993 = vst.msk [vmem:[#allocation3 + $0x50] sm:$0xf] %vm860, %v974
  %994 = vst.msk [vmem:[#allocation3 + $0x54] sm:$0xf] %vm860, %v976
  %995 = vst.msk [vmem:[#allocation3 + $0x58] sm:$0xf] %vm860, %v978
  %996 = vst.msk [vmem:[#allocation3 + $0x5c] sm:$0xf] %vm860, %v980
  %v997 = vld [vmem:[#allocation2] sm:$0xff]
  %v998 = vld [vmem:[#allocation2 + $0x10] sm:$0xff]
  %v999 = vld [vmem:[#allocation2 + $0x20] sm:$0xff]
  %v1000 = vld [vmem:[#allocation2 + $0x30] sm:$0xff]
  %v1001 = vld [vmem:[#allocation2 + $0x40] sm:$0xff]
  %v1002 = vld [vmem:[#allocation2 + $0x50] sm:$0xff]
  %v1003 = vld [vmem:[#allocation2 + $0x60] sm:$0xff]
  %v1004 = vld [vmem:[#allocation2 + $0x70] sm:$0xff]
  %v1005 = vpack.c.bf16 %v998, %v997
  %v1006 = vpack.c.bf16 %v1000, %v999
  %v1007 = vpack.c.bf16 %v1002, %v1001
  %v1008 = vpack.c.bf16 %v1004, %v1003
  %v1013 = vunpack.c.l.b16 %v1005
  %v1014 = vunpack.c.h.b16 %v1005
  %v1015 = vunpack.c.l.b16 %v1006
  %v1016 = vunpack.c.h.b16 %v1006
  %v1017 = vunpack.c.l.b16 %v1007
  %v1018 = vunpack.c.h.b16 %v1007
  %v1019 = vunpack.c.l.b16 %v1008
  %v1020 = vunpack.c.h.b16 %v1008
  %v1021 = vpack.c.b16 %v1013, %v1013
  %v1022 = vpack.c.b16 %v1014, %v1014
  %v1023 = vpack.c.b16 %v1015, %v1015
  %v1024 = vpack.c.b16 %v1016, %v1016
  %v1025 = vpack.c.b16 %v1017, %v1017
  %v1026 = vpack.c.b16 %v1018, %v1018
  %v1027 = vpack.c.b16 %v1019, %v1019
  %v1028 = vpack.c.b16 %v1020, %v1020
  %1029 = vrot.lane.b32.xlu0 %v1021, 32
  %v1030 = vpop.permute.xlu0 %1029
  %1031 = vrot.lane.b32.xlu0 %v1022, 32
  %v1032 = vpop.permute.xlu0 %1031
  %1033 = vrot.lane.b32.xlu0 %v1023, 32
  %v1034 = vpop.permute.xlu0 %1033
  %1035 = vrot.lane.b32.xlu0 %v1024, 32
  %v1036 = vpop.permute.xlu0 %1035
  %1037 = vrot.lane.b32.xlu0 %v1025, 32
  %v1038 = vpop.permute.xlu0 %1037
  %1039 = vrot.lane.b32.xlu0 %v1026, 32
  %v1040 = vpop.permute.xlu0 %1039
  %1041 = vrot.lane.b32.xlu0 %v1027, 32
  %v1042 = vpop.permute.xlu0 %1041
  %1043 = vrot.lane.b32.xlu0 %v1028, 32
  %v1044 = vpop.permute.xlu0 %1043
  %1053 = vst.msk [vmem:[#allocation3 + $0x60] sm:$0xf] %vm860, %v1030
  %1054 = vst.msk [vmem:[#allocation3 + $0x64] sm:$0xf] %vm860, %v1032
  %1055 = vst.msk [vmem:[#allocation3 + $0x68] sm:$0xf] %vm860, %v1034
  %1056 = vst.msk [vmem:[#allocation3 + $0x6c] sm:$0xf] %vm860, %v1036
  %1057 = vst.msk [vmem:[#allocation3 + $0x70] sm:$0xf] %vm860, %v1038
  %1058 = vst.msk [vmem:[#allocation3 + $0x74] sm:$0xf] %vm860, %v1040
  %1059 = vst.msk [vmem:[#allocation3 + $0x78] sm:$0xf] %vm860, %v1042
  %1060 = vst.msk [vmem:[#allocation3 + $0x7c] sm:$0xf] %vm860, %v1044
  %v1061 = vld [vmem:[#allocation2 + $0x8] sm:$0xff]
  %v1062 = vld [vmem:[#allocation2 + $0x18] sm:$0xff]
  %v1063 = vld [vmem:[#allocation2 + $0x28] sm:$0xff]
  %v1064 = vld [vmem:[#allocation2 + $0x38] sm:$0xff]
  %v1065 = vld [vmem:[#allocation2 + $0x48] sm:$0xff]
  %v1066 = vld [vmem:[#allocation2 + $0x58] sm:$0xff]
  %v1067 = vld [vmem:[#allocation2 + $0x68] sm:$0xff]
  %v1068 = vld [vmem:[#allocation2 + $0x78] sm:$0xff]
  %v1069 = vpack.c.bf16 %v1062, %v1061
  %v1070 = vpack.c.bf16 %v1064, %v1063
  %v1071 = vpack.c.bf16 %v1066, %v1065
  %v1072 = vpack.c.bf16 %v1068, %v1067
  %v1077 = vunpack.c.l.b16 %v1069
  %v1078 = vunpack.c.h.b16 %v1069
  %v1079 = vunpack.c.l.b16 %v1070
  %v1080 = vunpack.c.h.b16 %v1070
  %v1081 = vunpack.c.l.b16 %v1071
  %v1082 = vunpack.c.h.b16 %v1071
  %v1083 = vunpack.c.l.b16 %v1072
  %v1084 = vunpack.c.h.b16 %v1072
  %v1085 = vpack.c.b16 %v1077, %v1077
  %v1086 = vpack.c.b16 %v1078, %v1078
  %v1087 = vpack.c.b16 %v1079, %v1079
  %v1088 = vpack.c.b16 %v1080, %v1080
  %v1089 = vpack.c.b16 %v1081, %v1081
  %v1090 = vpack.c.b16 %v1082, %v1082
  %v1091 = vpack.c.b16 %v1083, %v1083
  %v1092 = vpack.c.b16 %v1084, %v1084
  %1101 = vst.msk [vmem:[#allocation3 + $0x80] sm:$0xf] %vm860, %v1085
  %1102 = vst.msk [vmem:[#allocation3 + $0x84] sm:$0xf] %vm860, %v1086
  %1103 = vst.msk [vmem:[#allocation3 + $0x88] sm:$0xf] %vm860, %v1087
  %1104 = vst.msk [vmem:[#allocation3 + $0x8c] sm:$0xf] %vm860, %v1088
  %1105 = vst.msk [vmem:[#allocation3 + $0x90] sm:$0xf] %vm860, %v1089
  %1106 = vst.msk [vmem:[#allocation3 + $0x94] sm:$0xf] %vm860, %v1090
  %1107 = vst.msk [vmem:[#allocation3 + $0x98] sm:$0xf] %vm860, %v1091
  %1108 = vst.msk [vmem:[#allocation3 + $0x9c] sm:$0xf] %vm860, %v1092
  %v1109 = vld [vmem:[#allocation2 + $0x8] sm:$0xff]
  %v1110 = vld [vmem:[#allocation2 + $0x18] sm:$0xff]
  %v1111 = vld [vmem:[#allocation2 + $0x28] sm:$0xff]
  %v1112 = vld [vmem:[#allocation2 + $0x38] sm:$0xff]
  %v1113 = vld [vmem:[#allocation2 + $0x48] sm:$0xff]
  %v1114 = vld [vmem:[#allocation2 + $0x58] sm:$0xff]
  %v1115 = vld [vmem:[#allocation2 + $0x68] sm:$0xff]
  %v1116 = vld [vmem:[#allocation2 + $0x78] sm:$0xff]
  %v1117 = vpack.c.bf16 %v1110, %v1109
  %v1118 = vpack.c.bf16 %v1112, %v1111
  %v1119 = vpack.c.bf16 %v1114, %v1113
  %v1120 = vpack.c.bf16 %v1116, %v1115
  %v1125 = vunpack.c.l.b16 %v1117
  %v1126 = vunpack.c.h.b16 %v1117
  %v1127 = vunpack.c.l.b16 %v1118
  %v1128 = vunpack.c.h.b16 %v1118
  %v1129 = vunpack.c.l.b16 %v1119
  %v1130 = vunpack.c.h.b16 %v1119
  %v1131 = vunpack.c.l.b16 %v1120
  %v1132 = vunpack.c.h.b16 %v1120
  %v1133 = vpack.c.b16 %v1125, %v1125
  %v1134 = vpack.c.b16 %v1126, %v1126
  %v1135 = vpack.c.b16 %v1127, %v1127
  %v1136 = vpack.c.b16 %v1128, %v1128
  %v1137 = vpack.c.b16 %v1129, %v1129
  %v1138 = vpack.c.b16 %v1130, %v1130
  %v1139 = vpack.c.b16 %v1131, %v1131
  %v1140 = vpack.c.b16 %v1132, %v1132
  %1141 = vrot.lane.b32.xlu0 %v1133, 96
  %v1142 = vpop.permute.xlu0 %1141
  %1143 = vrot.lane.b32.xlu0 %v1134, 96
  %v1144 = vpop.permute.xlu0 %1143
  %1145 = vrot.lane.b32.xlu0 %v1135, 96
  %v1146 = vpop.permute.xlu0 %1145
  %1147 = vrot.lane.b32.xlu0 %v1136, 96
  %v1148 = vpop.permute.xlu0 %1147
  %1149 = vrot.lane.b32.xlu0 %v1137, 96
  %v1150 = vpop.permute.xlu0 %1149
  %1151 = vrot.lane.b32.xlu0 %v1138, 96
  %v1152 = vpop.permute.xlu0 %1151
  %1153 = vrot.lane.b32.xlu0 %v1139, 96
  %v1154 = vpop.permute.xlu0 %1153
  %1155 = vrot.lane.b32.xlu0 %v1140, 96
  %v1156 = vpop.permute.xlu0 %1155
  %1165 = vst.msk [vmem:[#allocation3 + $0xa0] sm:$0xf] %vm860, %v1142
  %1166 = vst.msk [vmem:[#allocation3 + $0xa4] sm:$0xf] %vm860, %v1144
  %1167 = vst.msk [vmem:[#allocation3 + $0xa8] sm:$0xf] %vm860, %v1146
  %1168 = vst.msk [vmem:[#allocation3 + $0xac] sm:$0xf] %vm860, %v1148
  %1169 = vst.msk [vmem:[#allocation3 + $0xb0] sm:$0xf] %vm860, %v1150
  %1170 = vst.msk [vmem:[#allocation3 + $0xb4] sm:$0xf] %vm860, %v1152
  %1171 = vst.msk [vmem:[#allocation3 + $0xb8] sm:$0xf] %vm860, %v1154
  %1172 = vst.msk [vmem:[#allocation3 + $0xbc] sm:$0xf] %vm860, %v1156
  %v1173 = vld [vmem:[#allocation3] sm:$0xf]
  %v1174 = vld [vmem:[#allocation3 + $0x4] sm:$0xf]
  %v1175 = vld [vmem:[#allocation3 + $0x8] sm:$0xf]
  %v1176 = vld [vmem:[#allocation3 + $0xc] sm:$0xf]
  %v1177 = vld [vmem:[#allocation3 + $0x10] sm:$0xf]
  %v1178 = vld [vmem:[#allocation3 + $0x14] sm:$0xf]
  %v1179 = vld [vmem:[#allocation3 + $0x18] sm:$0xf]
  %v1180 = vld [vmem:[#allocation3 + $0x1c] sm:$0xf]
  %v1181 = vld [vmem:[#allocation3 + $0x20] sm:$0xf]
  %v1182 = vld [vmem:[#allocation3 + $0x24] sm:$0xf]
  %v1183 = vld [vmem:[#allocation3 + $0x28] sm:$0xf]
  %v1184 = vld [vmem:[#allocation3 + $0x2c] sm:$0xf]
  %v1185 = vld [vmem:[#allocation3 + $0x30] sm:$0xf]
  %v1186 = vld [vmem:[#allocation3 + $0x34] sm:$0xf]
  %v1187 = vld [vmem:[#allocation3 + $0x38] sm:$0xf]
  %v1188 = vld [vmem:[#allocation3 + $0x3c] sm:$0xf]
  %v1189 = vld [vmem:[#allocation3 + $0x40] sm:$0xf]
  %v1190 = vld [vmem:[#allocation3 + $0x44] sm:$0xf]
  %v1191 = vld [vmem:[#allocation3 + $0x48] sm:$0xf]
  %v1192 = vld [vmem:[#allocation3 + $0x4c] sm:$0xf]
  %v1193 = vld [vmem:[#allocation3 + $0x50] sm:$0xf]
  %v1194 = vld [vmem:[#allocation3 + $0x54] sm:$0xf]
  %v1195 = vld [vmem:[#allocation3 + $0x58] sm:$0xf]
  %v1196 = vld [vmem:[#allocation3 + $0x5c] sm:$0xf]
  %v1197 = vld [vmem:[#allocation3 + $0x60] sm:$0xf]
  %v1198 = vld [vmem:[#allocation3 + $0x64] sm:$0xf]
  %v1199 = vld [vmem:[#allocation3 + $0x68] sm:$0xf]
  %v1200 = vld [vmem:[#allocation3 + $0x6c] sm:$0xf]
  %v1201 = vld [vmem:[#allocation3 + $0x70] sm:$0xf]
  %v1202 = vld [vmem:[#allocation3 + $0x74] sm:$0xf]
  %v1203 = vld [vmem:[#allocation3 + $0x78] sm:$0xf]
  %v1204 = vld [vmem:[#allocation3 + $0x7c] sm:$0xf]
  %v1205 = vld [vmem:[#allocation3 + $0x80] sm:$0xf]
  %v1206 = vld [vmem:[#allocation3 + $0x84] sm:$0xf]
  %v1207 = vld [vmem:[#allocation3 + $0x88] sm:$0xf]
  %v1208 = vld [vmem:[#allocation3 + $0x8c] sm:$0xf]
  %v1209 = vld [vmem:[#allocation3 + $0x90] sm:$0xf]
  %v1210 = vld [vmem:[#allocation3 + $0x94] sm:$0xf]
  %v1211 = vld [vmem:[#allocation3 + $0x98] sm:$0xf]
  %v1212 = vld [vmem:[#allocation3 + $0x9c] sm:$0xf]
  %v1213 = vld [vmem:[#allocation3 + $0xa0] sm:$0xf]
  %v1214 = vld [vmem:[#allocation3 + $0xa4] sm:$0xf]
  %v1215 = vld [vmem:[#allocation3 + $0xa8] sm:$0xf]
  %v1216 = vld [vmem:[#allocation3 + $0xac] sm:$0xf]
  %v1217 = vld [vmem:[#allocation3 + $0xb0] sm:$0xf]
  %v1218 = vld [vmem:[#allocation3 + $0xb4] sm:$0xf]
  %v1219 = vld [vmem:[#allocation3 + $0xb8] sm:$0xf]
  %v1220 = vld [vmem:[#allocation3 + $0xbc] sm:$0xf]
  %v1221 = vld [vmem:[%s3 + $0x8] sm:$0x1]
  %v1222 = vlaneseq
  %v1223 = vshrl.u32 %v1222, 7
  %v1224 = vsub.s32 0, %v1223
  %v1225 = vrot.slane %v1221, %v1224
  %v1242 = vunpack.c.l.b16 %v674
  %v1243 = vunpack.c.h.b16 %v674
  %v1244 = vunpack.c.l.b16 %v675
  %v1245 = vunpack.c.l.b16 %v676
  %v1246 = vunpack.c.h.b16 %v676
  %v1247 = vunpack.c.l.b16 %v677
  %v1248 = vunpack.c.l.b16 %v678
  %v1249 = vunpack.c.h.b16 %v678
  %v1250 = vunpack.c.l.b16 %v679
  %v1251 = vunpack.c.l.b16 %v680
  %v1252 = vunpack.c.h.b16 %v680
  %v1253 = vunpack.c.l.b16 %v681
  %v1254 = vunpack.c.l.b16 %v682
  %v1255 = vunpack.c.h.b16 %v682
  %v1256 = vunpack.c.l.b16 %v683
  %v1257 = vunpack.c.l.b16 %v684
  %v1258 = vunpack.c.h.b16 %v684
  %v1259 = vunpack.c.l.b16 %v685
  %v1260 = vunpack.c.l.b16 %v686
  %v1261 = vunpack.c.h.b16 %v686
  %v1262 = vunpack.c.l.b16 %v687
  %v1263 = vunpack.c.l.b16 %v688
  %v1264 = vunpack.c.h.b16 %v688
  %v1265 = vunpack.c.l.b16 %v689
  %v1266 = vpack.c.b16 %v1245, %v1242
  %v1267 = vpack.c.b16 %v1246, %v1243
  %v1268 = vpack.c.b16 %v1247, %v1244
  %v1269 = vpack.c.b16 %v1251, %v1248
  %v1270 = vpack.c.b16 %v1252, %v1249
  %v1271 = vpack.c.b16 %v1253, %v1250
  %v1272 = vpack.c.b16 %v1257, %v1254
  %v1273 = vpack.c.b16 %v1258, %v1255
  %v1274 = vpack.c.b16 %v1259, %v1256
  %v1275 = vpack.c.b16 %v1263, %v1260
  %v1276 = vpack.c.b16 %v1264, %v1261
  %v1277 = vpack.c.b16 %v1265, %v1262
  %v1338 = vunpack.c.l.b16 %v1173
  %v1339 = vunpack.c.l.b16 %v1174
  %v1340 = vunpack.c.l.b16 %v1175
  %v1341 = vunpack.c.l.b16 %v1176
  %v1342 = vunpack.c.l.b16 %v1177
  %v1343 = vunpack.c.l.b16 %v1178
  %v1344 = vunpack.c.l.b16 %v1179
  %v1345 = vunpack.c.l.b16 %v1180
  %v1346 = vunpack.c.l.b16 %v1181
  %v1347 = vunpack.c.l.b16 %v1182
  %v1348 = vunpack.c.l.b16 %v1183
  %v1349 = vunpack.c.l.b16 %v1184
  %v1350 = vunpack.c.l.b16 %v1185
  %v1351 = vunpack.c.l.b16 %v1186
  %v1352 = vunpack.c.l.b16 %v1187
  %v1353 = vunpack.c.l.b16 %v1188
  %v1354 = vunpack.c.l.b16 %v1189
  %v1355 = vunpack.c.l.b16 %v1190
  %v1356 = vunpack.c.l.b16 %v1191
  %v1357 = vunpack.c.l.b16 %v1192
  %v1358 = vunpack.c.l.b16 %v1193
  %v1359 = vunpack.c.l.b16 %v1194
  %v1360 = vunpack.c.l.b16 %v1195
  %v1361 = vunpack.c.l.b16 %v1196
  %v1362 = vunpack.c.l.b16 %v1197
  %v1363 = vunpack.c.l.b16 %v1198
  %v1364 = vunpack.c.l.b16 %v1199
  %v1365 = vunpack.c.l.b16 %v1200
  %v1366 = vunpack.c.l.b16 %v1201
  %v1367 = vunpack.c.l.b16 %v1202
  %v1368 = vunpack.c.l.b16 %v1203
  %v1369 = vunpack.c.l.b16 %v1204
  %v1370 = vunpack.c.l.b16 %v1205
  %v1371 = vunpack.c.l.b16 %v1206
  %v1372 = vunpack.c.l.b16 %v1207
  %v1373 = vunpack.c.l.b16 %v1208
  %v1374 = vunpack.c.l.b16 %v1209
  %v1375 = vunpack.c.l.b16 %v1210
  %v1376 = vunpack.c.l.b16 %v1211
  %v1377 = vunpack.c.l.b16 %v1212
  %v1378 = vunpack.c.l.b16 %v1213
  %v1379 = vunpack.c.l.b16 %v1214
  %v1380 = vunpack.c.l.b16 %v1215
  %v1381 = vunpack.c.l.b16 %v1216
  %v1382 = vunpack.c.l.b16 %v1217
  %v1383 = vunpack.c.l.b16 %v1218
  %v1384 = vunpack.c.l.b16 %v1219
  %v1385 = vunpack.c.l.b16 %v1220
  %v1386 = vpack.c.b16 %v1339, %v1338
  %v1387 = vpack.c.b16 %v1341, %v1340
  %v1388 = vpack.c.b16 %v1343, %v1342
  %v1389 = vpack.c.b16 %v1345, %v1344
  %v1390 = vpack.c.b16 %v1347, %v1346
  %v1391 = vpack.c.b16 %v1349, %v1348
  %v1392 = vpack.c.b16 %v1351, %v1350
  %v1393 = vpack.c.b16 %v1353, %v1352
  %v1394 = vpack.c.b16 %v1355, %v1354
  %v1395 = vpack.c.b16 %v1357, %v1356
  %v1396 = vpack.c.b16 %v1359, %v1358
  %v1397 = vpack.c.b16 %v1361, %v1360
  %v1398 = vpack.c.b16 %v1363, %v1362
  %v1399 = vpack.c.b16 %v1365, %v1364
  %v1400 = vpack.c.b16 %v1367, %v1366
  %v1401 = vpack.c.b16 %v1369, %v1368
  %v1402 = vpack.c.b16 %v1371, %v1370
  %v1403 = vpack.c.b16 %v1373, %v1372
  %v1404 = vpack.c.b16 %v1375, %v1374
  %v1405 = vpack.c.b16 %v1377, %v1376
  %v1406 = vpack.c.b16 %v1379, %v1378
  %v1407 = vpack.c.b16 %v1381, %v1380
  %v1408 = vpack.c.b16 %v1383, %v1382
  %v1409 = vpack.c.b16 %v1385, %v1384
  %1434 = vmatprep.subr.bf16.mxu0 0
  %1435 = vmatpush1.bf16.msra.mxu0 %v1393
  %1436 = vmatprep.subr.bf16.mxu0 0
  %1437 = vmatpush1.bf16.msra.mxu0 %v1392
  %1438 = vmatprep.subr.bf16.mxu0 0
  %1439 = vmatpush1.bf16.msra.mxu0 %v1391
  %1440 = vmatprep.subr.bf16.mxu0 0
  %1441 = vmatpush1.bf16.msra.mxu0 %v1390
  %1442 = vmatprep.subr.bf16.mxu0 0
  %1443 = vmatpush1.bf16.msra.mxu0 %v1389
  %1444 = vmatprep.subr.bf16.mxu0 0
  %1445 = vmatpush1.bf16.msra.mxu0 %v1388
  %1446 = vmatprep.subr.bf16.mxu0 0
  %1447 = vmatpush1.bf16.msra.mxu0 %v1387
  %1448 = vmatprep.subr.bf16.mxu0 0
  %1449 = vmatpush1.bf16.msra.mxu0 %v1386
  %1450 = vmatprep.subr.bf16.mxu0 0
  %1451 = vmatpush2.bf16.msra.mxu0 %v1401
  %1452 = vmatprep.subr.bf16.mxu0 0
  %1453 = vmatpush2.bf16.msra.mxu0 %v1400
  %1454 = vmatprep.subr.bf16.mxu0 0
  %1455 = vmatpush2.bf16.msra.mxu0 %v1399
  %1456 = vmatprep.subr.bf16.mxu0 0
  %1457 = vmatpush2.bf16.msra.mxu0 %v1398
  %1458 = vmatprep.subr.bf16.mxu0 0
  %1459 = vmatpush2.bf16.msra.mxu0 %v1397
  %1460 = vmatprep.subr.bf16.mxu0 0
  %1461 = vmatpush2.bf16.msra.mxu0 %v1396
  %1462 = vmatprep.subr.bf16.mxu0 0
  %1463 = vmatpush2.bf16.msra.mxu0 %v1395
  %1464 = vmatprep.subr.bf16.mxu0 0
  %1465 = vmatpush2.bf16.msra.mxu0 %v1394
  %1466 = vmatprep.mubr.bf16.mxu0 %v1267
  %1467 = vmatmul.mubr.bf16.gmra.mxu0 %v1266
  %v1468 = vpop.f32.mrf.mxu0
  %v1469 = vadd.f32 %v1225, %v1468
  %v1470 = vpop.f32.mrf.mxu0
  %v1471 = vpop.f32.mrf.mxu0
  %v1472 = vadd.f32 %v1225, %v1471
  %v1473 = vpop.f32.mrf.mxu0
  %1474 = vmatprep.mubr.bf16.mxu0 %v1270
  %1475 = vmatmul.mubr.bf16.gmra.mxu0 %v1269
  %v1476 = vpop.f32.mrf.mxu0
  %v1477 = vadd.f32 %v1225, %v1476
  %v1478 = vpop.f32.mrf.mxu0
  %v1479 = vpop.f32.mrf.mxu0
  %v1480 = vadd.f32 %v1225, %v1479
  %v1481 = vpop.f32.mrf.mxu0
  %1482 = vmatprep.mubr.bf16.mxu0 %v1273
  %1483 = vmatmul.mubr.bf16.gmra.mxu0 %v1272
  %v1484 = vpop.f32.mrf.mxu0
  %v1485 = vadd.f32 %v1225, %v1484
  %v1486 = vpop.f32.mrf.mxu0
  %v1487 = vpop.f32.mrf.mxu0
  %v1488 = vadd.f32 %v1225, %v1487
  %v1489 = vpop.f32.mrf.mxu0
  %1490 = vmatprep.mubr.bf16.mxu0 %v1276
  %1491 = vmatmul.mubr.bf16.gmra.mxu0 %v1275
  %v1492 = vpop.f32.mrf.mxu0
  %v1493 = vadd.f32 %v1225, %v1492
  %v1494 = vpop.f32.mrf.mxu0
  %v1495 = vpop.f32.mrf.mxu0
  %v1496 = vadd.f32 %v1225, %v1495
  %v1497 = vpop.f32.mrf.mxu0
  %1498 = vdwg.mxu0
  %1499 = vmatprep.subr.bf16.mxu0 0
  %1500 = vmatpush1.bf16.msra.mxu0 %v1409
  %1501 = vmatprep.subr.bf16.mxu0 0
  %1502 = vmatpush1.bf16.msra.mxu0 %v1408
  %1503 = vmatprep.subr.bf16.mxu0 0
  %1504 = vmatpush1.bf16.msra.mxu0 %v1407
  %1505 = vmatprep.subr.bf16.mxu0 0
  %1506 = vmatpush1.bf16.msra.mxu0 %v1406
  %1507 = vmatprep.subr.bf16.mxu0 0
  %1508 = vmatpush1.bf16.msra.mxu0 %v1405
  %1509 = vmatprep.subr.bf16.mxu0 0
  %1510 = vmatpush1.bf16.msra.mxu0 %v1404
  %1511 = vmatprep.subr.bf16.mxu0 0
  %1512 = vmatpush1.bf16.msra.mxu0 %v1403
  %1513 = vmatprep.subr.bf16.mxu0 0
  %1514 = vmatpush1.bf16.msra.mxu0 %v1402
  %1515 = vmatprep.subr.bf16.mxu0 0
  %1516 = vmatpush2.bf16.msra.mxu0 0
  %1517 = vmatprep.subr.bf16.mxu0 0
  %1518 = vmatpush2.bf16.msra.mxu0 0
  %1519 = vmatprep.subr.bf16.mxu0 0
  %1520 = vmatpush2.bf16.msra.mxu0 0
  %1521 = vmatprep.subr.bf16.mxu0 0
  %1522 = vmatpush2.bf16.msra.mxu0 0
  %1523 = vmatprep.subr.bf16.mxu0 0
  %1524 = vmatpush2.bf16.msra.mxu0 0
  %1525 = vmatprep.subr.bf16.mxu0 0
  %1526 = vmatpush2.bf16.msra.mxu0 0
  %1527 = vmatprep.subr.bf16.mxu0 0
  %1528 = vmatpush2.bf16.msra.mxu0 0
  %1529 = vmatprep.subr.bf16.mxu0 0
  %1530 = vmatpush2.bf16.msra.mxu0 0
  %1531 = vmatprep.mubr.bf16.mxu0 0
  %1532 = vmatmul.mubr.bf16.gmra.mxu0 %v1268
  %v1533 = vpop.f32.mrf.mxu0
  %v1534 = vadd.f32 %v1469, %v1533
  %v1535 = vpop.f32.mrf.mxu0
  %v1536 = vpop.f32.mrf.mxu0
  %v1537 = vadd.f32 %v1472, %v1536
  %v1538 = vpop.f32.mrf.mxu0
  %1539 = vmatprep.mubr.bf16.mxu0 0
  %1540 = vmatmul.mubr.bf16.gmra.mxu0 %v1271
  %v1541 = vpop.f32.mrf.mxu0
  %v1542 = vadd.f32 %v1477, %v1541
  %v1543 = vpop.f32.mrf.mxu0
  %v1544 = vpop.f32.mrf.mxu0
  %v1545 = vadd.f32 %v1480, %v1544
  %v1546 = vpop.f32.mrf.mxu0
  %1547 = vmatprep.mubr.bf16.mxu0 0
  %1548 = vmatmul.mubr.bf16.gmra.mxu0 %v1274
  %v1549 = vpop.f32.mrf.mxu0
  %v1550 = vadd.f32 %v1485, %v1549
  %v1551 = vpop.f32.mrf.mxu0
  %v1552 = vpop.f32.mrf.mxu0
  %v1553 = vadd.f32 %v1488, %v1552
  %v1554 = vpop.f32.mrf.mxu0
  %1555 = vmatprep.mubr.bf16.mxu0 0
  %1556 = vmatmul.mubr.bf16.gmra.mxu0 %v1277
  %v1557 = vpop.f32.mrf.mxu0
  %v1558 = vadd.f32 %v1493, %v1557
  %v1559 = vpop.f32.mrf.mxu0
  %v1560 = vpop.f32.mrf.mxu0
  %v1561 = vadd.f32 %v1496, %v1560
  %v1562 = vpop.f32.mrf.mxu0
  %1563 = vdwg.mxu0
  %v1564 = vmax.f32 %v1534, 0.0
  %v1565 = vmax.f32 %v1537, 0.0
  %v1566 = vmax.f32 %v1542, 0.0
  %v1567 = vmax.f32 %v1545, 0.0
  %v1568 = vmax.f32 %v1550, 0.0
  %v1569 = vmax.f32 %v1553, 0.0
  %v1570 = vmax.f32 %v1558, 0.0
  %v1571 = vmax.f32 %v1561, 0.0
  %v1572 = vpack.c.bf16 %v1565, %v1564
  %v1573 = vpack.c.bf16 %v1567, %v1566
  %v1574 = vpack.c.bf16 %v1569, %v1568
  %v1575 = vpack.c.bf16 %v1571, %v1570
  %s1576 = scalar_lea.vmem %s7, 32
  %v1577 = vld [vmem:[%s1576] sm:$0xff]
  %v1578 = vld [vmem:[%s1576 + $0x8] sm:$0xff]
  %v1579 = vld [vmem:[%s1576 + $0x10] sm:$0xff]
  %v1580 = vld [vmem:[%s1576 + $0x18] sm:$0xff]
  %v1585 = vunpack.c.l.b16 %v1577
  %v1586 = vunpack.c.h.b16 %v1577
  %v1587 = vunpack.c.l.b16 %v1578
  %v1588 = vunpack.c.h.b16 %v1578
  %v1589 = vunpack.c.l.b16 %v1579
  %v1590 = vunpack.c.h.b16 %v1579
  %v1591 = vunpack.c.l.b16 %v1580
  %v1592 = vunpack.c.h.b16 %v1580
  %v1593 = vpack.c.b16 %v1587, %v1585
  %v1594 = vpack.c.b16 %v1588, %v1586
  %v1595 = vpack.c.b16 %v1591, %v1589
  %v1596 = vpack.c.b16 %v1592, %v1590
  %v1602 = vsel %vm55, %v1572, 0
  %v1605 = vsel %vm55, %v1573, 0
  %v1608 = vsel %vm55, %v1574, 0
  %v1611 = vsel %vm55, %v1575, 0
  %1613 = vmatprep.subr.bf16.mxu0 0
  %1614 = vmatpush1.bf16.msra.mxu0 0
  %1615 = vmatprep.subr.bf16.mxu0 0
  %1616 = vmatpush1.bf16.msra.mxu0 0
  %1617 = vmatprep.subr.bf16.mxu0 0
  %1618 = vmatpush1.bf16.msra.mxu0 0
  %1619 = vmatprep.subr.bf16.mxu0 0
  %1620 = vmatpush1.bf16.msra.mxu0 0
  %1621 = vmatprep.subr.bf16.mxu0 0
  %1622 = vmatpush1.bf16.msra.mxu0 0
  %1623 = vmatprep.subr.bf16.mxu0 0
  %1624 = vmatpush1.bf16.msra.mxu0 0
  %1625 = vmatprep.subr.bf16.mxu0 %v1596
  %1626 = vmatpush1.bf16.msra.mxu0 %v1595
  %1627 = vmatprep.subr.bf16.mxu0 %v1594
  %1628 = vmatpush1.bf16.msra.mxu0 %v1593
  %1629 = vmatprep.subr.bf16.mxu0 0
  %1630 = vmatpush2.bf16.msra.mxu0 0
  %1631 = vmatprep.subr.bf16.mxu0 0
  %1632 = vmatpush2.bf16.msra.mxu0 0
  %1633 = vmatprep.subr.bf16.mxu0 0
  %1634 = vmatpush2.bf16.msra.mxu0 0
  %1635 = vmatprep.subr.bf16.mxu0 0
  %1636 = vmatpush2.bf16.msra.mxu0 0
  %1637 = vmatprep.subr.bf16.mxu0 0
  %1638 = vmatpush2.bf16.msra.mxu0 0
  %1639 = vmatprep.subr.bf16.mxu0 0
  %1640 = vmatpush2.bf16.msra.mxu0 0
  %1641 = vmatprep.subr.bf16.mxu0 0
  %1642 = vmatpush2.bf16.msra.mxu0 0
  %1643 = vmatprep.subr.bf16.mxu0 0
  %1644 = vmatpush2.bf16.msra.mxu0 0
  %1645 = vmatprep.mubr.bf16.mxu0 0
  %1646 = vmatmul.mubr.bf16.gmra.mxu0 %v1602
  %v1647 = vpop.f32.mrf.mxu0
  %v1648 = vadd.f32 0.0, %v1647
  %v1649 = vpop.f32.mrf.mxu0
  %v1650 = vadd.f32 0.0, %v1649
  %v1651 = vpop.f32.mrf.mxu0
  %v1652 = vadd.f32 0.0, %v1651
  %v1653 = vpop.f32.mrf.mxu0
  %v1654 = vadd.f32 0.0, %v1653
  %1655 = vmatprep.mubr.bf16.mxu0 0
  %1656 = vmatmul.mubr.bf16.gmra.mxu0 %v1605
  %v1657 = vpop.f32.mrf.mxu0
  %v1658 = vadd.f32 0.0, %v1657
  %v1659 = vpop.f32.mrf.mxu0
  %v1660 = vadd.f32 0.0, %v1659
  %v1661 = vpop.f32.mrf.mxu0
  %v1662 = vadd.f32 0.0, %v1661
  %v1663 = vpop.f32.mrf.mxu0
  %v1664 = vadd.f32 0.0, %v1663
  %1665 = vmatprep.mubr.bf16.mxu0 0
  %1666 = vmatmul.mubr.bf16.gmra.mxu0 %v1608
  %v1667 = vpop.f32.mrf.mxu0
  %v1668 = vadd.f32 0.0, %v1667
  %v1669 = vpop.f32.mrf.mxu0
  %v1670 = vadd.f32 0.0, %v1669
  %v1671 = vpop.f32.mrf.mxu0
  %v1672 = vadd.f32 0.0, %v1671
  %v1673 = vpop.f32.mrf.mxu0
  %v1674 = vadd.f32 0.0, %v1673
  %1675 = vmatprep.mubr.bf16.mxu0 0
  %1676 = vmatmul.mubr.bf16.gmra.mxu0 %v1611
  %v1677 = vpop.f32.mrf.mxu0
  %v1678 = vadd.f32 0.0, %v1677
  %v1679 = vpop.f32.mrf.mxu0
  %v1680 = vadd.f32 0.0, %v1679
  %v1681 = vpop.f32.mrf.mxu0
  %v1682 = vadd.f32 0.0, %v1681
  %v1683 = vpop.f32.mrf.mxu0
  %v1684 = vadd.f32 0.0, %v1683
  %1685 = vdwg.mxu0
  %1686 = vst [vmem:[#allocation2] sm:$0xff] %v1648
  %1687 = vst.msk [vmem:[#allocation2 + $0x8] sm:$0xff] %vm804, %v1650
  %1688 = vst [vmem:[#allocation2 + $0x10] sm:$0xff] %v1652
  %1689 = vst.msk [vmem:[#allocation2 + $0x18] sm:$0xff] %vm804, %v1654
  %1690 = vst [vmem:[#allocation2 + $0x20] sm:$0xff] %v1658
  %1691 = vst.msk [vmem:[#allocation2 + $0x28] sm:$0xff] %vm804, %v1660
  %1692 = vst [vmem:[#allocation2 + $0x30] sm:$0xff] %v1662
  %1693 = vst.msk [vmem:[#allocation2 + $0x38] sm:$0xff] %vm804, %v1664
  %1694 = vst [vmem:[#allocation2 + $0x40] sm:$0xff] %v1668
  %1695 = vst.msk [vmem:[#allocation2 + $0x48] sm:$0xff] %vm804, %v1670
  %1696 = vst [vmem:[#allocation2 + $0x50] sm:$0xff] %v1672
  %1697 = vst.msk [vmem:[#allocation2 + $0x58] sm:$0xff] %vm804, %v1674
  %1698 = vst [vmem:[#allocation2 + $0x60] sm:$0xff] %v1678
  %1699 = vst.msk [vmem:[#allocation2 + $0x68] sm:$0xff] %vm804, %v1680
  %1700 = vst [vmem:[#allocation2 + $0x70] sm:$0xff] %v1682
  %1701 = vst.msk [vmem:[#allocation2 + $0x78] sm:$0xff] %vm804, %v1684
  %v1702 = vld [vmem:[#allocation2] sm:$0xff]
  %v1703 = vld [vmem:[#allocation2 + $0x10] sm:$0xff]
  %v1704 = vld [vmem:[#allocation2 + $0x20] sm:$0xff]
  %v1705 = vld [vmem:[#allocation2 + $0x30] sm:$0xff]
  %v1706 = vld [vmem:[#allocation2 + $0x40] sm:$0xff]
  %v1707 = vld [vmem:[#allocation2 + $0x50] sm:$0xff]
  %v1708 = vld [vmem:[#allocation2 + $0x60] sm:$0xff]
  %v1709 = vld [vmem:[#allocation2 + $0x70] sm:$0xff]
  %v1710 = vpack.c.bf16 %v1703, %v1702
  %v1711 = vpack.c.bf16 %v1705, %v1704
  %v1712 = vpack.c.bf16 %v1707, %v1706
  %v1713 = vpack.c.bf16 %v1709, %v1708
  %v1718 = vunpack.c.l.b16 %v1710
  %v1719 = vunpack.c.h.b16 %v1710
  %v1720 = vunpack.c.l.b16 %v1711
  %v1721 = vunpack.c.h.b16 %v1711
  %v1722 = vunpack.c.l.b16 %v1712
  %v1723 = vunpack.c.h.b16 %v1712
  %v1724 = vunpack.c.l.b16 %v1713
  %v1725 = vunpack.c.h.b16 %v1713
  %v1726 = vpack.c.b16 %v1718, %v1718
  %v1727 = vpack.c.b16 %v1719, %v1719
  %v1728 = vpack.c.b16 %v1720, %v1720
  %v1729 = vpack.c.b16 %v1721, %v1721
  %v1730 = vpack.c.b16 %v1722, %v1722
  %v1731 = vpack.c.b16 %v1723, %v1723
  %v1732 = vpack.c.b16 %v1724, %v1724
  %v1733 = vpack.c.b16 %v1725, %v1725
  %1742 = vst.msk [vmem:[#allocation3] sm:$0xf] %vm860, %v1726
  %1743 = vst.msk [vmem:[#allocation3 + $0x4] sm:$0xf] %vm860, %v1727
  %1744 = vst.msk [vmem:[#allocation3 + $0x8] sm:$0xf] %vm860, %v1728
  %1745 = vst.msk [vmem:[#allocation3 + $0xc] sm:$0xf] %vm860, %v1729
  %1746 = vst.msk [vmem:[#allocation3 + $0x10] sm:$0xf] %vm860, %v1730
  %1747 = vst.msk [vmem:[#allocation3 + $0x14] sm:$0xf] %vm860, %v1731
  %1748 = vst.msk [vmem:[#allocation3 + $0x18] sm:$0xf] %vm860, %v1732
  %1749 = vst.msk [vmem:[#allocation3 + $0x1c] sm:$0xf] %vm860, %v1733
  %v1750 = vld [vmem:[#allocation2] sm:$0xff]
  %v1751 = vld [vmem:[#allocation2 + $0x10] sm:$0xff]
  %v1752 = vld [vmem:[#allocation2 + $0x20] sm:$0xff]
  %v1753 = vld [vmem:[#allocation2 + $0x30] sm:$0xff]
  %v1754 = vld [vmem:[#allocation2 + $0x40] sm:$0xff]
  %v1755 = vld [vmem:[#allocation2 + $0x50] sm:$0xff]
  %v1756 = vld [vmem:[#allocation2 + $0x60] sm:$0xff]
  %v1757 = vld [vmem:[#allocation2 + $0x70] sm:$0xff]
  %v1758 = vpack.c.bf16 %v1751, %v1750
  %v1759 = vpack.c.bf16 %v1753, %v1752
  %v1760 = vpack.c.bf16 %v1755, %v1754
  %v1761 = vpack.c.bf16 %v1757, %v1756
  %v1766 = vunpack.c.l.b16 %v1758
  %v1767 = vunpack.c.h.b16 %v1758
  %v1768 = vunpack.c.l.b16 %v1759
  %v1769 = vunpack.c.h.b16 %v1759
  %v1770 = vunpack.c.l.b16 %v1760
  %v1771 = vunpack.c.h.b16 %v1760
  %v1772 = vunpack.c.l.b16 %v1761
  %v1773 = vunpack.c.h.b16 %v1761
  %v1774 = vpack.c.b16 %v1766, %v1766
  %v1775 = vpack.c.b16 %v1767, %v1767
  %v1776 = vpack.c.b16 %v1768, %v1768
  %v1777 = vpack.c.b16 %v1769, %v1769
  %v1778 = vpack.c.b16 %v1770, %v1770
  %v1779 = vpack.c.b16 %v1771, %v1771
  %v1780 = vpack.c.b16 %v1772, %v1772
  %v1781 = vpack.c.b16 %v1773, %v1773
  %1782 = vrot.lane.b32.xlu0 %v1774, 96
  %v1783 = vpop.permute.xlu0 %1782
  %1784 = vrot.lane.b32.xlu0 %v1775, 96
  %v1785 = vpop.permute.xlu0 %1784
  %1786 = vrot.lane.b32.xlu0 %v1776, 96
  %v1787 = vpop.permute.xlu0 %1786
  %1788 = vrot.lane.b32.xlu0 %v1777, 96
  %v1789 = vpop.permute.xlu0 %1788
  %1790 = vrot.lane.b32.xlu0 %v1778, 96
  %v1791 = vpop.permute.xlu0 %1790
  %1792 = vrot.lane.b32.xlu0 %v1779, 96
  %v1793 = vpop.permute.xlu0 %1792
  %1794 = vrot.lane.b32.xlu0 %v1780, 96
  %v1795 = vpop.permute.xlu0 %1794
  %1796 = vrot.lane.b32.xlu0 %v1781, 96
  %v1797 = vpop.permute.xlu0 %1796
  %1806 = vst.msk [vmem:[#allocation3 + $0x20] sm:$0xf] %vm860, %v1783
  %1807 = vst.msk [vmem:[#allocation3 + $0x24] sm:$0xf] %vm860, %v1785
  %1808 = vst.msk [vmem:[#allocation3 + $0x28] sm:$0xf] %vm860, %v1787
  %1809 = vst.msk [vmem:[#allocation3 + $0x2c] sm:$0xf] %vm860, %v1789
  %1810 = vst.msk [vmem:[#allocation3 + $0x30] sm:$0xf] %vm860, %v1791
  %1811 = vst.msk [vmem:[#allocation3 + $0x34] sm:$0xf] %vm860, %v1793
  %1812 = vst.msk [vmem:[#allocation3 + $0x38] sm:$0xf] %vm860, %v1795
  %1813 = vst.msk [vmem:[#allocation3 + $0x3c] sm:$0xf] %vm860, %v1797
  %v1814 = vld [vmem:[#allocation2] sm:$0xff]
  %v1815 = vld [vmem:[#allocation2 + $0x10] sm:$0xff]
  %v1816 = vld [vmem:[#allocation2 + $0x20] sm:$0xff]
  %v1817 = vld [vmem:[#allocation2 + $0x30] sm:$0xff]
  %v1818 = vld [vmem:[#allocation2 + $0x40] sm:$0xff]
  %v1819 = vld [vmem:[#allocation2 + $0x50] sm:$0xff]
  %v1820 = vld [vmem:[#allocation2 + $0x60] sm:$0xff]
  %v1821 = vld [vmem:[#allocation2 + $0x70] sm:$0xff]
  %v1822 = vpack.c.bf16 %v1815, %v1814
  %v1823 = vpack.c.bf16 %v1817, %v1816
  %v1824 = vpack.c.bf16 %v1819, %v1818
  %v1825 = vpack.c.bf16 %v1821, %v1820
  %v1830 = vunpack.c.l.b16 %v1822
  %v1831 = vunpack.c.h.b16 %v1822
  %v1832 = vunpack.c.l.b16 %v1823
  %v1833 = vunpack.c.h.b16 %v1823
  %v1834 = vunpack.c.l.b16 %v1824
  %v1835 = vunpack.c.h.b16 %v1824
  %v1836 = vunpack.c.l.b16 %v1825
  %v1837 = vunpack.c.h.b16 %v1825
  %v1838 = vpack.c.b16 %v1830, %v1830
  %v1839 = vpack.c.b16 %v1831, %v1831
  %v1840 = vpack.c.b16 %v1832, %v1832
  %v1841 = vpack.c.b16 %v1833, %v1833
  %v1842 = vpack.c.b16 %v1834, %v1834
  %v1843 = vpack.c.b16 %v1835, %v1835
  %v1844 = vpack.c.b16 %v1836, %v1836
  %v1845 = vpack.c.b16 %v1837, %v1837
  %1846 = vrot.lane.b32.xlu0 %v1838, 64
  %v1847 = vpop.permute.xlu0 %1846
  %1848 = vrot.lane.b32.xlu0 %v1839, 64
  %v1849 = vpop.permute.xlu0 %1848
  %1850 = vrot.lane.b32.xlu0 %v1840, 64
  %v1851 = vpop.permute.xlu0 %1850
  %1852 = vrot.lane.b32.xlu0 %v1841, 64
  %v1853 = vpop.permute.xlu0 %1852
  %1854 = vrot.lane.b32.xlu0 %v1842, 64
  %v1855 = vpop.permute.xlu0 %1854
  %1856 = vrot.lane.b32.xlu0 %v1843, 64
  %v1857 = vpop.permute.xlu0 %1856
  %1858 = vrot.lane.b32.xlu0 %v1844, 64
  %v1859 = vpop.permute.xlu0 %1858
  %1860 = vrot.lane.b32.xlu0 %v1845, 64
  %v1861 = vpop.permute.xlu0 %1860
  %1870 = vst.msk [vmem:[#allocation3 + $0x40] sm:$0xf] %vm860, %v1847
  %1871 = vst.msk [vmem:[#allocation3 + $0x44] sm:$0xf] %vm860, %v1849
  %1872 = vst.msk [vmem:[#allocation3 + $0x48] sm:$0xf] %vm860, %v1851
  %1873 = vst.msk [vmem:[#allocation3 + $0x4c] sm:$0xf] %vm860, %v1853
  %1874 = vst.msk [vmem:[#allocation3 + $0x50] sm:$0xf] %vm860, %v1855
  %1875 = vst.msk [vmem:[#allocation3 + $0x54] sm:$0xf] %vm860, %v1857
  %1876 = vst.msk [vmem:[#allocation3 + $0x58] sm:$0xf] %vm860, %v1859
  %1877 = vst.msk [vmem:[#allocation3 + $0x5c] sm:$0xf] %vm860, %v1861
  %v1878 = vld [vmem:[#allocation2] sm:$0xff]
  %v1879 = vld [vmem:[#allocation2 + $0x10] sm:$0xff]
  %v1880 = vld [vmem:[#allocation2 + $0x20] sm:$0xff]
  %v1881 = vld [vmem:[#allocation2 + $0x30] sm:$0xff]
  %v1882 = vld [vmem:[#allocation2 + $0x40] sm:$0xff]
  %v1883 = vld [vmem:[#allocation2 + $0x50] sm:$0xff]
  %v1884 = vld [vmem:[#allocation2 + $0x60] sm:$0xff]
  %v1885 = vld [vmem:[#allocation2 + $0x70] sm:$0xff]
  %v1886 = vpack.c.bf16 %v1879, %v1878
  %v1887 = vpack.c.bf16 %v1881, %v1880
  %v1888 = vpack.c.bf16 %v1883, %v1882
  %v1889 = vpack.c.bf16 %v1885, %v1884
  %v1894 = vunpack.c.l.b16 %v1886
  %v1895 = vunpack.c.h.b16 %v1886
  %v1896 = vunpack.c.l.b16 %v1887
  %v1897 = vunpack.c.h.b16 %v1887
  %v1898 = vunpack.c.l.b16 %v1888
  %v1899 = vunpack.c.h.b16 %v1888
  %v1900 = vunpack.c.l.b16 %v1889
  %v1901 = vunpack.c.h.b16 %v1889
  %v1902 = vpack.c.b16 %v1894, %v1894
  %v1903 = vpack.c.b16 %v1895, %v1895
  %v1904 = vpack.c.b16 %v1896, %v1896
  %v1905 = vpack.c.b16 %v1897, %v1897
  %v1906 = vpack.c.b16 %v1898, %v1898
  %v1907 = vpack.c.b16 %v1899, %v1899
  %v1908 = vpack.c.b16 %v1900, %v1900
  %v1909 = vpack.c.b16 %v1901, %v1901
  %1910 = vrot.lane.b32.xlu0 %v1902, 32
  %v1911 = vpop.permute.xlu0 %1910
  %1912 = vrot.lane.b32.xlu0 %v1903, 32
  %v1913 = vpop.permute.xlu0 %1912
  %1914 = vrot.lane.b32.xlu0 %v1904, 32
  %v1915 = vpop.permute.xlu0 %1914
  %1916 = vrot.lane.b32.xlu0 %v1905, 32
  %v1917 = vpop.permute.xlu0 %1916
  %1918 = vrot.lane.b32.xlu0 %v1906, 32
  %v1919 = vpop.permute.xlu0 %1918
  %1920 = vrot.lane.b32.xlu0 %v1907, 32
  %v1921 = vpop.permute.xlu0 %1920
  %1922 = vrot.lane.b32.xlu0 %v1908, 32
  %v1923 = vpop.permute.xlu0 %1922
  %1924 = vrot.lane.b32.xlu0 %v1909, 32
  %v1925 = vpop.permute.xlu0 %1924
  %1934 = vst.msk [vmem:[#allocation3 + $0x60] sm:$0xf] %vm860, %v1911
  %1935 = vst.msk [vmem:[#allocation3 + $0x64] sm:$0xf] %vm860, %v1913
  %1936 = vst.msk [vmem:[#allocation3 + $0x68] sm:$0xf] %vm860, %v1915
  %1937 = vst.msk [vmem:[#allocation3 + $0x6c] sm:$0xf] %vm860, %v1917
  %1938 = vst.msk [vmem:[#allocation3 + $0x70] sm:$0xf] %vm860, %v1919
  %1939 = vst.msk [vmem:[#allocation3 + $0x74] sm:$0xf] %vm860, %v1921
  %1940 = vst.msk [vmem:[#allocation3 + $0x78] sm:$0xf] %vm860, %v1923
  %1941 = vst.msk [vmem:[#allocation3 + $0x7c] sm:$0xf] %vm860, %v1925
  %v1942 = vld [vmem:[#allocation2 + $0x8] sm:$0xff]
  %v1943 = vld [vmem:[#allocation2 + $0x18] sm:$0xff]
  %v1944 = vld [vmem:[#allocation2 + $0x28] sm:$0xff]
  %v1945 = vld [vmem:[#allocation2 + $0x38] sm:$0xff]
  %v1946 = vld [vmem:[#allocation2 + $0x48] sm:$0xff]
  %v1947 = vld [vmem:[#allocation2 + $0x58] sm:$0xff]
  %v1948 = vld [vmem:[#allocation2 + $0x68] sm:$0xff]
  %v1949 = vld [vmem:[#allocation2 + $0x78] sm:$0xff]
  %v1950 = vpack.c.bf16 %v1943, %v1942
  %v1951 = vpack.c.bf16 %v1945, %v1944
  %v1952 = vpack.c.bf16 %v1947, %v1946
  %v1953 = vpack.c.bf16 %v1949, %v1948
  %v1958 = vunpack.c.l.b16 %v1950
  %v1959 = vunpack.c.h.b16 %v1950
  %v1960 = vunpack.c.l.b16 %v1951
  %v1961 = vunpack.c.h.b16 %v1951
  %v1962 = vunpack.c.l.b16 %v1952
  %v1963 = vunpack.c.h.b16 %v1952
  %v1964 = vunpack.c.l.b16 %v1953
  %v1965 = vunpack.c.h.b16 %v1953
  %v1966 = vpack.c.b16 %v1958, %v1958
  %v1967 = vpack.c.b16 %v1959, %v1959
  %v1968 = vpack.c.b16 %v1960, %v1960
  %v1969 = vpack.c.b16 %v1961, %v1961
  %v1970 = vpack.c.b16 %v1962, %v1962
  %v1971 = vpack.c.b16 %v1963, %v1963
  %v1972 = vpack.c.b16 %v1964, %v1964
  %v1973 = vpack.c.b16 %v1965, %v1965
  %1982 = vst.msk [vmem:[#allocation3 + $0x80] sm:$0xf] %vm860, %v1966
  %1983 = vst.msk [vmem:[#allocation3 + $0x84] sm:$0xf] %vm860, %v1967
  %1984 = vst.msk [vmem:[#allocation3 + $0x88] sm:$0xf] %vm860, %v1968
  %1985 = vst.msk [vmem:[#allocation3 + $0x8c] sm:$0xf] %vm860, %v1969
  %1986 = vst.msk [vmem:[#allocation3 + $0x90] sm:$0xf] %vm860, %v1970
  %1987 = vst.msk [vmem:[#allocation3 + $0x94] sm:$0xf] %vm860, %v1971
  %1988 = vst.msk [vmem:[#allocation3 + $0x98] sm:$0xf] %vm860, %v1972
  %1989 = vst.msk [vmem:[#allocation3 + $0x9c] sm:$0xf] %vm860, %v1973
  %v1990 = vld [vmem:[#allocation2 + $0x8] sm:$0xff]
  %v1991 = vld [vmem:[#allocation2 + $0x18] sm:$0xff]
  %v1992 = vld [vmem:[#allocation2 + $0x28] sm:$0xff]
  %v1993 = vld [vmem:[#allocation2 + $0x38] sm:$0xff]
  %v1994 = vld [vmem:[#allocation2 + $0x48] sm:$0xff]
  %v1995 = vld [vmem:[#allocation2 + $0x58] sm:$0xff]
  %v1996 = vld [vmem:[#allocation2 + $0x68] sm:$0xff]
  %v1997 = vld [vmem:[#allocation2 + $0x78] sm:$0xff]
  %v1998 = vpack.c.bf16 %v1991, %v1990
  %v1999 = vpack.c.bf16 %v1993, %v1992
  %v2000 = vpack.c.bf16 %v1995, %v1994
  %v2001 = vpack.c.bf16 %v1997, %v1996
  %v2006 = vunpack.c.l.b16 %v1998
  %v2007 = vunpack.c.h.b16 %v1998
  %v2008 = vunpack.c.l.b16 %v1999
  %v2009 = vunpack.c.h.b16 %v1999
  %v2010 = vunpack.c.l.b16 %v2000
  %v2011 = vunpack.c.h.b16 %v2000
  %v2012 = vunpack.c.l.b16 %v2001
  %v2013 = vunpack.c.h.b16 %v2001
  %v2014 = vpack.c.b16 %v2006, %v2006
  %v2015 = vpack.c.b16 %v2007, %v2007
  %v2016 = vpack.c.b16 %v2008, %v2008
  %v2017 = vpack.c.b16 %v2009, %v2009
  %v2018 = vpack.c.b16 %v2010, %v2010
  %v2019 = vpack.c.b16 %v2011, %v2011
  %v2020 = vpack.c.b16 %v2012, %v2012
  %v2021 = vpack.c.b16 %v2013, %v2013
  %2022 = vrot.lane.b32.xlu0 %v2014, 96
  %v2023 = vpop.permute.xlu0 %2022
  %2024 = vrot.lane.b32.xlu0 %v2015, 96
  %v2025 = vpop.permute.xlu0 %2024
  %2026 = vrot.lane.b32.xlu0 %v2016, 96
  %v2027 = vpop.permute.xlu0 %2026
  %2028 = vrot.lane.b32.xlu0 %v2017, 96
  %v2029 = vpop.permute.xlu0 %2028
  %2030 = vrot.lane.b32.xlu0 %v2018, 96
  %v2031 = vpop.permute.xlu0 %2030
  %2032 = vrot.lane.b32.xlu0 %v2019, 96
  %v2033 = vpop.permute.xlu0 %2032
  %2034 = vrot.lane.b32.xlu0 %v2020, 96
  %v2035 = vpop.permute.xlu0 %2034
  %2036 = vrot.lane.b32.xlu0 %v2021, 96
  %v2037 = vpop.permute.xlu0 %2036
  %2046 = vst.msk [vmem:[#allocation3 + $0xa0] sm:$0xf] %vm860, %v2023
  %2047 = vst.msk [vmem:[#allocation3 + $0xa4] sm:$0xf] %vm860, %v2025
  %2048 = vst.msk [vmem:[#allocation3 + $0xa8] sm:$0xf] %vm860, %v2027
  %2049 = vst.msk [vmem:[#allocation3 + $0xac] sm:$0xf] %vm860, %v2029
  %2050 = vst.msk [vmem:[#allocation3 + $0xb0] sm:$0xf] %vm860, %v2031
  %2051 = vst.msk [vmem:[#allocation3 + $0xb4] sm:$0xf] %vm860, %v2033
  %2052 = vst.msk [vmem:[#allocation3 + $0xb8] sm:$0xf] %vm860, %v2035
  %2053 = vst.msk [vmem:[#allocation3 + $0xbc] sm:$0xf] %vm860, %v2037
  %v2054 = vld [vmem:[#allocation3] sm:$0xf]
  %v2055 = vld [vmem:[#allocation3 + $0x4] sm:$0xf]
  %v2056 = vld [vmem:[#allocation3 + $0x8] sm:$0xf]
  %v2057 = vld [vmem:[#allocation3 + $0xc] sm:$0xf]
  %v2058 = vld [vmem:[#allocation3 + $0x10] sm:$0xf]
  %v2059 = vld [vmem:[#allocation3 + $0x14] sm:$0xf]
  %v2060 = vld [vmem:[#allocation3 + $0x18] sm:$0xf]
  %v2061 = vld [vmem:[#allocation3 + $0x1c] sm:$0xf]
  %v2062 = vld [vmem:[#allocation3 + $0x20] sm:$0xf]
  %v2063 = vld [vmem:[#allocation3 + $0x24] sm:$0xf]
  %v2064 = vld [vmem:[#allocation3 + $0x28] sm:$0xf]
  %v2065 = vld [vmem:[#allocation3 + $0x2c] sm:$0xf]
  %v2066 = vld [vmem:[#allocation3 + $0x30] sm:$0xf]
  %v2067 = vld [vmem:[#allocation3 + $0x34] sm:$0xf]
  %v2068 = vld [vmem:[#allocation3 + $0x38] sm:$0xf]
  %v2069 = vld [vmem:[#allocation3 + $0x3c] sm:$0xf]
  %v2070 = vld [vmem:[#allocation3 + $0x40] sm:$0xf]
  %v2071 = vld [vmem:[#allocation3 + $0x44] sm:$0xf]
  %v2072 = vld [vmem:[#allocation3 + $0x48] sm:$0xf]
  %v2073 = vld [vmem:[#allocation3 + $0x4c] sm:$0xf]
  %v2074 = vld [vmem:[#allocation3 + $0x50] sm:$0xf]
  %v2075 = vld [vmem:[#allocation3 + $0x54] sm:$0xf]
  %v2076 = vld [vmem:[#allocation3 + $0x58] sm:$0xf]
  %v2077 = vld [vmem:[#allocation3 + $0x5c] sm:$0xf]
  %v2078 = vld [vmem:[#allocation3 + $0x60] sm:$0xf]
  %v2079 = vld [vmem:[#allocation3 + $0x64] sm:$0xf]
  %v2080 = vld [vmem:[#allocation3 + $0x68] sm:$0xf]
  %v2081 = vld [vmem:[#allocation3 + $0x6c] sm:$0xf]
  %v2082 = vld [vmem:[#allocation3 + $0x70] sm:$0xf]
  %v2083 = vld [vmem:[#allocation3 + $0x74] sm:$0xf]
  %v2084 = vld [vmem:[#allocation3 + $0x78] sm:$0xf]
  %v2085 = vld [vmem:[#allocation3 + $0x7c] sm:$0xf]
  %v2086 = vld [vmem:[#allocation3 + $0x80] sm:$0xf]
  %v2087 = vld [vmem:[#allocation3 + $0x84] sm:$0xf]
  %v2088 = vld [vmem:[#allocation3 + $0x88] sm:$0xf]
  %v2089 = vld [vmem:[#allocation3 + $0x8c] sm:$0xf]
  %v2090 = vld [vmem:[#allocation3 + $0x90] sm:$0xf]
  %v2091 = vld [vmem:[#allocation3 + $0x94] sm:$0xf]
  %v2092 = vld [vmem:[#allocation3 + $0x98] sm:$0xf]
  %v2093 = vld [vmem:[#allocation3 + $0x9c] sm:$0xf]
  %v2094 = vld [vmem:[#allocation3 + $0xa0] sm:$0xf]
  %v2095 = vld [vmem:[#allocation3 + $0xa4] sm:$0xf]
  %v2096 = vld [vmem:[#allocation3 + $0xa8] sm:$0xf]
  %v2097 = vld [vmem:[#allocation3 + $0xac] sm:$0xf]
  %v2098 = vld [vmem:[#allocation3 + $0xb0] sm:$0xf]
  %v2099 = vld [vmem:[#allocation3 + $0xb4] sm:$0xf]
  %v2100 = vld [vmem:[#allocation3 + $0xb8] sm:$0xf]
  %v2101 = vld [vmem:[#allocation3 + $0xbc] sm:$0xf]
  %v2102 = vld [vmem:[%s3 + $0x9] sm:$0x1]
  %v2103 = vlaneseq
  %v2104 = vshrl.u32 %v2103, 7
  %v2105 = vsub.s32 0, %v2104
  %v2106 = vrot.slane %v2102, %v2105
  %v2155 = vunpack.c.l.b16 %v2054
  %v2156 = vunpack.c.l.b16 %v2055
  %v2157 = vunpack.c.l.b16 %v2056
  %v2158 = vunpack.c.l.b16 %v2057
  %v2159 = vunpack.c.l.b16 %v2058
  %v2160 = vunpack.c.l.b16 %v2059
  %v2161 = vunpack.c.l.b16 %v2060
  %v2162 = vunpack.c.l.b16 %v2061
  %v2163 = vunpack.c.l.b16 %v2062
  %v2164 = vunpack.c.l.b16 %v2063
  %v2165 = vunpack.c.l.b16 %v2064
  %v2166 = vunpack.c.l.b16 %v2065
  %v2167 = vunpack.c.l.b16 %v2066
  %v2168 = vunpack.c.l.b16 %v2067
  %v2169 = vunpack.c.l.b16 %v2068
  %v2170 = vunpack.c.l.b16 %v2069
  %v2171 = vunpack.c.l.b16 %v2070
  %v2172 = vunpack.c.l.b16 %v2071
  %v2173 = vunpack.c.l.b16 %v2072
  %v2174 = vunpack.c.l.b16 %v2073
  %v2175 = vunpack.c.l.b16 %v2074
  %v2176 = vunpack.c.l.b16 %v2075
  %v2177 = vunpack.c.l.b16 %v2076
  %v2178 = vunpack.c.l.b16 %v2077
  %v2179 = vunpack.c.l.b16 %v2078
  %v2180 = vunpack.c.l.b16 %v2079
  %v2181 = vunpack.c.l.b16 %v2080
  %v2182 = vunpack.c.l.b16 %v2081
  %v2183 = vunpack.c.l.b16 %v2082
  %v2184 = vunpack.c.l.b16 %v2083
  %v2185 = vunpack.c.l.b16 %v2084
  %v2186 = vunpack.c.l.b16 %v2085
  %v2187 = vunpack.c.l.b16 %v2086
  %v2188 = vunpack.c.l.b16 %v2087
  %v2189 = vunpack.c.l.b16 %v2088
  %v2190 = vunpack.c.l.b16 %v2089
  %v2191 = vunpack.c.l.b16 %v2090
  %v2192 = vunpack.c.l.b16 %v2091
  %v2193 = vunpack.c.l.b16 %v2092
  %v2194 = vunpack.c.l.b16 %v2093
  %v2195 = vunpack.c.l.b16 %v2094
  %v2196 = vunpack.c.l.b16 %v2095
  %v2197 = vunpack.c.l.b16 %v2096
  %v2198 = vunpack.c.l.b16 %v2097
  %v2199 = vunpack.c.l.b16 %v2098
  %v2200 = vunpack.c.l.b16 %v2099
  %v2201 = vunpack.c.l.b16 %v2100
  %v2202 = vunpack.c.l.b16 %v2101
  %v2203 = vpack.c.b16 %v2156, %v2155
  %v2204 = vpack.c.b16 %v2158, %v2157
  %v2205 = vpack.c.b16 %v2160, %v2159
  %v2206 = vpack.c.b16 %v2162, %v2161
  %v2207 = vpack.c.b16 %v2164, %v2163
  %v2208 = vpack.c.b16 %v2166, %v2165
  %v2209 = vpack.c.b16 %v2168, %v2167
  %v2210 = vpack.c.b16 %v2170, %v2169
  %v2211 = vpack.c.b16 %v2172, %v2171
  %v2212 = vpack.c.b16 %v2174, %v2173
  %v2213 = vpack.c.b16 %v2176, %v2175
  %v2214 = vpack.c.b16 %v2178, %v2177
  %v2215 = vpack.c.b16 %v2180, %v2179
  %v2216 = vpack.c.b16 %v2182, %v2181
  %v2217 = vpack.c.b16 %v2184, %v2183
  %v2218 = vpack.c.b16 %v2186, %v2185
  %v2219 = vpack.c.b16 %v2188, %v2187
  %v2220 = vpack.c.b16 %v2190, %v2189
  %v2221 = vpack.c.b16 %v2192, %v2191
  %v2222 = vpack.c.b16 %v2194, %v2193
  %v2223 = vpack.c.b16 %v2196, %v2195
  %v2224 = vpack.c.b16 %v2198, %v2197
  %v2225 = vpack.c.b16 %v2200, %v2199
  %v2226 = vpack.c.b16 %v2202, %v2201
  %2251 = vmatprep.subr.bf16.mxu0 0
  %2252 = vmatpush1.bf16.msra.mxu0 %v2210
  %2253 = vmatprep.subr.bf16.mxu0 0
  %2254 = vmatpush1.bf16.msra.mxu0 %v2209
  %2255 = vmatprep.subr.bf16.mxu0 0
  %2256 = vmatpush1.bf16.msra.mxu0 %v2208
  %2257 = vmatprep.subr.bf16.mxu0 0
  %2258 = vmatpush1.bf16.msra.mxu0 %v2207
  %2259 = vmatprep.subr.bf16.mxu0 0
  %2260 = vmatpush1.bf16.msra.mxu0 %v2206
  %2261 = vmatprep.subr.bf16.mxu0 0
  %2262 = vmatpush1.bf16.msra.mxu0 %v2205
  %2263 = vmatprep.subr.bf16.mxu0 0
  %2264 = vmatpush1.bf16.msra.mxu0 %v2204
  %2265 = vmatprep.subr.bf16.mxu0 0
  %2266 = vmatpush1.bf16.msra.mxu0 %v2203
  %2267 = vmatprep.subr.bf16.mxu0 0
  %2268 = vmatpush2.bf16.msra.mxu0 %v2218
  %2269 = vmatprep.subr.bf16.mxu0 0
  %2270 = vmatpush2.bf16.msra.mxu0 %v2217
  %2271 = vmatprep.subr.bf16.mxu0 0
  %2272 = vmatpush2.bf16.msra.mxu0 %v2216
  %2273 = vmatprep.subr.bf16.mxu0 0
  %2274 = vmatpush2.bf16.msra.mxu0 %v2215
  %2275 = vmatprep.subr.bf16.mxu0 0
  %2276 = vmatpush2.bf16.msra.mxu0 %v2214
  %2277 = vmatprep.subr.bf16.mxu0 0
  %2278 = vmatpush2.bf16.msra.mxu0 %v2213
  %2279 = vmatprep.subr.bf16.mxu0 0
  %2280 = vmatpush2.bf16.msra.mxu0 %v2212
  %2281 = vmatprep.subr.bf16.mxu0 0
  %2282 = vmatpush2.bf16.msra.mxu0 %v2211
  %2283 = vmatprep.mubr.bf16.mxu0 %v1267
  %2284 = vmatmul.mubr.bf16.gmra.mxu0 %v1266
  %v2285 = vpop.f32.mrf.mxu0
  %v2286 = vadd.f32 %v2106, %v2285
  %v2287 = vpop.f32.mrf.mxu0
  %v2288 = vpop.f32.mrf.mxu0
  %v2289 = vadd.f32 %v2106, %v2288
  %v2290 = vpop.f32.mrf.mxu0
  %2291 = vmatprep.mubr.bf16.mxu0 %v1270
  %2292 = vmatmul.mubr.bf16.gmra.mxu0 %v1269
  %v2293 = vpop.f32.mrf.mxu0
  %v2294 = vadd.f32 %v2106, %v2293
  %v2295 = vpop.f32.mrf.mxu0
  %v2296 = vpop.f32.mrf.mxu0
  %v2297 = vadd.f32 %v2106, %v2296
  %v2298 = vpop.f32.mrf.mxu0
  %2299 = vmatprep.mubr.bf16.mxu0 %v1273
  %2300 = vmatmul.mubr.bf16.gmra.mxu0 %v1272
  %v2301 = vpop.f32.mrf.mxu0
  %v2302 = vadd.f32 %v2106, %v2301
  %v2303 = vpop.f32.mrf.mxu0
  %v2304 = vpop.f32.mrf.mxu0
  %v2305 = vadd.f32 %v2106, %v2304
  %v2306 = vpop.f32.mrf.mxu0
  %2307 = vmatprep.mubr.bf16.mxu0 %v1276
  %2308 = vmatmul.mubr.bf16.gmra.mxu0 %v1275
  %v2309 = vpop.f32.mrf.mxu0
  %v2310 = vadd.f32 %v2106, %v2309
  %v2311 = vpop.f32.mrf.mxu0
  %v2312 = vpop.f32.mrf.mxu0
  %v2313 = vadd.f32 %v2106, %v2312
  %v2314 = vpop.f32.mrf.mxu0
  %2315 = vdwg.mxu0
  %2316 = vmatprep.subr.bf16.mxu0 0
  %2317 = vmatpush1.bf16.msra.mxu0 %v2226
  %2318 = vmatprep.subr.bf16.mxu0 0
  %2319 = vmatpush1.bf16.msra.mxu0 %v2225
  %2320 = vmatprep.subr.bf16.mxu0 0
  %2321 = vmatpush1.bf16.msra.mxu0 %v2224
  %2322 = vmatprep.subr.bf16.mxu0 0
  %2323 = vmatpush1.bf16.msra.mxu0 %v2223
  %2324 = vmatprep.subr.bf16.mxu0 0
  %2325 = vmatpush1.bf16.msra.mxu0 %v2222
  %2326 = vmatprep.subr.bf16.mxu0 0
  %2327 = vmatpush1.bf16.msra.mxu0 %v2221
  %2328 = vmatprep.subr.bf16.mxu0 0
  %2329 = vmatpush1.bf16.msra.mxu0 %v2220
  %2330 = vmatprep.subr.bf16.mxu0 0
  %2331 = vmatpush1.bf16.msra.mxu0 %v2219
  %2332 = vmatprep.subr.bf16.mxu0 0
  %2333 = vmatpush2.bf16.msra.mxu0 0
  %2334 = vmatprep.subr.bf16.mxu0 0
  %2335 = vmatpush2.bf16.msra.mxu0 0
  %2336 = vmatprep.subr.bf16.mxu0 0
  %2337 = vmatpush2.bf16.msra.mxu0 0
  %2338 = vmatprep.subr.bf16.mxu0 0
  %2339 = vmatpush2.bf16.msra.mxu0 0
  %2340 = vmatprep.subr.bf16.mxu0 0
  %2341 = vmatpush2.bf16.msra.mxu0 0
  %2342 = vmatprep.subr.bf16.mxu0 0
  %2343 = vmatpush2.bf16.msra.mxu0 0
  %2344 = vmatprep.subr.bf16.mxu0 0
  %2345 = vmatpush2.bf16.msra.mxu0 0
  %2346 = vmatprep.subr.bf16.mxu0 0
  %2347 = vmatpush2.bf16.msra.mxu0 0
  %2348 = vmatprep.mubr.bf16.mxu0 0
  %2349 = vmatmul.mubr.bf16.gmra.mxu0 %v1268
  %v2350 = vpop.f32.mrf.mxu0
  %v2351 = vadd.f32 %v2286, %v2350
  %v2352 = vpop.f32.mrf.mxu0
  %v2353 = vpop.f32.mrf.mxu0
  %v2354 = vadd.f32 %v2289, %v2353
  %v2355 = vpop.f32.mrf.mxu0
  %2356 = vmatprep.mubr.bf16.mxu0 0
  %2357 = vmatmul.mubr.bf16.gmra.mxu0 %v1271
  %v2358 = vpop.f32.mrf.mxu0
  %v2359 = vadd.f32 %v2294, %v2358
  %v2360 = vpop.f32.mrf.mxu0
  %v2361 = vpop.f32.mrf.mxu0
  %v2362 = vadd.f32 %v2297, %v2361
  %v2363 = vpop.f32.mrf.mxu0
  %2364 = vmatprep.mubr.bf16.mxu0 0
  %2365 = vmatmul.mubr.bf16.gmra.mxu0 %v1274
  %v2366 = vpop.f32.mrf.mxu0
  %v2367 = vadd.f32 %v2302, %v2366
  %v2368 = vpop.f32.mrf.mxu0
  %v2369 = vpop.f32.mrf.mxu0
  %v2370 = vadd.f32 %v2305, %v2369
  %v2371 = vpop.f32.mrf.mxu0
  %2372 = vmatprep.mubr.bf16.mxu0 0
  %2373 = vmatmul.mubr.bf16.gmra.mxu0 %v1277
  %v2374 = vpop.f32.mrf.mxu0
  %v2375 = vadd.f32 %v2310, %v2374
  %v2376 = vpop.f32.mrf.mxu0
  %v2377 = vpop.f32.mrf.mxu0
  %v2378 = vadd.f32 %v2313, %v2377
  %v2379 = vpop.f32.mrf.mxu0
  %2380 = vdwg.mxu0
  %v2381 = vmax.f32 %v2351, 0.0
  %v2382 = vmax.f32 %v2354, 0.0
  %v2383 = vmax.f32 %v2359, 0.0
  %v2384 = vmax.f32 %v2362, 0.0
  %v2385 = vmax.f32 %v2367, 0.0
  %v2386 = vmax.f32 %v2370, 0.0
  %v2387 = vmax.f32 %v2375, 0.0
  %v2388 = vmax.f32 %v2378, 0.0
  %v2389 = vpack.c.bf16 %v2382, %v2381
  %v2390 = vpack.c.bf16 %v2384, %v2383
  %v2391 = vpack.c.bf16 %v2386, %v2385
  %v2392 = vpack.c.bf16 %v2388, %v2387
  %s2393 = scalar_lea.vmem %s7, 64
  %v2394 = vld [vmem:[%s2393] sm:$0xff]
  %v2395 = vld [vmem:[%s2393 + $0x8] sm:$0xff]
  %v2396 = vld [vmem:[%s2393 + $0x10] sm:$0xff]
  %v2397 = vld [vmem:[%s2393 + $0x18] sm:$0xff]
  %v2402 = vunpack.c.l.b16 %v2394
  %v2403 = vunpack.c.h.b16 %v2394
  %v2404 = vunpack.c.l.b16 %v2395
  %v2405 = vunpack.c.h.b16 %v2395
  %v2406 = vunpack.c.l.b16 %v2396
  %v2407 = vunpack.c.h.b16 %v2396
  %v2408 = vunpack.c.l.b16 %v2397
  %v2409 = vunpack.c.h.b16 %v2397
  %v2410 = vpack.c.b16 %v2404, %v2402
  %v2411 = vpack.c.b16 %v2405, %v2403
  %v2412 = vpack.c.b16 %v2408, %v2406
  %v2413 = vpack.c.b16 %v2409, %v2407
  %v2419 = vsel %vm55, %v2389, 0
  %v2422 = vsel %vm55, %v2390, 0
  %v2425 = vsel %vm55, %v2391, 0
  %v2428 = vsel %vm55, %v2392, 0
  %2430 = vmatprep.subr.bf16.mxu0 0
  %2431 = vmatpush1.bf16.msra.mxu0 0
  %2432 = vmatprep.subr.bf16.mxu0 0
  %2433 = vmatpush1.bf16.msra.mxu0 0
  %2434 = vmatprep.subr.bf16.mxu0 0
  %2435 = vmatpush1.bf16.msra.mxu0 0
  %2436 = vmatprep.subr.bf16.mxu0 0
  %2437 = vmatpush1.bf16.msra.mxu0 0
  %2438 = vmatprep.subr.bf16.mxu0 0
  %2439 = vmatpush1.bf16.msra.mxu0 0
  %2440 = vmatprep.subr.bf16.mxu0 0
  %2441 = vmatpush1.bf16.msra.mxu0 0
  %2442 = vmatprep.subr.bf16.mxu0 %v2413
  %2443 = vmatpush1.bf16.msra.mxu0 %v2412
  %2444 = vmatprep.subr.bf16.mxu0 %v2411
  %2445 = vmatpush1.bf16.msra.mxu0 %v2410
  %2446 = vmatprep.subr.bf16.mxu0 0
  %2447 = vmatpush2.bf16.msra.mxu0 0
  %2448 = vmatprep.subr.bf16.mxu0 0
  %2449 = vmatpush2.bf16.msra.mxu0 0
  %2450 = vmatprep.subr.bf16.mxu0 0
  %2451 = vmatpush2.bf16.msra.mxu0 0
  %2452 = vmatprep.subr.bf16.mxu0 0
  %2453 = vmatpush2.bf16.msra.mxu0 0
  %2454 = vmatprep.subr.bf16.mxu0 0
  %2455 = vmatpush2.bf16.msra.mxu0 0
  %2456 = vmatprep.subr.bf16.mxu0 0
  %2457 = vmatpush2.bf16.msra.mxu0 0
  %2458 = vmatprep.subr.bf16.mxu0 0
  %2459 = vmatpush2.bf16.msra.mxu0 0
  %2460 = vmatprep.subr.bf16.mxu0 0
  %2461 = vmatpush2.bf16.msra.mxu0 0
  %2462 = vmatprep.mubr.bf16.mxu0 0
  %2463 = vmatmul.mubr.bf16.gmra.mxu0 %v2419
  %v2464 = vpop.f32.mrf.mxu0
  %v2465 = vadd.f32 0.0, %v2464
  %v2466 = vpop.f32.mrf.mxu0
  %v2467 = vadd.f32 0.0, %v2466
  %v2468 = vpop.f32.mrf.mxu0
  %v2469 = vadd.f32 0.0, %v2468
  %v2470 = vpop.f32.mrf.mxu0
  %v2471 = vadd.f32 0.0, %v2470
  %2472 = vmatprep.mubr.bf16.mxu0 0
  %2473 = vmatmul.mubr.bf16.gmra.mxu0 %v2422
  %v2474 = vpop.f32.mrf.mxu0
  %v2475 = vadd.f32 0.0, %v2474
  %v2476 = vpop.f32.mrf.mxu0
  %v2477 = vadd.f32 0.0, %v2476
  %v2478 = vpop.f32.mrf.mxu0
  %v2479 = vadd.f32 0.0, %v2478
  %v2480 = vpop.f32.mrf.mxu0
  %v2481 = vadd.f32 0.0, %v2480
  %2482 = vmatprep.mubr.bf16.mxu0 0
  %2483 = vmatmul.mubr.bf16.gmra.mxu0 %v2425
  %v2484 = vpop.f32.mrf.mxu0
  %v2485 = vadd.f32 0.0, %v2484
  %v2486 = vpop.f32.mrf.mxu0
  %v2487 = vadd.f32 0.0, %v2486
  %v2488 = vpop.f32.mrf.mxu0
  %v2489 = vadd.f32 0.0, %v2488
  %v2490 = vpop.f32.mrf.mxu0
  %v2491 = vadd.f32 0.0, %v2490
  %2492 = vmatprep.mubr.bf16.mxu0 0
  %2493 = vmatmul.mubr.bf16.gmra.mxu0 %v2428
  %v2494 = vpop.f32.mrf.mxu0
  %v2495 = vadd.f32 0.0, %v2494
  %v2496 = vpop.f32.mrf.mxu0
  %v2497 = vadd.f32 0.0, %v2496
  %v2498 = vpop.f32.mrf.mxu0
  %v2499 = vadd.f32 0.0, %v2498
  %v2500 = vpop.f32.mrf.mxu0
  %v2501 = vadd.f32 0.0, %v2500
  %2502 = vdwg.mxu0
  %2503 = vst [vmem:[#allocation2] sm:$0xff] %v2465
  %2504 = vst.msk [vmem:[#allocation2 + $0x8] sm:$0xff] %vm804, %v2467
  %2505 = vst [vmem:[#allocation2 + $0x10] sm:$0xff] %v2469
  %2506 = vst.msk [vmem:[#allocation2 + $0x18] sm:$0xff] %vm804, %v2471
  %2507 = vst [vmem:[#allocation2 + $0x20] sm:$0xff] %v2475
  %2508 = vst.msk [vmem:[#allocation2 + $0x28] sm:$0xff] %vm804, %v2477
  %2509 = vst [vmem:[#allocation2 + $0x30] sm:$0xff] %v2479
  %2510 = vst.msk [vmem:[#allocation2 + $0x38] sm:$0xff] %vm804, %v2481
  %2511 = vst [vmem:[#allocation2 + $0x40] sm:$0xff] %v2485
  %2512 = vst.msk [vmem:[#allocation2 + $0x48] sm:$0xff] %vm804, %v2487
  %2513 = vst [vmem:[#allocation2 + $0x50] sm:$0xff] %v2489
  %2514 = vst.msk [vmem:[#allocation2 + $0x58] sm:$0xff] %vm804, %v2491
  %2515 = vst [vmem:[#allocation2 + $0x60] sm:$0xff] %v2495
  %2516 = vst.msk [vmem:[#allocation2 + $0x68] sm:$0xff] %vm804, %v2497
  %2517 = vst [vmem:[#allocation2 + $0x70] sm:$0xff] %v2499
  %2518 = vst.msk [vmem:[#allocation2 + $0x78] sm:$0xff] %vm804, %v2501
  %v2519 = vld [vmem:[#allocation2] sm:$0xff]
  %v2520 = vld [vmem:[#allocation2 + $0x10] sm:$0xff]
  %v2521 = vld [vmem:[#allocation2 + $0x20] sm:$0xff]
  %v2522 = vld [vmem:[#allocation2 + $0x30] sm:$0xff]
  %v2523 = vld [vmem:[#allocation2 + $0x40] sm:$0xff]
  %v2524 = vld [vmem:[#allocation2 + $0x50] sm:$0xff]
  %v2525 = vld [vmem:[#allocation2 + $0x60] sm:$0xff]
  %v2526 = vld [vmem:[#allocation2 + $0x70] sm:$0xff]
  %v2527 = vpack.c.bf16 %v2520, %v2519
  %v2528 = vpack.c.bf16 %v2522, %v2521
  %v2529 = vpack.c.bf16 %v2524, %v2523
  %v2530 = vpack.c.bf16 %v2526, %v2525
  %v2535 = vunpack.c.l.b16 %v2527
  %v2536 = vunpack.c.h.b16 %v2527
  %v2537 = vunpack.c.l.b16 %v2528
  %v2538 = vunpack.c.h.b16 %v2528
  %v2539 = vunpack.c.l.b16 %v2529
  %v2540 = vunpack.c.h.b16 %v2529
  %v2541 = vunpack.c.l.b16 %v2530
  %v2542 = vunpack.c.h.b16 %v2530
  %v2543 = vpack.c.b16 %v2535, %v2535
  %v2544 = vpack.c.b16 %v2536, %v2536
  %v2545 = vpack.c.b16 %v2537, %v2537
  %v2546 = vpack.c.b16 %v2538, %v2538
  %v2547 = vpack.c.b16 %v2539, %v2539
  %v2548 = vpack.c.b16 %v2540, %v2540
  %v2549 = vpack.c.b16 %v2541, %v2541
  %v2550 = vpack.c.b16 %v2542, %v2542
  %2559 = vst.msk [vmem:[#allocation3] sm:$0xf] %vm860, %v2543
  %2560 = vst.msk [vmem:[#allocation3 + $0x4] sm:$0xf] %vm860, %v2544
  %2561 = vst.msk [vmem:[#allocation3 + $0x8] sm:$0xf] %vm860, %v2545
  %2562 = vst.msk [vmem:[#allocation3 + $0xc] sm:$0xf] %vm860, %v2546
  %2563 = vst.msk [vmem:[#allocation3 + $0x10] sm:$0xf] %vm860, %v2547
  %2564 = vst.msk [vmem:[#allocation3 + $0x14] sm:$0xf] %vm860, %v2548
  %2565 = vst.msk [vmem:[#allocation3 + $0x18] sm:$0xf] %vm860, %v2549
  %2566 = vst.msk [vmem:[#allocation3 + $0x1c] sm:$0xf] %vm860, %v2550
  %v2567 = vld [vmem:[#allocation2] sm:$0xff]
  %v2568 = vld [vmem:[#allocation2 + $0x10] sm:$0xff]
  %v2569 = vld [vmem:[#allocation2 + $0x20] sm:$0xff]
  %v2570 = vld [vmem:[#allocation2 + $0x30] sm:$0xff]
  %v2571 = vld [vmem:[#allocation2 + $0x40] sm:$0xff]
  %v2572 = vld [vmem:[#allocation2 + $0x50] sm:$0xff]
  %v2573 = vld [vmem:[#allocation2 + $0x60] sm:$0xff]
  %v2574 = vld [vmem:[#allocation2 + $0x70] sm:$0xff]
  %v2575 = vpack.c.bf16 %v2568, %v2567
  %v2576 = vpack.c.bf16 %v2570, %v2569
  %v2577 = vpack.c.bf16 %v2572, %v2571
  %v2578 = vpack.c.bf16 %v2574, %v2573
  %v2583 = vunpack.c.l.b16 %v2575
  %v2584 = vunpack.c.h.b16 %v2575
  %v2585 = vunpack.c.l.b16 %v2576
  %v2586 = vunpack.c.h.b16 %v2576
  %v2587 = vunpack.c.l.b16 %v2577
  %v2588 = vunpack.c.h.b16 %v2577
  %v2589 = vunpack.c.l.b16 %v2578
  %v2590 = vunpack.c.h.b16 %v2578
  %v2591 = vpack.c.b16 %v2583, %v2583
  %v2592 = vpack.c.b16 %v2584, %v2584
  %v2593 = vpack.c.b16 %v2585, %v2585
  %v2594 = vpack.c.b16 %v2586, %v2586
  %v2595 = vpack.c.b16 %v2587, %v2587
  %v2596 = vpack.c.b16 %v2588, %v2588
  %v2597 = vpack.c.b16 %v2589, %v2589
  %v2598 = vpack.c.b16 %v2590, %v2590
  %2599 = vrot.lane.b32.xlu0 %v2591, 96
  %v2600 = vpop.permute.xlu0 %2599
  %2601 = vrot.lane.b32.xlu0 %v2592, 96
  %v2602 = vpop.permute.xlu0 %2601
  %2603 = vrot.lane.b32.xlu0 %v2593, 96
  %v2604 = vpop.permute.xlu0 %2603
  %2605 = vrot.lane.b32.xlu0 %v2594, 96
  %v2606 = vpop.permute.xlu0 %2605
  %2607 = vrot.lane.b32.xlu0 %v2595, 96
  %v2608 = vpop.permute.xlu0 %2607
  %2609 = vrot.lane.b32.xlu0 %v2596, 96
  %v2610 = vpop.permute.xlu0 %2609
  %2611 = vrot.lane.b32.xlu0 %v2597, 96
  %v2612 = vpop.permute.xlu0 %2611
  %2613 = vrot.lane.b32.xlu0 %v2598, 96
  %v2614 = vpop.permute.xlu0 %2613
  %2623 = vst.msk [vmem:[#allocation3 + $0x20] sm:$0xf] %vm860, %v2600
  %2624 = vst.msk [vmem:[#allocation3 + $0x24] sm:$0xf] %vm860, %v2602
  %2625 = vst.msk [vmem:[#allocation3 + $0x28] sm:$0xf] %vm860, %v2604
  %2626 = vst.msk [vmem:[#allocation3 + $0x2c] sm:$0xf] %vm860, %v2606
  %2627 = vst.msk [vmem:[#allocation3 + $0x30] sm:$0xf] %vm860, %v2608
  %2628 = vst.msk [vmem:[#allocation3 + $0x34] sm:$0xf] %vm860, %v2610
  %2629 = vst.msk [vmem:[#allocation3 + $0x38] sm:$0xf] %vm860, %v2612
  %2630 = vst.msk [vmem:[#allocation3 + $0x3c] sm:$0xf] %vm860, %v2614
  %v2631 = vld [vmem:[#allocation2] sm:$0xff]
  %v2632 = vld [vmem:[#allocation2 + $0x10] sm:$0xff]
  %v2633 = vld [vmem:[#allocation2 + $0x20] sm:$0xff]
  %v2634 = vld [vmem:[#allocation2 + $0x30] sm:$0xff]
  %v2635 = vld [vmem:[#allocation2 + $0x40] sm:$0xff]
  %v2636 = vld [vmem:[#allocation2 + $0x50] sm:$0xff]
  %v2637 = vld [vmem:[#allocation2 + $0x60] sm:$0xff]
  %v2638 = vld [vmem:[#allocation2 + $0x70] sm:$0xff]
  %v2639 = vpack.c.bf16 %v2632, %v2631
  %v2640 = vpack.c.bf16 %v2634, %v2633
  %v2641 = vpack.c.bf16 %v2636, %v2635
  %v2642 = vpack.c.bf16 %v2638, %v2637
  %v2647 = vunpack.c.l.b16 %v2639
  %v2648 = vunpack.c.h.b16 %v2639
  %v2649 = vunpack.c.l.b16 %v2640
  %v2650 = vunpack.c.h.b16 %v2640
  %v2651 = vunpack.c.l.b16 %v2641
  %v2652 = vunpack.c.h.b16 %v2641
  %v2653 = vunpack.c.l.b16 %v2642
  %v2654 = vunpack.c.h.b16 %v2642
  %v2655 = vpack.c.b16 %v2647, %v2647
  %v2656 = vpack.c.b16 %v2648, %v2648
  %v2657 = vpack.c.b16 %v2649, %v2649
  %v2658 = vpack.c.b16 %v2650, %v2650
  %v2659 = vpack.c.b16 %v2651, %v2651
  %v2660 = vpack.c.b16 %v2652, %v2652
  %v2661 = vpack.c.b16 %v2653, %v2653
  %v2662 = vpack.c.b16 %v2654, %v2654
  %2663 = vrot.lane.b32.xlu0 %v2655, 64
  %v2664 = vpop.permute.xlu0 %2663
  %2665 = vrot.lane.b32.xlu0 %v2656, 64
  %v2666 = vpop.permute.xlu0 %2665
  %2667 = vrot.lane.b32.xlu0 %v2657, 64
  %v2668 = vpop.permute.xlu0 %2667
  %2669 = vrot.lane.b32.xlu0 %v2658, 64
  %v2670 = vpop.permute.xlu0 %2669
  %2671 = vrot.lane.b32.xlu0 %v2659, 64
  %v2672 = vpop.permute.xlu0 %2671
  %2673 = vrot.lane.b32.xlu0 %v2660, 64
  %v2674 = vpop.permute.xlu0 %2673
  %2675 = vrot.lane.b32.xlu0 %v2661, 64
  %v2676 = vpop.permute.xlu0 %2675
  %2677 = vrot.lane.b32.xlu0 %v2662, 64
  %v2678 = vpop.permute.xlu0 %2677
  %2687 = vst.msk [vmem:[#allocation3 + $0x40] sm:$0xf] %vm860, %v2664
  %2688 = vst.msk [vmem:[#allocation3 + $0x44] sm:$0xf] %vm860, %v2666
  %2689 = vst.msk [vmem:[#allocation3 + $0x48] sm:$0xf] %vm860, %v2668
  %2690 = vst.msk [vmem:[#allocation3 + $0x4c] sm:$0xf] %vm860, %v2670
  %2691 = vst.msk [vmem:[#allocation3 + $0x50] sm:$0xf] %vm860, %v2672
  %2692 = vst.msk [vmem:[#allocation3 + $0x54] sm:$0xf] %vm860, %v2674
  %2693 = vst.msk [vmem:[#allocation3 + $0x58] sm:$0xf] %vm860, %v2676
  %2694 = vst.msk [vmem:[#allocation3 + $0x5c] sm:$0xf] %vm860, %v2678
  %v2695 = vld [vmem:[#allocation2] sm:$0xff]
  %v2696 = vld [vmem:[#allocation2 + $0x10] sm:$0xff]
  %v2697 = vld [vmem:[#allocation2 + $0x20] sm:$0xff]
  %v2698 = vld [vmem:[#allocation2 + $0x30] sm:$0xff]
  %v2699 = vld [vmem:[#allocation2 + $0x40] sm:$0xff]
  %v2700 = vld [vmem:[#allocation2 + $0x50] sm:$0xff]
  %v2701 = vld [vmem:[#allocation2 + $0x60] sm:$0xff]
  %v2702 = vld [vmem:[#allocation2 + $0x70] sm:$0xff]
  %v2703 = vpack.c.bf16 %v2696, %v2695
  %v2704 = vpack.c.bf16 %v2698, %v2697
  %v2705 = vpack.c.bf16 %v2700, %v2699
  %v2706 = vpack.c.bf16 %v2702, %v2701
  %v2711 = vunpack.c.l.b16 %v2703
  %v2712 = vunpack.c.h.b16 %v2703
  %v2713 = vunpack.c.l.b16 %v2704
  %v2714 = vunpack.c.h.b16 %v2704
  %v2715 = vunpack.c.l.b16 %v2705
  %v2716 = vunpack.c.h.b16 %v2705
  %v2717 = vunpack.c.l.b16 %v2706
  %v2718 = vunpack.c.h.b16 %v2706
  %v2719 = vpack.c.b16 %v2711, %v2711
  %v2720 = vpack.c.b16 %v2712, %v2712
  %v2721 = vpack.c.b16 %v2713, %v2713
  %v2722 = vpack.c.b16 %v2714, %v2714
  %v2723 = vpack.c.b16 %v2715, %v2715
  %v2724 = vpack.c.b16 %v2716, %v2716
  %v2725 = vpack.c.b16 %v2717, %v2717
  %v2726 = vpack.c.b16 %v2718, %v2718
  %2727 = vrot.lane.b32.xlu0 %v2719, 32
  %v2728 = vpop.permute.xlu0 %2727
  %2729 = vrot.lane.b32.xlu0 %v2720, 32
  %v2730 = vpop.permute.xlu0 %2729
  %2731 = vrot.lane.b32.xlu0 %v2721, 32
  %v2732 = vpop.permute.xlu0 %2731
  %2733 = vrot.lane.b32.xlu0 %v2722, 32
  %v2734 = vpop.permute.xlu0 %2733
  %2735 = vrot.lane.b32.xlu0 %v2723, 32
  %v2736 = vpop.permute.xlu0 %2735
  %2737 = vrot.lane.b32.xlu0 %v2724, 32
  %v2738 = vpop.permute.xlu0 %2737
  %2739 = vrot.lane.b32.xlu0 %v2725, 32
  %v2740 = vpop.permute.xlu0 %2739
  %2741 = vrot.lane.b32.xlu0 %v2726, 32
  %v2742 = vpop.permute.xlu0 %2741
  %2751 = vst.msk [vmem:[#allocation3 + $0x60] sm:$0xf] %vm860, %v2728
  %2752 = vst.msk [vmem:[#allocation3 + $0x64] sm:$0xf] %vm860, %v2730
  %2753 = vst.msk [vmem:[#allocation3 + $0x68] sm:$0xf] %vm860, %v2732
  %2754 = vst.msk [vmem:[#allocation3 + $0x6c] sm:$0xf] %vm860, %v2734
  %2755 = vst.msk [vmem:[#allocation3 + $0x70] sm:$0xf] %vm860, %v2736
  %2756 = vst.msk [vmem:[#allocation3 + $0x74] sm:$0xf] %vm860, %v2738
  %2757 = vst.msk [vmem:[#allocation3 + $0x78] sm:$0xf] %vm860, %v2740
  %2758 = vst.msk [vmem:[#allocation3 + $0x7c] sm:$0xf] %vm860, %v2742
  %v2759 = vld [vmem:[#allocation2 + $0x8] sm:$0xff]
  %v2760 = vld [vmem:[#allocation2 + $0x18] sm:$0xff]
  %v2761 = vld [vmem:[#allocation2 + $0x28] sm:$0xff]
  %v2762 = vld [vmem:[#allocation2 + $0x38] sm:$0xff]
  %v2763 = vld [vmem:[#allocation2 + $0x48] sm:$0xff]
  %v2764 = vld [vmem:[#allocation2 + $0x58] sm:$0xff]
  %v2765 = vld [vmem:[#allocation2 + $0x68] sm:$0xff]
  %v2766 = vld [vmem:[#allocation2 + $0x78] sm:$0xff]
  %v2767 = vpack.c.bf16 %v2760, %v2759
  %v2768 = vpack.c.bf16 %v2762, %v2761
  %v2769 = vpack.c.bf16 %v2764, %v2763
  %v2770 = vpack.c.bf16 %v2766, %v2765
  %v2775 = vunpack.c.l.b16 %v2767
  %v2776 = vunpack.c.h.b16 %v2767
  %v2777 = vunpack.c.l.b16 %v2768
  %v2778 = vunpack.c.h.b16 %v2768
  %v2779 = vunpack.c.l.b16 %v2769
  %v2780 = vunpack.c.h.b16 %v2769
  %v2781 = vunpack.c.l.b16 %v2770
  %v2782 = vunpack.c.h.b16 %v2770
  %v2783 = vpack.c.b16 %v2775, %v2775
  %v2784 = vpack.c.b16 %v2776, %v2776
  %v2785 = vpack.c.b16 %v2777, %v2777
  %v2786 = vpack.c.b16 %v2778, %v2778
  %v2787 = vpack.c.b16 %v2779, %v2779
  %v2788 = vpack.c.b16 %v2780, %v2780
  %v2789 = vpack.c.b16 %v2781, %v2781
  %v2790 = vpack.c.b16 %v2782, %v2782
  %2799 = vst.msk [vmem:[#allocation3 + $0x80] sm:$0xf] %vm860, %v2783
  %2800 = vst.msk [vmem:[#allocation3 + $0x84] sm:$0xf] %vm860, %v2784
  %2801 = vst.msk [vmem:[#allocation3 + $0x88] sm:$0xf] %vm860, %v2785
  %2802 = vst.msk [vmem:[#allocation3 + $0x8c] sm:$0xf] %vm860, %v2786
  %2803 = vst.msk [vmem:[#allocation3 + $0x90] sm:$0xf] %vm860, %v2787
  %2804 = vst.msk [vmem:[#allocation3 + $0x94] sm:$0xf] %vm860, %v2788
  %2805 = vst.msk [vmem:[#allocation3 + $0x98] sm:$0xf] %vm860, %v2789
  %2806 = vst.msk [vmem:[#allocation3 + $0x9c] sm:$0xf] %vm860, %v2790
  %v2807 = vld [vmem:[#allocation2 + $0x8] sm:$0xff]
  %v2808 = vld [vmem:[#allocation2 + $0x18] sm:$0xff]
  %v2809 = vld [vmem:[#allocation2 + $0x28] sm:$0xff]
  %v2810 = vld [vmem:[#allocation2 + $0x38] sm:$0xff]
  %v2811 = vld [vmem:[#allocation2 + $0x48] sm:$0xff]
  %v2812 = vld [vmem:[#allocation2 + $0x58] sm:$0xff]
  %v2813 = vld [vmem:[#allocation2 + $0x68] sm:$0xff]
  %v2814 = vld [vmem:[#allocation2 + $0x78] sm:$0xff]
  %v2815 = vpack.c.bf16 %v2808, %v2807
  %v2816 = vpack.c.bf16 %v2810, %v2809
  %v2817 = vpack.c.bf16 %v2812, %v2811
  %v2818 = vpack.c.bf16 %v2814, %v2813
  %v2823 = vunpack.c.l.b16 %v2815
  %v2824 = vunpack.c.h.b16 %v2815
  %v2825 = vunpack.c.l.b16 %v2816
  %v2826 = vunpack.c.h.b16 %v2816
  %v2827 = vunpack.c.l.b16 %v2817
  %v2828 = vunpack.c.h.b16 %v2817
  %v2829 = vunpack.c.l.b16 %v2818
  %v2830 = vunpack.c.h.b16 %v2818
  %v2831 = vpack.c.b16 %v2823, %v2823
  %v2832 = vpack.c.b16 %v2824, %v2824
  %v2833 = vpack.c.b16 %v2825, %v2825
  %v2834 = vpack.c.b16 %v2826, %v2826
  %v2835 = vpack.c.b16 %v2827, %v2827
  %v2836 = vpack.c.b16 %v2828, %v2828
  %v2837 = vpack.c.b16 %v2829, %v2829
  %v2838 = vpack.c.b16 %v2830, %v2830
  %2839 = vrot.lane.b32.xlu0 %v2831, 96
  %v2840 = vpop.permute.xlu0 %2839
  %2841 = vrot.lane.b32.xlu0 %v2832, 96
  %v2842 = vpop.permute.xlu0 %2841
  %2843 = vrot.lane.b32.xlu0 %v2833, 96
  %v2844 = vpop.permute.xlu0 %2843
  %2845 = vrot.lane.b32.xlu0 %v2834, 96
  %v2846 = vpop.permute.xlu0 %2845
  %2847 = vrot.lane.b32.xlu0 %v2835, 96
  %v2848 = vpop.permute.xlu0 %2847
  %2849 = vrot.lane.b32.xlu0 %v2836, 96
  %v2850 = vpop.permute.xlu0 %2849
  %2851 = vrot.lane.b32.xlu0 %v2837, 96
  %v2852 = vpop.permute.xlu0 %2851
  %2853 = vrot.lane.b32.xlu0 %v2838, 96
  %v2854 = vpop.permute.xlu0 %2853
  %2863 = vst.msk [vmem:[#allocation3 + $0xa0] sm:$0xf] %vm860, %v2840
  %2864 = vst.msk [vmem:[#allocation3 + $0xa4] sm:$0xf] %vm860, %v2842
  %2865 = vst.msk [vmem:[#allocation3 + $0xa8] sm:$0xf] %vm860, %v2844
  %2866 = vst.msk [vmem:[#allocation3 + $0xac] sm:$0xf] %vm860, %v2846
  %2867 = vst.msk [vmem:[#allocation3 + $0xb0] sm:$0xf] %vm860, %v2848
  %2868 = vst.msk [vmem:[#allocation3 + $0xb4] sm:$0xf] %vm860, %v2850
  %2869 = vst.msk [vmem:[#allocation3 + $0xb8] sm:$0xf] %vm860, %v2852
  %2870 = vst.msk [vmem:[#allocation3 + $0xbc] sm:$0xf] %vm860, %v2854
  %v2871 = vld [vmem:[#allocation3] sm:$0xf]
  %v2872 = vld [vmem:[#allocation3 + $0x4] sm:$0xf]
  %v2873 = vld [vmem:[#allocation3 + $0x8] sm:$0xf]
  %v2874 = vld [vmem:[#allocation3 + $0xc] sm:$0xf]
  %v2875 = vld [vmem:[#allocation3 + $0x10] sm:$0xf]
  %v2876 = vld [vmem:[#allocation3 + $0x14] sm:$0xf]
  %v2877 = vld [vmem:[#allocation3 + $0x18] sm:$0xf]
  %v2878 = vld [vmem:[#allocation3 + $0x1c] sm:$0xf]
  %v2879 = vld [vmem:[#allocation3 + $0x20] sm:$0xf]
  %v2880 = vld [vmem:[#allocation3 + $0x24] sm:$0xf]
  %v2881 = vld [vmem:[#allocation3 + $0x28] sm:$0xf]
  %v2882 = vld [vmem:[#allocation3 + $0x2c] sm:$0xf]
  %v2883 = vld [vmem:[#allocation3 + $0x30] sm:$0xf]
  %v2884 = vld [vmem:[#allocation3 + $0x34] sm:$0xf]
  %v2885 = vld [vmem:[#allocation3 + $0x38] sm:$0xf]
  %v2886 = vld [vmem:[#allocation3 + $0x3c] sm:$0xf]
  %v2887 = vld [vmem:[#allocation3 + $0x40] sm:$0xf]
  %v2888 = vld [vmem:[#allocation3 + $0x44] sm:$0xf]
  %v2889 = vld [vmem:[#allocation3 + $0x48] sm:$0xf]
  %v2890 = vld [vmem:[#allocation3 + $0x4c] sm:$0xf]
  %v2891 = vld [vmem:[#allocation3 + $0x50] sm:$0xf]
  %v2892 = vld [vmem:[#allocation3 + $0x54] sm:$0xf]
  %v2893 = vld [vmem:[#allocation3 + $0x58] sm:$0xf]
  %v2894 = vld [vmem:[#allocation3 + $0x5c] sm:$0xf]
  %v2895 = vld [vmem:[#allocation3 + $0x60] sm:$0xf]
  %v2896 = vld [vmem:[#allocation3 + $0x64] sm:$0xf]
  %v2897 = vld [vmem:[#allocation3 + $0x68] sm:$0xf]
  %v2898 = vld [vmem:[#allocation3 + $0x6c] sm:$0xf]
  %v2899 = vld [vmem:[#allocation3 + $0x70] sm:$0xf]
  %v2900 = vld [vmem:[#allocation3 + $0x74] sm:$0xf]
  %v2901 = vld [vmem:[#allocation3 + $0x78] sm:$0xf]
  %v2902 = vld [vmem:[#allocation3 + $0x7c] sm:$0xf]
  %v2903 = vld [vmem:[#allocation3 + $0x80] sm:$0xf]
  %v2904 = vld [vmem:[#allocation3 + $0x84] sm:$0xf]
  %v2905 = vld [vmem:[#allocation3 + $0x88] sm:$0xf]
  %v2906 = vld [vmem:[#allocation3 + $0x8c] sm:$0xf]
  %v2907 = vld [vmem:[#allocation3 + $0x90] sm:$0xf]
  %v2908 = vld [vmem:[#allocation3 + $0x94] sm:$0xf]
  %v2909 = vld [vmem:[#allocation3 + $0x98] sm:$0xf]
  %v2910 = vld [vmem:[#allocation3 + $0x9c] sm:$0xf]
  %v2911 = vld [vmem:[#allocation3 + $0xa0] sm:$0xf]
  %v2912 = vld [vmem:[#allocation3 + $0xa4] sm:$0xf]
  %v2913 = vld [vmem:[#allocation3 + $0xa8] sm:$0xf]
  %v2914 = vld [vmem:[#allocation3 + $0xac] sm:$0xf]
  %v2915 = vld [vmem:[#allocation3 + $0xb0] sm:$0xf]
  %v2916 = vld [vmem:[#allocation3 + $0xb4] sm:$0xf]
  %v2917 = vld [vmem:[#allocation3 + $0xb8] sm:$0xf]
  %v2918 = vld [vmem:[#allocation3 + $0xbc] sm:$0xf]
  %v2919 = vld [vmem:[%s3 + $0xa] sm:$0x1]
  %v2920 = vlaneseq
  %v2921 = vshrl.u32 %v2920, 7
  %v2922 = vsub.s32 0, %v2921
  %v2923 = vrot.slane %v2919, %v2922
  %v2972 = vunpack.c.l.b16 %v2871
  %v2973 = vunpack.c.l.b16 %v2872
  %v2974 = vunpack.c.l.b16 %v2873
  %v2975 = vunpack.c.l.b16 %v2874
  %v2976 = vunpack.c.l.b16 %v2875
  %v2977 = vunpack.c.l.b16 %v2876
  %v2978 = vunpack.c.l.b16 %v2877
  %v2979 = vunpack.c.l.b16 %v2878
  %v2980 = vunpack.c.l.b16 %v2879
  %v2981 = vunpack.c.l.b16 %v2880
  %v2982 = vunpack.c.l.b16 %v2881
  %v2983 = vunpack.c.l.b16 %v2882
  %v2984 = vunpack.c.l.b16 %v2883
  %v2985 = vunpack.c.l.b16 %v2884
  %v2986 = vunpack.c.l.b16 %v2885
  %v2987 = vunpack.c.l.b16 %v2886
  %v2988 = vunpack.c.l.b16 %v2887
  %v2989 = vunpack.c.l.b16 %v2888
  %v2990 = vunpack.c.l.b16 %v2889
  %v2991 = vunpack.c.l.b16 %v2890
  %v2992 = vunpack.c.l.b16 %v2891
  %v2993 = vunpack.c.l.b16 %v2892
  %v2994 = vunpack.c.l.b16 %v2893
  %v2995 = vunpack.c.l.b16 %v2894
  %v2996 = vunpack.c.l.b16 %v2895
  %v2997 = vunpack.c.l.b16 %v2896
  %v2998 = vunpack.c.l.b16 %v2897
  %v2999 = vunpack.c.l.b16 %v2898
  %v3000 = vunpack.c.l.b16 %v2899
  %v3001 = vunpack.c.l.b16 %v2900
  %v3002 = vunpack.c.l.b16 %v2901
  %v3003 = vunpack.c.l.b16 %v2902
  %v3004 = vunpack.c.l.b16 %v2903
  %v3005 = vunpack.c.l.b16 %v2904
  %v3006 = vunpack.c.l.b16 %v2905
  %v3007 = vunpack.c.l.b16 %v2906
  %v3008 = vunpack.c.l.b16 %v2907
  %v3009 = vunpack.c.l.b16 %v2908
  %v3010 = vunpack.c.l.b16 %v2909
  %v3011 = vunpack.c.l.b16 %v2910
  %v3012 = vunpack.c.l.b16 %v2911
  %v3013 = vunpack.c.l.b16 %v2912
  %v3014 = vunpack.c.l.b16 %v2913
  %v3015 = vunpack.c.l.b16 %v2914
  %v3016 = vunpack.c.l.b16 %v2915
  %v3017 = vunpack.c.l.b16 %v2916
  %v3018 = vunpack.c.l.b16 %v2917
  %v3019 = vunpack.c.l.b16 %v2918
  %v3020 = vpack.c.b16 %v2973, %v2972
  %v3021 = vpack.c.b16 %v2975, %v2974
  %v3022 = vpack.c.b16 %v2977, %v2976
  %v3023 = vpack.c.b16 %v2979, %v2978
  %v3024 = vpack.c.b16 %v2981, %v2980
  %v3025 = vpack.c.b16 %v2983, %v2982
  %v3026 = vpack.c.b16 %v2985, %v2984
  %v3027 = vpack.c.b16 %v2987, %v2986
  %v3028 = vpack.c.b16 %v2989, %v2988
  %v3029 = vpack.c.b16 %v2991, %v2990
  %v3030 = vpack.c.b16 %v2993, %v2992
  %v3031 = vpack.c.b16 %v2995, %v2994
  %v3032 = vpack.c.b16 %v2997, %v2996
  %v3033 = vpack.c.b16 %v2999, %v2998
  %v3034 = vpack.c.b16 %v3001, %v3000
  %v3035 = vpack.c.b16 %v3003, %v3002
  %v3036 = vpack.c.b16 %v3005, %v3004
  %v3037 = vpack.c.b16 %v3007, %v3006
  %v3038 = vpack.c.b16 %v3009, %v3008
  %v3039 = vpack.c.b16 %v3011, %v3010
  %v3040 = vpack.c.b16 %v3013, %v3012
  %v3041 = vpack.c.b16 %v3015, %v3014
  %v3042 = vpack.c.b16 %v3017, %v3016
  %v3043 = vpack.c.b16 %v3019, %v3018
  %3068 = vmatprep.subr.bf16.mxu0 0
  %3069 = vmatpush1.bf16.msra.mxu0 %v3027
  %3070 = vmatprep.subr.bf16.mxu0 0
  %3071 = vmatpush1.bf16.msra.mxu0 %v3026
  %3072 = vmatprep.subr.bf16.mxu0 0
  %3073 = vmatpush1.bf16.msra.mxu0 %v3025
  %3074 = vmatprep.subr.bf16.mxu0 0
  %3075 = vmatpush1.bf16.msra.mxu0 %v3024
  %3076 = vmatprep.subr.bf16.mxu0 0
  %3077 = vmatpush1.bf16.msra.mxu0 %v3023
  %3078 = vmatprep.subr.bf16.mxu0 0
  %3079 = vmatpush1.bf16.msra.mxu0 %v3022
  %3080 = vmatprep.subr.bf16.mxu0 0
  %3081 = vmatpush1.bf16.msra.mxu0 %v3021
  %3082 = vmatprep.subr.bf16.mxu0 0
  %3083 = vmatpush1.bf16.msra.mxu0 %v3020
  %3084 = vmatprep.subr.bf16.mxu0 0
  %3085 = vmatpush2.bf16.msra.mxu0 %v3035
  %3086 = vmatprep.subr.bf16.mxu0 0
  %3087 = vmatpush2.bf16.msra.mxu0 %v3034
  %3088 = vmatprep.subr.bf16.mxu0 0
  %3089 = vmatpush2.bf16.msra.mxu0 %v3033
  %3090 = vmatprep.subr.bf16.mxu0 0
  %3091 = vmatpush2.bf16.msra.mxu0 %v3032
  %3092 = vmatprep.subr.bf16.mxu0 0
  %3093 = vmatpush2.bf16.msra.mxu0 %v3031
  %3094 = vmatprep.subr.bf16.mxu0 0
  %3095 = vmatpush2.bf16.msra.mxu0 %v3030
  %3096 = vmatprep.subr.bf16.mxu0 0
  %3097 = vmatpush2.bf16.msra.mxu0 %v3029
  %3098 = vmatprep.subr.bf16.mxu0 0
  %3099 = vmatpush2.bf16.msra.mxu0 %v3028
  %3100 = vmatprep.mubr.bf16.mxu0 %v1267
  %3101 = vmatmul.mubr.bf16.gmra.mxu0 %v1266
  %v3102 = vpop.f32.mrf.mxu0
  %v3103 = vadd.f32 %v2923, %v3102
  %v3104 = vpop.f32.mrf.mxu0
  %v3105 = vpop.f32.mrf.mxu0
  %v3106 = vadd.f32 %v2923, %v3105
  %v3107 = vpop.f32.mrf.mxu0
  %3108 = vmatprep.mubr.bf16.mxu0 %v1270
  %3109 = vmatmul.mubr.bf16.gmra.mxu0 %v1269
  %v3110 = vpop.f32.mrf.mxu0
  %v3111 = vadd.f32 %v2923, %v3110
  %v3112 = vpop.f32.mrf.mxu0
  %v3113 = vpop.f32.mrf.mxu0
  %v3114 = vadd.f32 %v2923, %v3113
  %v3115 = vpop.f32.mrf.mxu0
  %3116 = vmatprep.mubr.bf16.mxu0 %v1273
  %3117 = vmatmul.mubr.bf16.gmra.mxu0 %v1272
  %v3118 = vpop.f32.mrf.mxu0
  %v3119 = vadd.f32 %v2923, %v3118
  %v3120 = vpop.f32.mrf.mxu0
  %v3121 = vpop.f32.mrf.mxu0
  %v3122 = vadd.f32 %v2923, %v3121
  %v3123 = vpop.f32.mrf.mxu0
  %3124 = vmatprep.mubr.bf16.mxu0 %v1276
  %3125 = vmatmul.mubr.bf16.gmra.mxu0 %v1275
  %v3126 = vpop.f32.mrf.mxu0
  %v3127 = vadd.f32 %v2923, %v3126
  %v3128 = vpop.f32.mrf.mxu0
  %v3129 = vpop.f32.mrf.mxu0
  %v3130 = vadd.f32 %v2923, %v3129
  %v3131 = vpop.f32.mrf.mxu0
  %3132 = vdwg.mxu0
  %3133 = vmatprep.subr.bf16.mxu0 0
  %3134 = vmatpush1.bf16.msra.mxu0 %v3043
  %3135 = vmatprep.subr.bf16.mxu0 0
  %3136 = vmatpush1.bf16.msra.mxu0 %v3042
  %3137 = vmatprep.subr.bf16.mxu0 0
  %3138 = vmatpush1.bf16.msra.mxu0 %v3041
  %3139 = vmatprep.subr.bf16.mxu0 0
  %3140 = vmatpush1.bf16.msra.mxu0 %v3040
  %3141 = vmatprep.subr.bf16.mxu0 0
  %3142 = vmatpush1.bf16.msra.mxu0 %v3039
  %3143 = vmatprep.subr.bf16.mxu0 0
  %3144 = vmatpush1.bf16.msra.mxu0 %v3038
  %3145 = vmatprep.subr.bf16.mxu0 0
  %3146 = vmatpush1.bf16.msra.mxu0 %v3037
  %3147 = vmatprep.subr.bf16.mxu0 0
  %3148 = vmatpush1.bf16.msra.mxu0 %v3036
  %3149 = vmatprep.subr.bf16.mxu0 0
  %3150 = vmatpush2.bf16.msra.mxu0 0
  %3151 = vmatprep.subr.bf16.mxu0 0
  %3152 = vmatpush2.bf16.msra.mxu0 0
  %3153 = vmatprep.subr.bf16.mxu0 0
  %3154 = vmatpush2.bf16.msra.mxu0 0
  %3155 = vmatprep.subr.bf16.mxu0 0
  %3156 = vmatpush2.bf16.msra.mxu0 0
  %3157 = vmatprep.subr.bf16.mxu0 0
  %3158 = vmatpush2.bf16.msra.mxu0 0
  %3159 = vmatprep.subr.bf16.mxu0 0
  %3160 = vmatpush2.bf16.msra.mxu0 0
  %3161 = vmatprep.subr.bf16.mxu0 0
  %3162 = vmatpush2.bf16.msra.mxu0 0
  %3163 = vmatprep.subr.bf16.mxu0 0
  %3164 = vmatpush2.bf16.msra.mxu0 0
  %3165 = vmatprep.mubr.bf16.mxu0 0
  %3166 = vmatmul.mubr.bf16.gmra.mxu0 %v1268
  %v3167 = vpop.f32.mrf.mxu0
  %v3168 = vadd.f32 %v3103, %v3167
  %v3169 = vpop.f32.mrf.mxu0
  %v3170 = vpop.f32.mrf.mxu0
  %v3171 = vadd.f32 %v3106, %v3170
  %v3172 = vpop.f32.mrf.mxu0
  %3173 = vmatprep.mubr.bf16.mxu0 0
  %3174 = vmatmul.mubr.bf16.gmra.mxu0 %v1271
  %v3175 = vpop.f32.mrf.mxu0
  %v3176 = vadd.f32 %v3111, %v3175
  %v3177 = vpop.f32.mrf.mxu0
  %v3178 = vpop.f32.mrf.mxu0
  %v3179 = vadd.f32 %v3114, %v3178
  %v3180 = vpop.f32.mrf.mxu0
  %3181 = vmatprep.mubr.bf16.mxu0 0
  %3182 = vmatmul.mubr.bf16.gmra.mxu0 %v1274
  %v3183 = vpop.f32.mrf.mxu0
  %v3184 = vadd.f32 %v3119, %v3183
  %v3185 = vpop.f32.mrf.mxu0
  %v3186 = vpop.f32.mrf.mxu0
  %v3187 = vadd.f32 %v3122, %v3186
  %v3188 = vpop.f32.mrf.mxu0
  %3189 = vmatprep.mubr.bf16.mxu0 0
  %3190 = vmatmul.mubr.bf16.gmra.mxu0 %v1277
  %v3191 = vpop.f32.mrf.mxu0
  %v3192 = vadd.f32 %v3127, %v3191
  %v3193 = vpop.f32.mrf.mxu0
  %v3194 = vpop.f32.mrf.mxu0
  %v3195 = vadd.f32 %v3130, %v3194
  %v3196 = vpop.f32.mrf.mxu0
  %3197 = vdwg.mxu0
  %v3198 = vsel %vm55, %v3168, 0.0
  %v3199 = vrot.slane %v3198, 4
  %v3200 = vadd.f32 %v3198, %v3199
  %v3201 = vrot.slane %v3200, 2
  %v3202 = vadd.f32 %v3200, %v3201
  %v3203 = vrot.slane %v3202, 1
  %v3204 = vadd.f32 %v3202, %v3203
  %v3205 = vsel %vm55, %v3171, 0.0
  %v3206 = vrot.slane %v3205, 4
  %v3207 = vadd.f32 %v3205, %v3206
  %v3208 = vrot.slane %v3207, 2
  %v3209 = vadd.f32 %v3207, %v3208
  %v3210 = vrot.slane %v3209, 1
  %v3211 = vadd.f32 %v3209, %v3210
  %v3212 = vsel %vm55, %v3176, 0.0
  %v3213 = vrot.slane %v3212, 4
  %v3214 = vadd.f32 %v3212, %v3213
  %v3215 = vrot.slane %v3214, 2
  %v3216 = vadd.f32 %v3214, %v3215
  %v3217 = vrot.slane %v3216, 1
  %v3218 = vadd.f32 %v3216, %v3217
  %v3219 = vsel %vm55, %v3179, 0.0
  %v3220 = vrot.slane %v3219, 4
  %v3221 = vadd.f32 %v3219, %v3220
  %v3222 = vrot.slane %v3221, 2
  %v3223 = vadd.f32 %v3221, %v3222
  %v3224 = vrot.slane %v3223, 1
  %v3225 = vadd.f32 %v3223, %v3224
  %v3226 = vsel %vm55, %v3184, 0.0
  %v3227 = vrot.slane %v3226, 4
  %v3228 = vadd.f32 %v3226, %v3227
  %v3229 = vrot.slane %v3228, 2
  %v3230 = vadd.f32 %v3228, %v3229
  %v3231 = vrot.slane %v3230, 1
  %v3232 = vadd.f32 %v3230, %v3231
  %v3233 = vsel %vm55, %v3187, 0.0
  %v3234 = vrot.slane %v3233, 4
  %v3235 = vadd.f32 %v3233, %v3234
  %v3236 = vrot.slane %v3235, 2
  %v3237 = vadd.f32 %v3235, %v3236
  %v3238 = vrot.slane %v3237, 1
  %v3239 = vadd.f32 %v3237, %v3238
  %v3240 = vsel %vm55, %v3192, 0.0
  %v3241 = vrot.slane %v3240, 4
  %v3242 = vadd.f32 %v3240, %v3241
  %v3243 = vrot.slane %v3242, 2
  %v3244 = vadd.f32 %v3242, %v3243
  %v3245 = vrot.slane %v3244, 1
  %v3246 = vadd.f32 %v3244, %v3245
  %v3247 = vsel %vm55, %v3195, 0.0
  %v3248 = vrot.slane %v3247, 4
  %v3249 = vadd.f32 %v3247, %v3248
  %v3250 = vrot.slane %v3249, 2
  %v3251 = vadd.f32 %v3249, %v3250
  %v3252 = vrot.slane %v3251, 1
  %v3253 = vadd.f32 %v3251, %v3252
  %v3254 = vpack.c.bf16 %v3204, %v3204
  %v3255 = vpack.c.bf16 %v3211, %v3211
  %v3256 = vpack.c.bf16 %v3218, %v3218
  %v3257 = vpack.c.bf16 %v3225, %v3225
  %v3258 = vpack.c.bf16 %v3232, %v3232
  %v3259 = vpack.c.bf16 %v3239, %v3239
  %v3260 = vpack.c.bf16 %v3246, %v3246
  %v3261 = vpack.c.bf16 %v3253, %v3253
  %v3262 = vld [vmem:[%s8] sm:$0xf]
  %v3263 = vld [vmem:[%s8 + $0x4] sm:$0xf]
  %v3264 = vld [vmem:[%s8 + $0x8] sm:$0xf]
  %v3265 = vld [vmem:[%s8 + $0xc] sm:$0xf]
  %v3266 = vld [vmem:[%s3 + $0x7] sm:$0x1]
  %v3267 = vlaneseq
  %v3268 = vshrl.u32 %v3267, 7
  %v3269 = vsub.s32 0, %v3268
  %v3270 = vrot.slane %v3266, %v3269
  %v3279 = vunpack.c.l.b16 %v3254
  %v3280 = vunpack.c.l.b16 %v3255
  %v3281 = vunpack.c.l.b16 %v3256
  %v3282 = vunpack.c.l.b16 %v3257
  %v3283 = vunpack.c.l.b16 %v3258
  %v3284 = vunpack.c.l.b16 %v3259
  %v3285 = vunpack.c.l.b16 %v3260
  %v3286 = vunpack.c.l.b16 %v3261
  %v3287 = vsel %vm166, %v3280, %v3279
  %v3288 = vsel %vm167, %v3281, %v3287
  %v3289 = vsel %vm169, %v3282, %v3288
  %v3290 = vsel %vm171, %v3283, %v3289
  %v3291 = vsel %vm173, %v3284, %v3290
  %v3292 = vsel %vm175, %v3285, %v3291
  %v3293 = vsel %vm177, %v3286, %v3292
  %v3294 = vpack.c.b16 %v3293, %v3293
  %v3299 = vunpack.c.l.b16 %v3262
  %v3300 = vunpack.c.l.b16 %v3263
  %v3301 = vunpack.c.l.b16 %v3264
  %v3302 = vunpack.c.l.b16 %v3265
  %v3303 = vpack.c.b16 %v3300, %v3299
  %v3304 = vpack.c.b16 %v3302, %v3301
  %v3308 = vsel %vm55, %v3294, 0
  %3310 = vmatprep.subr.bf16.mxu0 0
  %3311 = vmatpush1.bf16.msra.mxu0 0
  %3312 = vmatprep.subr.bf16.mxu0 0
  %3313 = vmatpush1.bf16.msra.mxu0 0
  %3314 = vmatprep.subr.bf16.mxu0 0
  %3315 = vmatpush1.bf16.msra.mxu0 0
  %3316 = vmatprep.subr.bf16.mxu0 0
  %3317 = vmatpush1.bf16.msra.mxu0 0
  %3318 = vmatprep.subr.bf16.mxu0 0
  %3319 = vmatpush1.bf16.msra.mxu0 0
  %3320 = vmatprep.subr.bf16.mxu0 0
  %3321 = vmatpush1.bf16.msra.mxu0 0
  %3322 = vmatprep.subr.bf16.mxu0 0
  %3323 = vmatpush1.bf16.msra.mxu0 %v3304
  %3324 = vmatprep.subr.bf16.mxu0 0
  %3325 = vmatpush1.bf16.msra.mxu0 %v3303
  %3326 = vmatprep.subr.bf16.mxu0 0
  %3327 = vmatpush2.bf16.msra.mxu0 0
  %3328 = vmatprep.subr.bf16.mxu0 0
  %3329 = vmatpush2.bf16.msra.mxu0 0
  %3330 = vmatprep.subr.bf16.mxu0 0
  %3331 = vmatpush2.bf16.msra.mxu0 0
  %3332 = vmatprep.subr.bf16.mxu0 0
  %3333 = vmatpush2.bf16.msra.mxu0 0
  %3334 = vmatprep.subr.bf16.mxu0 0
  %3335 = vmatpush2.bf16.msra.mxu0 0
  %3336 = vmatprep.subr.bf16.mxu0 0
  %3337 = vmatpush2.bf16.msra.mxu0 0
  %3338 = vmatprep.subr.bf16.mxu0 0
  %3339 = vmatpush2.bf16.msra.mxu0 0
  %3340 = vmatprep.subr.bf16.mxu0 0
  %3341 = vmatpush2.bf16.msra.mxu0 0
  %3342 = vmatprep.mubr.bf16.mxu0 0
  %3343 = vmatmul.mubr.bf16.gmra.mxu0 %v3308
  %v3344 = vpop.f32.mrf.mxu0
  %v3345 = vadd.f32 %v3270, %v3344
  %v3346 = vpop.f32.mrf.mxu0
  %v3347 = vpop.f32.mrf.mxu0
  %v3348 = vpop.f32.mrf.mxu0
  %3349 = vdwg.mxu0
  %v3350 = vld [vmem:[%s2] sm:$0xff]
  %v3351 = vmul.f32 %v3345, %v3350
  %v3352 = vsel %vm55, %v3351, 0.0
  %3353 = vadd.xlane.f32.xlu0 %v3352
  %v3354 = vpop.xlane.xlu0 %3353
  %vm3355 = vcmask 7168
  %3356 = vst.msk [vmem:[%s9] sm:$0xff] %vm3355, %v3354
  // Predicated region
  $region38: #{pref_rgcn_forward.1} parent=0 // pred_check
    _
  $region39: #{pref_rgcn_forward.1} parent=0 // pred_check_branch
    %3358 = sbr.rel (0) target = $region41
  $region40: #{pref_rgcn_forward.1} parent=0 // pred_region
    _
  $region41: #{pref_rgcn_forward.1} parent=0 // pred_fallthru
    _
  // Predicated region
  $region42: #{pref_rgcn_forward.1} parent=0 // pred_check
    _
  $region43: #{pref_rgcn_forward.1} parent=0 // pred_check_branch
    %3360 = sbr.rel (0) target = $region45
  $region44: #{pref_rgcn_forward.1} parent=0 // pred_region
    _
  $region45: #{pref_rgcn_forward.1} parent=0 // pred_fallthru
    _

</llo_original>
